<compile_context>
chip_gen: v5e
topology: v5e:2x2
jax: 0.10.0
libtpu: 0.0.40
codegen_flags: <defaults>
</compile_context>

<pallas_src>
import functools

import jax
import jax.numpy as jnp
from jax import lax
from jax.experimental import pallas as pl
from jax.experimental.pallas import tpu as pltpu

EPS = 1e-5                      # nn.BatchNorm2d default eps
VMEM_BUDGET = 8 * 1024 * 1024   # explicit scoped-VMEM budget (actual use < 1 MiB)


def _round_up(x, m):
    return -(-x // m) * m


def _pick_tiling(M):
    """Lane tiling for the GEMM M (= N*H*W) axis.

    Small layers: one full tile (v5e/v6e prefer the single biggest tile).
    Big layers: exactly 2 tiles so a v7x megacore can split across its 2 TCs.
    Returns (TM, Mp, num_tiles); TM is a multiple of 128.
    """
    Mp = _round_up(M, 128)
    if Mp <= 512:
        return Mp, Mp, 1
    tm = _round_up(-(-M // 2), 128)
    return tm, 2 * tm, 2


def _bspec_full(shape):
    """BlockSpec covering the whole (small, grid-resident) operand."""
    nd = len(shape)
    return pl.BlockSpec(shape, lambda i, _nd=nd: (0,) * _nd)


# ---------------------------------------------------------------------------
# Pallas kernels.  Layout: Cout on sublanes, output pixels (N*H*W) on lanes.
# ---------------------------------------------------------------------------
def _relu_bn_kernel(w_ref, p_ref, aux_ref, o_ref):
    """O = BN(ReLU(W @ P + bias));  aux = (bias, scale, shift) as (3, Cp, 1)."""
    acc = jnp.dot(w_ref[...], p_ref[...], preferred_element_type=jnp.float32)
    acc = jnp.maximum(acc + aux_ref[0], 0.0)          # conv -> bias -> ReLU
    acc = acc * aux_ref[1] + aux_ref[2]               # BatchNorm (inference form)
    o_ref[...] = acc.astype(o_ref.dtype)


def _final_kernel(w_ref, p_ref, b_ref, s_ref, c_ref, o_ref):
    """Last convT + (BN, final 1x1 conv, sigmoid) folded into (S, const):
       O = sigmoid(S @ ReLU(W @ P + bias) + const)."""
    acc = jnp.dot(w_ref[...], p_ref[...], preferred_element_type=jnp.float32)
    acc = jnp.maximum(acc + b_ref[0], 0.0)
    z = jnp.dot(s_ref[...], acc, preferred_element_type=jnp.float32) + c_ref[...]
    o_ref[...] = jax.nn.sigmoid(z).astype(o_ref.dtype)


def fused_gemm(w_b, patches, aux_ops, kernel_fn, out_rows, out_dtype):
    """One fused GEMM+epilogue layer.  w_b: (Cp, K) bf16 (pre-folded),
    patches: (K, M) bf16, aux_ops: list of small resident operands.
    Returns (out_rows, M) in out_dtype."""
    K, M = patches.shape
    Cp = w_b.shape[0]
    TM, Mp, ntiles = _pick_tiling(M)

    p_b = patches.astype(jnp.bfloat16)
    if Mp != M:
        p_b = jnp.pad(p_b, ((0, 0), (0, Mp - M)))

    in_specs = [pl.BlockSpec((Cp, K), lambda i: (0, 0)),     # weight, grid-resident
                pl.BlockSpec((K, TM), lambda i: (0, i))]     # patch lane tile
    operands = [w_b, p_b]
    for a in aux_ops:
        in_specs.append(_bspec_full(a.shape))
        operands.append(a)

    out = pl.pallas_call(
        kernel_fn,
        out_shape=jax.ShapeDtypeStruct((out_rows, Mp), out_dtype),
        grid_spec=pltpu.PrefetchScalarGridSpec(
            num_scalar_prefetch=0,
            grid=(ntiles,),
            in_specs=in_specs,
            out_specs=pl.BlockSpec((out_rows, TM), lambda i: (0, i))),
        compiler_params=pltpu.CompilerParams(
            dimension_semantics=("parallel",),
            vmem_limit_bytes=VMEM_BUDGET),
    )(*operands)
    return out[:, :M] if Mp != M else out


# ---------------------------------------------------------------------------
# Patch building (batch folded into the GEMM M axis).  Cheap XLA glue.
# TODO(synk): im2col could move inside the kernel with a pl.ANY input + static
# slices, removing the k*k HBM amplification; activations here are tiny.
# ---------------------------------------------------------------------------
def im2col_conv(x):
    """Conv2d(k=3, s=2, p=1) patches: x (N,C,H,W) -> (C*9, N*Ho*Wo), Ho, Wo."""
    N, C, H, W = x.shape
    xp = jnp.pad(x, ((0, 0), (0, 0), (1, 1), (1, 1)))
    Ho = (H + 2 - 3) // 2 + 1
    Wo = (W + 2 - 3) // 2 + 1
    cols = [xp[:, :, kh:kh + 2 * (Ho - 1) + 1:2, kw:kw + 2 * (Wo - 1) + 1:2]
            for kh in range(3) for kw in range(3)]           # each (N,C,Ho,Wo)
    p = jnp.stack(cols, axis=2)                              # (N, C, 9, Ho, Wo)
    p = p.transpose(1, 2, 0, 3, 4).reshape(C * 9, N * Ho * Wo)
    return p, Ho, Wo


def taps_convT(x):
    """ConvTranspose2d(k=3, s=2, p=1) 4-phase taps: x (N,C,H,W) -> (4*C, N*H*W)."""
    N, C, H, W = x.shape
    xp = jnp.pad(x, ((0, 0), (0, 0), (0, 1), (0, 1)))
    taps = [xp[:, :, dh:dh + H, dw:dw + W] for dh in (0, 1) for dw in (0, 1)]
    p = jnp.stack(taps, axis=0)                              # (4, N, C, H, W)
    return p.transpose(0, 2, 1, 3, 4).reshape(4 * C, N * H * W)


# ---------------------------------------------------------------------------
# SegHead: configuration, parameter init, one-time weight folding, forward
# ---------------------------------------------------------------------------
def make_cfg(C):
    return (
        ("conv",  C,       C // 2),
        ("conv",  C // 2,  C // 4),
        ("convT", C // 4,  C // 8),
        ("convT", C // 8,  C // 16),
        ("convT", C // 16, C // 32),
        ("convT", C // 32, C // 32),
        ("convT", C // 32, C // 64),
    )


def init_params(key, C):
    cfg = make_cfg(C)
    params = []
    for kind, cin, cout in cfg:
        key, k1, k2, k3, k4, k5, k6 = jax.random.split(key, 7)
        wshape = (cout, cin, 3, 3) if kind == "conv" else (cin, cout, 3, 3)
        w = 0.1 * jax.random.normal(k1, wshape, jnp.float32)
        b = 0.1 * jax.random.normal(k2, (cout,), jnp.float32)
        gamma = 1.0 + 0.1 * jax.random.normal(k3, (cout,), jnp.float32)
        beta = 0.1 * jax.random.normal(k4, (cout,), jnp.float32)
        mean = 0.1 * jax.random.normal(k5, (cout,), jnp.float32)
        var = jax.random.uniform(k6, (cout,), jnp.float32, minval=0.5, maxval=1.5)
        params.append((w, b, gamma, beta, mean, var))
    key, k1, k2 = jax.random.split(key, 3)
    wf = 0.1 * jax.random.normal(k1, (1, C // 64, 1, 1), jnp.float32)
    bf = 0.1 * jax.random.normal(k2, (1,), jnp.float32)
    return params, (wf, bf)


def prepare_params(params, final_params, C):
    """One-time (x-independent) weight folding: GEMM-shaped bf16 weights padded
    to the sublane multiple, fused bias/BN aux, ConvT 4-phase weight scatter,
    and the last layer's (S, const) fold of BN + final 1x1 conv + its bias."""
    cfg = make_cfg(C)
    wf, bf = final_params
    prepped = []
    for li, ((kind, cin, cout), (w, b, gamma, beta, mean, var)) in enumerate(
            zip(cfg, params)):
        scale = gamma * lax.rsqrt(var + EPS)
        shift = beta - mean * scale
        last = li == len(cfg) - 1

        if kind == "conv":
            wmat = w.reshape(cout, cin * 9)                  # K = (c, kh, kw)
            rows = cout
            bias, sc, sh = b, scale, shift
        else:
            # Exact 4-phase sub-pixel decomposition of ConvT(k=3, s=2, p=1).
            wfe = jnp.flip(w, axis=(2, 3)).transpose(1, 0, 2, 3)   # (cout,cin,3,3)
            Wc = jnp.zeros((4, cout, 4, cin), jnp.float32)
            Wc = Wc.at[0, :, 0, :].set(wfe[:, :, 1, 1])      # (even row, even col)
            Wc = Wc.at[1, :, 0, :].set(wfe[:, :, 1, 0])      # (even row, odd  col)
            Wc = Wc.at[1, :, 1, :].set(wfe[:, :, 1, 2])
            Wc = Wc.at[2, :, 0, :].set(wfe[:, :, 0, 1])      # (odd  row, even col)
            Wc = Wc.at[2, :, 2, :].set(wfe[:, :, 2, 1])
            Wc = Wc.at[3, :, 0, :].set(wfe[:, :, 0, 0])      # (odd  row, odd  col)
            Wc = Wc.at[3, :, 1, :].set(wfe[:, :, 0, 2])
            Wc = Wc.at[3, :, 2, :].set(wfe[:, :, 2, 0])
            Wc = Wc.at[3, :, 3, :].set(wfe[:, :, 2, 2])
            wmat = Wc.reshape(4 * cout, 4 * cin)             # K = (tap, c)
            rows = 4 * cout
            bias = jnp.tile(b, 4)
            sc, sh = jnp.tile(scale, 4), jnp.tile(shift, 4)

        if not last:
            Cp = _round_up(rows, 16)                         # bf16 out: 16 sublanes
            w_b = jnp.zeros((Cp, wmat.shape[1]), jnp.bfloat16).at[:rows].set(
                wmat.astype(jnp.bfloat16))
            aux = jnp.zeros((3, Cp, 1), jnp.float32)
            aux = aux.at[0, :rows, 0].set(bias)
            aux = aux.at[1, :rows, 0].set(sc)
            aux = aux.at[2, :rows, 0].set(sh)
            prepped.append((w_b, aux))
        else:
            Cp = _round_up(rows, 8)
            w_b = jnp.zeros((Cp, wmat.shape[1]), jnp.bfloat16).at[:rows].set(
                wmat.astype(jnp.bfloat16))
            bias_p = jnp.zeros((1, Cp, 1), jnp.float32).at[0, :rows, 0].set(bias)
            # z[p] = sigmoid(sum_c wf[c] * BN(y)[p*cout+c] + bf)
            #      = sigmoid((S*scale) @ relu_out + (S@shift + bf))
            wf_vec = wf.reshape(cout)
            S = jnp.zeros((8, Cp), jnp.float32)
            for ph in range(4):
                S = S.at[ph, ph * cout:(ph + 1) * cout].set(wf_vec)
            sc_full = jnp.zeros((Cp,), jnp.float32).at[:rows].set(sc)
            sh_full = jnp.zeros((Cp,), jnp.float32).at[:rows].set(sh)
            Sp = S * sc_full[None, :]
            const = (S * sh_full[None, :]).sum(axis=1, keepdims=True) + bf.reshape(1, 1)
            prepped.append((w_b, bias_p, Sp, const))
    return prepped


def make_seg_head(C):
    cfg = make_cfg(C)
    nl = len(cfg)

    def forward(x, prepped):
        N = x.shape[0]
        x = x.astype(jnp.bfloat16)                 # bf16 activations between layers
        result = None
        for li, (kind, cin, cout) in enumerate(cfg):
            last = li == nl - 1
            if kind == "conv":
                patches, Ho, Wo = im2col_conv(x)
            else:
                Ho, Wo = x.shape[2], x.shape[3]    # GEMM runs on input spatial grid
                patches = taps_convT(x)

            if not last:
                w_b, aux = prepped[li]
                rows = 4 * cout if kind == "convT" else cout
                out = fused_gemm(w_b, patches, [aux], _relu_bn_kernel,
                                 w_b.shape[0], jnp.bfloat16)
                out = out[:rows]
                if kind == "conv":
                    x = out.reshape(cout, N, Ho, Wo).transpose(1, 0, 2, 3)
                else:
                    # contiguous phase interleave: (p,q,c,n,i,j) -> (n,c,2i+p,2j+q)
                    o6 = out.reshape(2, 2, cout, N, Ho, Wo)
                    x = o6.transpose(3, 2, 4, 0, 5, 1).reshape(
                        N, cout, 2 * Ho, 2 * Wo)[:, :, :2 * Ho - 1, :2 * Wo - 1]
            else:
                w_b, bias_p, Sp, const = prepped[li]
                out = fused_gemm(w_b, patches, [bias_p, Sp, const],
                                 _final_kernel, 8, jnp.float32)
                z = out[:4].reshape(2, 2, N, Ho, Wo)        # (p, q, n, i, j)
                y = z.transpose(2, 3, 0, 4, 1).reshape(N, 2 * Ho, 2 * Wo)
                result = y[:, :2 * Ho - 1, :2 * Wo - 1][:, None]
        return result

    return forward


# ---------------------------------------------------------------------------
# Pure-JAX f32 reference (HIGHEST precision) for validation
# ---------------------------------------------------------------------------
def reference_forward(x, params, final_params, cfg):
    dn = ("NCHW", "OIHW", "NCHW")
    hi = lax.Precision.HIGHEST
    for (kind, _, _), (w, b, gamma, beta, mean, var) in zip(cfg, params):
        if kind == "conv":
            y = lax.conv_general_dilated(x, w, (2, 2), ((1, 1), (1, 1)),
                                         dimension_numbers=dn, precision=hi)
        else:
            w_eq = jnp.flip(w, axis=(2, 3)).transpose(1, 0, 2, 3)
            y = lax.conv_general_dilated(x, w_eq, (1, 1), ((1, 1), (1, 1)),
                                         lhs_dilation=(2, 2),
                                         dimension_numbers=dn, precision=hi)
        y = jnp.maximum(y + b.reshape(1, -1, 1, 1), 0.0)
        scale = gamma / jnp.sqrt(var + EPS)
        shift = beta - mean * scale
        x = y * scale.reshape(1, -1, 1, 1) + shift.reshape(1, -1, 1, 1)
    wf, bf = final_params
    y = lax.conv_general_dilated(x, wf, (1, 1), ((0, 0), (0, 0)),
                                 dimension_numbers=dn, precision=hi)
    return jax.nn.sigmoid(y + bf.reshape(1, -1, 1, 1))


if __name__ == "__main__":
    C = 64                      # input_channels (must be divisible by 64)
    N, H, W = 2, 16, 16         # small synthetic NCHW input

    key = jax.random.PRNGKey(0)
    kx, kp = jax.random.split(key)
    x = jax.random.normal(kx, (N, C, H, W), jnp.float32)
    params, final_params = init_params(kp, C)

    prepped = prepare_params(params, final_params, C)   # one-time weight folding
    forward = jax.jit(make_seg_head(C))
    y = forward(x, prepped)
    jax.block_until_ready(y)

    # spatial trace: 16 -> 8 -> 4 -> 7 -> 13 -> 25 -> 49 -> 97 -> 97
    assert y.shape == (N, 1, 97, 97), y.shape
    assert bool(jnp.all(jnp.isfinite(y)))
    assert bool(jnp.all((y >= 0.0) & (y <= 1.0)))   # sigmoid output range

    # numerical check vs the pure-JAX f32 reference (Pallas path uses bf16
    # operands/activations with f32 accumulation -> loose tolerance)
    y_ref = jax.jit(functools.partial(reference_forward, cfg=make_cfg(C)))(
        x, params, final_params)
    err = float(jnp.max(jnp.abs(y - y_ref)))
    assert err < 5e-2, f"max abs err vs reference: {err}"
    print("KERNEL_OK")
</pallas_src>

<mosaic_0001>
module attributes {stable_mosaic.version = 11 : i64} {
  func.func @_relu_bn_kernel(%arg0: i32, %arg1: memref<32x576xbf16, #tpu.memory_space<vmem>>, %arg2: memref<576x128xbf16, #tpu.memory_space<vmem>>, %arg3: memref<3x32x1xf32, #tpu.memory_space<vmem>>, %arg4: memref<32x128xbf16, #tpu.memory_space<vmem>>) attributes {dimension_semantics = [#tpu.dimension_semantics<parallel>], iteration_bounds = array<i64: 1>, scalar_prefetch = 0 : i64, scratch_operands = 0 : i64, tpu.core_type = #tpu.core_type<tc>, window_params = [{pipeline_mode = #tpu.pipeline_mode<synchronous>, transform_indices = @transform_0, window_bounds = array<i64: 32, 576>}, {transform_indices = @transform_1, window_bounds = array<i64: 576, 128>}, {pipeline_mode = #tpu.pipeline_mode<synchronous>, transform_indices = @transform_2, window_bounds = array<i64: 3, 32, 1>}, {transform_indices = @transform_3, window_bounds = array<i64: 32, 128>}]} {
    %c0 = arith.constant 0 : index
    %c0_0 = arith.constant 0 : index
    %0 = vector.load %arg1[%c0, %c0_0] : memref<32x576xbf16, #tpu.memory_space<vmem>>, vector<32x576xbf16>
    %c0_1 = arith.constant 0 : index
    %c0_2 = arith.constant 0 : index
    %1 = vector.load %arg2[%c0_1, %c0_2] : memref<576x128xbf16, #tpu.memory_space<vmem>>, vector<576x128xbf16>
    %cst = arith.constant dense<0.000000e+00> : vector<32x128xf32>
    %2 = tpu.matmul %0, %1, %cst {dimension_numbers = #tpu.dot_dimension_numbers<[1], [0], [0], [1], [0, 0, 1, 1], [], []>} : vector<32x576xbf16>, vector<576x128xbf16>, vector<32x128xf32> -> vector<32x128xf32>
    %c0_3 = arith.constant 0 : index
    %c0_4 = arith.constant 0 : index
    %c0_5 = arith.constant 0 : index
    %3 = vector.load %arg3[%c0_3, %c0_4, %c0_5] : memref<3x32x1xf32, #tpu.memory_space<vmem>>, vector<1x32x1xf32>
    %4 = vector.shape_cast %3 : vector<1x32x1xf32> to vector<32x1xf32>
    %5 = vector.broadcast %4 : vector<32x1xf32> to vector<32x128xf32>
    %6 = arith.addf %2, %5 : vector<32x128xf32>
    %cst_6 = arith.constant 0.000000e+00 : f32
    %7 = vector.broadcast %cst_6 : f32 to vector<32x128xf32>
    %8 = arith.maximumf %6, %7 : vector<32x128xf32>
    %c1 = arith.constant 1 : index
    %c0_7 = arith.constant 0 : index
    %c0_8 = arith.constant 0 : index
    %9 = vector.load %arg3[%c1, %c0_7, %c0_8] : memref<3x32x1xf32, #tpu.memory_space<vmem>>, vector<1x32x1xf32>
    %10 = vector.shape_cast %9 : vector<1x32x1xf32> to vector<32x1xf32>
    %11 = vector.broadcast %10 : vector<32x1xf32> to vector<32x128xf32>
    %12 = arith.mulf %8, %11 : vector<32x128xf32>
    %c2 = arith.constant 2 : index
    %c0_9 = arith.constant 0 : index
    %c0_10 = arith.constant 0 : index
    %13 = vector.load %arg3[%c2, %c0_9, %c0_10] : memref<3x32x1xf32, #tpu.memory_space<vmem>>, vector<1x32x1xf32>
    %14 = vector.shape_cast %13 : vector<1x32x1xf32> to vector<32x1xf32>
    %15 = vector.broadcast %14 : vector<32x1xf32> to vector<32x128xf32>
    %16 = arith.addf %12, %15 : vector<32x128xf32>
    %17 = arith.truncf %16 : vector<32x128xf32> to vector<32x128xbf16>
    %c0_11 = arith.constant 0 : index
    %c0_12 = arith.constant 0 : index
    %18 = vector.load %arg4[%c0_11, %c0_12] : memref<32x128xbf16, #tpu.memory_space<vmem>>, vector<32x128xbf16>
    tpu.vector_store %arg4[%c0_11, %c0_12], %17 {strides = array<i32>} : memref<32x128xbf16, #tpu.memory_space<vmem>>, vector<32x128xbf16>,
    return
  }
  func.func @transform_0(%arg0: i32) -> (i32, i32) {
    %c0_i32 = arith.constant 0 : i32
    %c0_i32_0 = arith.constant 0 : i32
    %c0_i32_1 = arith.constant 0 : i32
    return %c0_i32, %c0_i32_0 : i32, i32
  }
  func.func @transform_1(%arg0: i32) -> (i32, i32) {
    %c0_i32 = arith.constant 0 : i32
    %c0_i32_0 = arith.constant 0 : i32
    return %c0_i32, %arg0 : i32, i32
  }
  func.func @transform_2(%arg0: i32) -> (i32, i32, i32) {
    %c0_i32 = arith.constant 0 : i32
    %c0_i32_0 = arith.constant 0 : i32
    %c0_i32_1 = arith.constant 0 : i32
    %c0_i32_2 = arith.constant 0 : i32
    return %c0_i32, %c0_i32_0, %c0_i32_1 : i32, i32, i32
  }
  func.func @transform_3(%arg0: i32) -> (i32, i32) {
    %c0_i32 = arith.constant 0 : i32
    %c0_i32_0 = arith.constant 0 : i32
    return %c0_i32, %arg0 : i32, i32
  }
}

module attributes {stable_mosaic.version = 11 : i64} {
  func.func @_relu_bn_kernel(%arg0: i32, %arg1: memref<16x288xbf16, #tpu.memory_space<vmem>>, %arg2: memref<288x128xbf16, #tpu.memory_space<vmem>>, %arg3: memref<3x16x1xf32, #tpu.memory_space<vmem>>, %arg4: memref<16x128xbf16, #tpu.memory_space<vmem>>) attributes {dimension_semantics = [#tpu.dimension_semantics<parallel>], iteration_bounds = array<i64: 1>, scalar_prefetch = 0 : i64, scratch_operands = 0 : i64, tpu.core_type = #tpu.core_type<tc>, window_params = [{pipeline_mode = #tpu.pipeline_mode<synchronous>, transform_indices = @transform_0, window_bounds = array<i64: 16, 288>}, {transform_indices = @transform_1, window_bounds = array<i64: 288, 128>}, {pipeline_mode = #tpu.pipeline_mode<synchronous>, transform_indices = @transform_2, window_bounds = array<i64: 3, 16, 1>}, {transform_indices = @transform_3, window_bounds = array<i64: 16, 128>}]} {
    %c0 = arith.constant 0 : index
    %c0_0 = arith.constant 0 : index
    %0 = vector.load %arg1[%c0, %c0_0] : memref<16x288xbf16, #tpu.memory_space<vmem>>, vector<16x288xbf16>
    %c0_1 = arith.constant 0 : index
    %c0_2 = arith.constant 0 : index
    %1 = vector.load %arg2[%c0_1, %c0_2] : memref<288x128xbf16, #tpu.memory_space<vmem>>, vector<288x128xbf16>
    %cst = arith.constant dense<0.000000e+00> : vector<16x128xf32>
    %2 = tpu.matmul %0, %1, %cst {dimension_numbers = #tpu.dot_dimension_numbers<[1], [0], [0], [1], [0, 0, 1, 1], [], []>} : vector<16x288xbf16>, vector<288x128xbf16>, vector<16x128xf32> -> vector<16x128xf32>
    %c0_3 = arith.constant 0 : index
    %c0_4 = arith.constant 0 : index
    %c0_5 = arith.constant 0 : index
    %3 = vector.load %arg3[%c0_3, %c0_4, %c0_5] : memref<3x16x1xf32, #tpu.memory_space<vmem>>, vector<1x16x1xf32>
    %4 = vector.shape_cast %3 : vector<1x16x1xf32> to vector<16x1xf32>
    %5 = vector.broadcast %4 : vector<16x1xf32> to vector<16x128xf32>
    %6 = arith.addf %2, %5 : vector<16x128xf32>
    %cst_6 = arith.constant 0.000000e+00 : f32
    %7 = vector.broadcast %cst_6 : f32 to vector<16x128xf32>
    %8 = arith.maximumf %6, %7 : vector<16x128xf32>
    %c1 = arith.constant 1 : index
    %c0_7 = arith.constant 0 : index
    %c0_8 = arith.constant 0 : index
    %9 = vector.load %arg3[%c1, %c0_7, %c0_8] : memref<3x16x1xf32, #tpu.memory_space<vmem>>, vector<1x16x1xf32>
    %10 = vector.shape_cast %9 : vector<1x16x1xf32> to vector<16x1xf32>
    %11 = vector.broadcast %10 : vector<16x1xf32> to vector<16x128xf32>
    %12 = arith.mulf %8, %11 : vector<16x128xf32>
    %c2 = arith.constant 2 : index
    %c0_9 = arith.constant 0 : index
    %c0_10 = arith.constant 0 : index
    %13 = vector.load %arg3[%c2, %c0_9, %c0_10] : memref<3x16x1xf32, #tpu.memory_space<vmem>>, vector<1x16x1xf32>
    %14 = vector.shape_cast %13 : vector<1x16x1xf32> to vector<16x1xf32>
    %15 = vector.broadcast %14 : vector<16x1xf32> to vector<16x128xf32>
    %16 = arith.addf %12, %15 : vector<16x128xf32>
    %17 = arith.truncf %16 : vector<16x128xf32> to vector<16x128xbf16>
    %c0_11 = arith.constant 0 : index
    %c0_12 = arith.constant 0 : index
    %18 = vector.load %arg4[%c0_11, %c0_12] : memref<16x128xbf16, #tpu.memory_space<vmem>>, vector<16x128xbf16>
    tpu.vector_store %arg4[%c0_11, %c0_12], %17 {strides = array<i32>} : memref<16x128xbf16, #tpu.memory_space<vmem>>, vector<16x128xbf16>,
    return
  }
  func.func @transform_0(%arg0: i32) -> (i32, i32) {
    %c0_i32 = arith.constant 0 : i32
    %c0_i32_0 = arith.constant 0 : i32
    %c0_i32_1 = arith.constant 0 : i32
    return %c0_i32, %c0_i32_0 : i32, i32
  }
  func.func @transform_1(%arg0: i32) -> (i32, i32) {
    %c0_i32 = arith.constant 0 : i32
    %c0_i32_0 = arith.constant 0 : i32
    return %c0_i32, %arg0 : i32, i32
  }
  func.func @transform_2(%arg0: i32) -> (i32, i32, i32) {
    %c0_i32 = arith.constant 0 : i32
    %c0_i32_0 = arith.constant 0 : i32
    %c0_i32_1 = arith.constant 0 : i32
    %c0_i32_2 = arith.constant 0 : i32
    return %c0_i32, %c0_i32_0, %c0_i32_1 : i32, i32, i32
  }
  func.func @transform_3(%arg0: i32) -> (i32, i32) {
    %c0_i32 = arith.constant 0 : i32
    %c0_i32_0 = arith.constant 0 : i32
    return %c0_i32, %arg0 : i32, i32
  }
}

module attributes {stable_mosaic.version = 11 : i64} {
  func.func @_relu_bn_kernel(%arg0: i32, %arg1: memref<32x64xbf16, #tpu.memory_space<vmem>>, %arg2: memref<64x128xbf16, #tpu.memory_space<vmem>>, %arg3: memref<3x32x1xf32, #tpu.memory_space<vmem>>, %arg4: memref<32x128xbf16, #tpu.memory_space<vmem>>) attributes {dimension_semantics = [#tpu.dimension_semantics<parallel>], iteration_bounds = array<i64: 1>, scalar_prefetch = 0 : i64, scratch_operands = 0 : i64, tpu.core_type = #tpu.core_type<tc>, window_params = [{pipeline_mode = #tpu.pipeline_mode<synchronous>, transform_indices = @transform_0, window_bounds = array<i64: 32, 64>}, {transform_indices = @transform_1, window_bounds = array<i64: 64, 128>}, {pipeline_mode = #tpu.pipeline_mode<synchronous>, transform_indices = @transform_2, window_bounds = array<i64: 3, 32, 1>}, {transform_indices = @transform_3, window_bounds = array<i64: 32, 128>}]} {
    %c0 = arith.constant 0 : index
    %c0_0 = arith.constant 0 : index
    %0 = vector.load %arg1[%c0, %c0_0] : memref<32x64xbf16, #tpu.memory_space<vmem>>, vector<32x64xbf16>
    %c0_1 = arith.constant 0 : index
    %c0_2 = arith.constant 0 : index
    %1 = vector.load %arg2[%c0_1, %c0_2] : memref<64x128xbf16, #tpu.memory_space<vmem>>, vector<64x128xbf16>
    %cst = arith.constant dense<0.000000e+00> : vector<32x128xf32>
    %2 = tpu.matmul %0, %1, %cst {dimension_numbers = #tpu.dot_dimension_numbers<[1], [0], [0], [1], [0, 0, 1, 1], [], []>} : vector<32x64xbf16>, vector<64x128xbf16>, vector<32x128xf32> -> vector<32x128xf32>
    %c0_3 = arith.constant 0 : index
    %c0_4 = arith.constant 0 : index
    %c0_5 = arith.constant 0 : index
    %3 = vector.load %arg3[%c0_3, %c0_4, %c0_5] : memref<3x32x1xf32, #tpu.memory_space<vmem>>, vector<1x32x1xf32>
    %4 = vector.shape_cast %3 : vector<1x32x1xf32> to vector<32x1xf32>
    %5 = vector.broadcast %4 : vector<32x1xf32> to vector<32x128xf32>
    %6 = arith.addf %2, %5 : vector<32x128xf32>
    %cst_6 = arith.constant 0.000000e+00 : f32
    %7 = vector.broadcast %cst_6 : f32 to vector<32x128xf32>
    %8 = arith.maximumf %6, %7 : vector<32x128xf32>
    %c1 = arith.constant 1 : index
    %c0_7 = arith.constant 0 : index
    %c0_8 = arith.constant 0 : index
    %9 = vector.load %arg3[%c1, %c0_7, %c0_8] : memref<3x32x1xf32, #tpu.memory_space<vmem>>, vector<1x32x1xf32>
    %10 = vector.shape_cast %9 : vector<1x32x1xf32> to vector<32x1xf32>
    %11 = vector.broadcast %10 : vector<32x1xf32> to vector<32x128xf32>
    %12 = arith.mulf %8, %11 : vector<32x128xf32>
    %c2 = arith.constant 2 : index
    %c0_9 = arith.constant 0 : index
    %c0_10 = arith.constant 0 : index
    %13 = vector.load %arg3[%c2, %c0_9, %c0_10] : memref<3x32x1xf32, #tpu.memory_space<vmem>>, vector<1x32x1xf32>
    %14 = vector.shape_cast %13 : vector<1x32x1xf32> to vector<32x1xf32>
    %15 = vector.broadcast %14 : vector<32x1xf32> to vector<32x128xf32>
    %16 = arith.addf %12, %15 : vector<32x128xf32>
    %17 = arith.truncf %16 : vector<32x128xf32> to vector<32x128xbf16>
    %c0_11 = arith.constant 0 : index
    %c0_12 = arith.constant 0 : index
    %18 = vector.load %arg4[%c0_11, %c0_12] : memref<32x128xbf16, #tpu.memory_space<vmem>>, vector<32x128xbf16>
    tpu.vector_store %arg4[%c0_11, %c0_12], %17 {strides = array<i32>} : memref<32x128xbf16, #tpu.memory_space<vmem>>, vector<32x128xbf16>,
    return
  }
  func.func @transform_0(%arg0: i32) -> (i32, i32) {
    %c0_i32 = arith.constant 0 : i32
    %c0_i32_0 = arith.constant 0 : i32
    %c0_i32_1 = arith.constant 0 : i32
    return %c0_i32, %c0_i32_0 : i32, i32
  }
  func.func @transform_1(%arg0: i32) -> (i32, i32) {
    %c0_i32 = arith.constant 0 : i32
    %c0_i32_0 = arith.constant 0 : i32
    return %c0_i32, %arg0 : i32, i32
  }
  func.func @transform_2(%arg0: i32) -> (i32, i32, i32) {
    %c0_i32 = arith.constant 0 : i32
    %c0_i32_0 = arith.constant 0 : i32
    %c0_i32_1 = arith.constant 0 : i32
    %c0_i32_2 = arith.constant 0 : i32
    return %c0_i32, %c0_i32_0, %c0_i32_1 : i32, i32, i32
  }
  func.func @transform_3(%arg0: i32) -> (i32, i32) {
    %c0_i32 = arith.constant 0 : i32
    %c0_i32_0 = arith.constant 0 : i32
    return %c0_i32, %arg0 : i32, i32
  }
}

module attributes {stable_mosaic.version = 11 : i64} {
  func.func @_relu_bn_kernel(%arg0: i32, %arg1: memref<16x32xbf16, #tpu.memory_space<vmem>>, %arg2: memref<32x128xbf16, #tpu.memory_space<vmem>>, %arg3: memref<3x16x1xf32, #tpu.memory_space<vmem>>, %arg4: memref<16x128xbf16, #tpu.memory_space<vmem>>) attributes {dimension_semantics = [#tpu.dimension_semantics<parallel>], iteration_bounds = array<i64: 1>, scalar_prefetch = 0 : i64, scratch_operands = 0 : i64, tpu.core_type = #tpu.core_type<tc>, window_params = [{pipeline_mode = #tpu.pipeline_mode<synchronous>, transform_indices = @transform_0, window_bounds = array<i64: 16, 32>}, {transform_indices = @transform_1, window_bounds = array<i64: 32, 128>}, {pipeline_mode = #tpu.pipeline_mode<synchronous>, transform_indices = @transform_2, window_bounds = array<i64: 3, 16, 1>}, {transform_indices = @transform_3, window_bounds = array<i64: 16, 128>}]} {
    %c0 = arith.constant 0 : index
    %c0_0 = arith.constant 0 : index
    %0 = vector.load %arg1[%c0, %c0_0] : memref<16x32xbf16, #tpu.memory_space<vmem>>, vector<16x32xbf16>
    %c0_1 = arith.constant 0 : index
    %c0_2 = arith.constant 0 : index
    %1 = vector.load %arg2[%c0_1, %c0_2] : memref<32x128xbf16, #tpu.memory_space<vmem>>, vector<32x128xbf16>
    %cst = arith.constant dense<0.000000e+00> : vector<16x128xf32>
    %2 = tpu.matmul %0, %1, %cst {dimension_numbers = #tpu.dot_dimension_numbers<[1], [0], [0], [1], [0, 0, 1, 1], [], []>} : vector<16x32xbf16>, vector<32x128xbf16>, vector<16x128xf32> -> vector<16x128xf32>
    %c0_3 = arith.constant 0 : index
    %c0_4 = arith.constant 0 : index
    %c0_5 = arith.constant 0 : index
    %3 = vector.load %arg3[%c0_3, %c0_4, %c0_5] : memref<3x16x1xf32, #tpu.memory_space<vmem>>, vector<1x16x1xf32>
    %4 = vector.shape_cast %3 : vector<1x16x1xf32> to vector<16x1xf32>
    %5 = vector.broadcast %4 : vector<16x1xf32> to vector<16x128xf32>
    %6 = arith.addf %2, %5 : vector<16x128xf32>
    %cst_6 = arith.constant 0.000000e+00 : f32
    %7 = vector.broadcast %cst_6 : f32 to vector<16x128xf32>
    %8 = arith.maximumf %6, %7 : vector<16x128xf32>
    %c1 = arith.constant 1 : index
    %c0_7 = arith.constant 0 : index
    %c0_8 = arith.constant 0 : index
    %9 = vector.load %arg3[%c1, %c0_7, %c0_8] : memref<3x16x1xf32, #tpu.memory_space<vmem>>, vector<1x16x1xf32>
    %10 = vector.shape_cast %9 : vector<1x16x1xf32> to vector<16x1xf32>
    %11 = vector.broadcast %10 : vector<16x1xf32> to vector<16x128xf32>
    %12 = arith.mulf %8, %11 : vector<16x128xf32>
    %c2 = arith.constant 2 : index
    %c0_9 = arith.constant 0 : index
    %c0_10 = arith.constant 0 : index
    %13 = vector.load %arg3[%c2, %c0_9, %c0_10] : memref<3x16x1xf32, #tpu.memory_space<vmem>>, vector<1x16x1xf32>
    %14 = vector.shape_cast %13 : vector<1x16x1xf32> to vector<16x1xf32>
    %15 = vector.broadcast %14 : vector<16x1xf32> to vector<16x128xf32>
    %16 = arith.addf %12, %15 : vector<16x128xf32>
    %17 = arith.truncf %16 : vector<16x128xf32> to vector<16x128xbf16>
    %c0_11 = arith.constant 0 : index
    %c0_12 = arith.constant 0 : index
    %18 = vector.load %arg4[%c0_11, %c0_12] : memref<16x128xbf16, #tpu.memory_space<vmem>>, vector<16x128xbf16>
    tpu.vector_store %arg4[%c0_11, %c0_12], %17 {strides = array<i32>} : memref<16x128xbf16, #tpu.memory_space<vmem>>, vector<16x128xbf16>,
    return
  }
  func.func @transform_0(%arg0: i32) -> (i32, i32) {
    %c0_i32 = arith.constant 0 : i32
    %c0_i32_0 = arith.constant 0 : i32
    %c0_i32_1 = arith.constant 0 : i32
    return %c0_i32, %c0_i32_0 : i32, i32
  }
  func.func @transform_1(%arg0: i32) -> (i32, i32) {
    %c0_i32 = arith.constant 0 : i32
    %c0_i32_0 = arith.constant 0 : i32
    return %c0_i32, %arg0 : i32, i32
  }
  func.func @transform_2(%arg0: i32) -> (i32, i32, i32) {
    %c0_i32 = arith.constant 0 : i32
    %c0_i32_0 = arith.constant 0 : i32
    %c0_i32_1 = arith.constant 0 : i32
    %c0_i32_2 = arith.constant 0 : i32
    return %c0_i32, %c0_i32_0, %c0_i32_1 : i32, i32, i32
  }
  func.func @transform_3(%arg0: i32) -> (i32, i32) {
    %c0_i32 = arith.constant 0 : i32
    %c0_i32_0 = arith.constant 0 : i32
    return %c0_i32, %arg0 : i32, i32
  }
}

module attributes {stable_mosaic.version = 11 : i64} {
  func.func @_relu_bn_kernel(%arg0: i32, %arg1: memref<16x16xbf16, #tpu.memory_space<vmem>>, %arg2: memref<16x384xbf16, #tpu.memory_space<vmem>>, %arg3: memref<3x16x1xf32, #tpu.memory_space<vmem>>, %arg4: memref<16x384xbf16, #tpu.memory_space<vmem>>) attributes {dimension_semantics = [#tpu.dimension_semantics<parallel>], iteration_bounds = array<i64: 1>, scalar_prefetch = 0 : i64, scratch_operands = 0 : i64, tpu.core_type = #tpu.core_type<tc>, window_params = [{pipeline_mode = #tpu.pipeline_mode<synchronous>, transform_indices = @transform_0, window_bounds = array<i64: 16, 16>}, {transform_indices = @transform_1, window_bounds = array<i64: 16, 384>}, {pipeline_mode = #tpu.pipeline_mode<synchronous>, transform_indices = @transform_2, window_bounds = array<i64: 3, 16, 1>}, {transform_indices = @transform_3, window_bounds = array<i64: 16, 384>}]} {
    %c0 = arith.constant 0 : index
    %c0_0 = arith.constant 0 : index
    %0 = vector.load %arg1[%c0, %c0_0] : memref<16x16xbf16, #tpu.memory_space<vmem>>, vector<16x16xbf16>
    %c0_1 = arith.constant 0 : index
    %c0_2 = arith.constant 0 : index
    %1 = vector.load %arg2[%c0_1, %c0_2] : memref<16x384xbf16, #tpu.memory_space<vmem>>, vector<16x384xbf16>
    %cst = arith.constant dense<0.000000e+00> : vector<16x384xf32>
    %2 = tpu.matmul %0, %1, %cst {dimension_numbers = #tpu.dot_dimension_numbers<[1], [0], [0], [1], [0, 0, 1, 1], [], []>} : vector<16x16xbf16>, vector<16x384xbf16>, vector<16x384xf32> -> vector<16x384xf32>
    %c0_3 = arith.constant 0 : index
    %c0_4 = arith.constant 0 : index
    %c0_5 = arith.constant 0 : index
    %3 = vector.load %arg3[%c0_3, %c0_4, %c0_5] : memref<3x16x1xf32, #tpu.memory_space<vmem>>, vector<1x16x1xf32>
    %4 = vector.shape_cast %3 : vector<1x16x1xf32> to vector<16x1xf32>
    %5 = vector.broadcast %4 : vector<16x1xf32> to vector<16x384xf32>
    %6 = arith.addf %2, %5 : vector<16x384xf32>
    %cst_6 = arith.constant 0.000000e+00 : f32
    %7 = vector.broadcast %cst_6 : f32 to vector<16x384xf32>
    %8 = arith.maximumf %6, %7 : vector<16x384xf32>
    %c1 = arith.constant 1 : index
    %c0_7 = arith.constant 0 : index
    %c0_8 = arith.constant 0 : index
    %9 = vector.load %arg3[%c1, %c0_7, %c0_8] : memref<3x16x1xf32, #tpu.memory_space<vmem>>, vector<1x16x1xf32>
    %10 = vector.shape_cast %9 : vector<1x16x1xf32> to vector<16x1xf32>
    %11 = vector.broadcast %10 : vector<16x1xf32> to vector<16x384xf32>
    %12 = arith.mulf %8, %11 : vector<16x384xf32>
    %c2 = arith.constant 2 : index
    %c0_9 = arith.constant 0 : index
    %c0_10 = arith.constant 0 : index
    %13 = vector.load %arg3[%c2, %c0_9, %c0_10] : memref<3x16x1xf32, #tpu.memory_space<vmem>>, vector<1x16x1xf32>
    %14 = vector.shape_cast %13 : vector<1x16x1xf32> to vector<16x1xf32>
    %15 = vector.broadcast %14 : vector<16x1xf32> to vector<16x384xf32>
    %16 = arith.addf %12, %15 : vector<16x384xf32>
    %17 = arith.truncf %16 : vector<16x384xf32> to vector<16x384xbf16>
    %c0_11 = arith.constant 0 : index
    %c0_12 = arith.constant 0 : index
    %18 = vector.load %arg4[%c0_11, %c0_12] : memref<16x384xbf16, #tpu.memory_space<vmem>>, vector<16x384xbf16>
    tpu.vector_store %arg4[%c0_11, %c0_12], %17 {strides = array<i32>} : memref<16x384xbf16, #tpu.memory_space<vmem>>, vector<16x384xbf16>,
    return
  }
  func.func @transform_0(%arg0: i32) -> (i32, i32) {
    %c0_i32 = arith.constant 0 : i32
    %c0_i32_0 = arith.constant 0 : i32
    %c0_i32_1 = arith.constant 0 : i32
    return %c0_i32, %c0_i32_0 : i32, i32
  }
  func.func @transform_1(%arg0: i32) -> (i32, i32) {
    %c0_i32 = arith.constant 0 : i32
    %c0_i32_0 = arith.constant 0 : i32
    return %c0_i32, %arg0 : i32, i32
  }
  func.func @transform_2(%arg0: i32) -> (i32, i32, i32) {
    %c0_i32 = arith.constant 0 : i32
    %c0_i32_0 = arith.constant 0 : i32
    %c0_i32_1 = arith.constant 0 : i32
    %c0_i32_2 = arith.constant 0 : i32
    return %c0_i32, %c0_i32_0, %c0_i32_1 : i32, i32, i32
  }
  func.func @transform_3(%arg0: i32) -> (i32, i32) {
    %c0_i32 = arith.constant 0 : i32
    %c0_i32_0 = arith.constant 0 : i32
    return %c0_i32, %arg0 : i32, i32
  }
}

module attributes {stable_mosaic.version = 11 : i64} {
  func.func @_relu_bn_kernel(%arg0: i32, %arg1: memref<16x8xbf16, #tpu.memory_space<vmem>>, %arg2: memref<8x640xbf16, #tpu.memory_space<vmem>>, %arg3: memref<3x16x1xf32, #tpu.memory_space<vmem>>, %arg4: memref<16x640xbf16, #tpu.memory_space<vmem>>) attributes {dimension_semantics = [#tpu.dimension_semantics<parallel>], iteration_bounds = array<i64: 2>, scalar_prefetch = 0 : i64, scratch_operands = 0 : i64, tpu.core_type = #tpu.core_type<tc>, window_params = [{pipeline_mode = #tpu.pipeline_mode<synchronous>, transform_indices = @transform_0, window_bounds = array<i64: 16, 8>}, {transform_indices = @transform_1, window_bounds = array<i64: 8, 640>}, {pipeline_mode = #tpu.pipeline_mode<synchronous>, transform_indices = @transform_2, window_bounds = array<i64: 3, 16, 1>}, {transform_indices = @transform_3, window_bounds = array<i64: 16, 640>}]} {
    %c0 = arith.constant 0 : index
    %c0_0 = arith.constant 0 : index
    %0 = vector.load %arg1[%c0, %c0_0] : memref<16x8xbf16, #tpu.memory_space<vmem>>, vector<16x8xbf16>
    %c0_1 = arith.constant 0 : index
    %c0_2 = arith.constant 0 : index
    %1 = vector.load %arg2[%c0_1, %c0_2] : memref<8x640xbf16, #tpu.memory_space<vmem>>, vector<8x640xbf16>
    %cst = arith.constant dense<0.000000e+00> : vector<16x640xf32>
    %2 = tpu.matmul %0, %1, %cst {dimension_numbers = #tpu.dot_dimension_numbers<[1], [0], [0], [1], [0, 0, 1, 1], [], []>} : vector<16x8xbf16>, vector<8x640xbf16>, vector<16x640xf32> -> vector<16x640xf32>
    %c0_3 = arith.constant 0 : index
    %c0_4 = arith.constant 0 : index
    %c0_5 = arith.constant 0 : index
    %3 = vector.load %arg3[%c0_3, %c0_4, %c0_5] : memref<3x16x1xf32, #tpu.memory_space<vmem>>, vector<1x16x1xf32>
    %4 = vector.shape_cast %3 : vector<1x16x1xf32> to vector<16x1xf32>
    %5 = vector.broadcast %4 : vector<16x1xf32> to vector<16x640xf32>
    %6 = arith.addf %2, %5 : vector<16x640xf32>
    %cst_6 = arith.constant 0.000000e+00 : f32
    %7 = vector.broadcast %cst_6 : f32 to vector<16x640xf32>
    %8 = arith.maximumf %6, %7 : vector<16x640xf32>
    %c1 = arith.constant 1 : index
    %c0_7 = arith.constant 0 : index
    %c0_8 = arith.constant 0 : index
    %9 = vector.load %arg3[%c1, %c0_7, %c0_8] : memref<3x16x1xf32, #tpu.memory_space<vmem>>, vector<1x16x1xf32>
    %10 = vector.shape_cast %9 : vector<1x16x1xf32> to vector<16x1xf32>
    %11 = vector.broadcast %10 : vector<16x1xf32> to vector<16x640xf32>
    %12 = arith.mulf %8, %11 : vector<16x640xf32>
    %c2 = arith.constant 2 : index
    %c0_9 = arith.constant 0 : index
    %c0_10 = arith.constant 0 : index
    %13 = vector.load %arg3[%c2, %c0_9, %c0_10] : memref<3x16x1xf32, #tpu.memory_space<vmem>>, vector<1x16x1xf32>
    %14 = vector.shape_cast %13 : vector<1x16x1xf32> to vector<16x1xf32>
    %15 = vector.broadcast %14 : vector<16x1xf32> to vector<16x640xf32>
    %16 = arith.addf %12, %15 : vector<16x640xf32>
    %17 = arith.truncf %16 : vector<16x640xf32> to vector<16x640xbf16>
    %c0_11 = arith.constant 0 : index
    %c0_12 = arith.constant 0 : index
    %18 = vector.load %arg4[%c0_11, %c0_12] : memref<16x640xbf16, #tpu.memory_space<vmem>>, vector<16x640xbf16>
    tpu.vector_store %arg4[%c0_11, %c0_12], %17 {strides = array<i32>} : memref<16x640xbf16, #tpu.memory_space<vmem>>, vector<16x640xbf16>,
    return
  }
  func.func @transform_0(%arg0: i32) -> (i32, i32) {
    %c0_i32 = arith.constant 0 : i32
    %c0_i32_0 = arith.constant 0 : i32
    %c0_i32_1 = arith.constant 0 : i32
    return %c0_i32, %c0_i32_0 : i32, i32
  }
  func.func @transform_1(%arg0: i32) -> (i32, i32) {
    %c0_i32 = arith.constant 0 : i32
    %c0_i32_0 = arith.constant 0 : i32
    return %c0_i32, %arg0 : i32, i32
  }
  func.func @transform_2(%arg0: i32) -> (i32, i32, i32) {
    %c0_i32 = arith.constant 0 : i32
    %c0_i32_0 = arith.constant 0 : i32
    %c0_i32_1 = arith.constant 0 : i32
    %c0_i32_2 = arith.constant 0 : i32
    return %c0_i32, %c0_i32_0, %c0_i32_1 : i32, i32, i32
  }
  func.func @transform_3(%arg0: i32) -> (i32, i32) {
    %c0_i32 = arith.constant 0 : i32
    %c0_i32_0 = arith.constant 0 : i32
    return %c0_i32, %arg0 : i32, i32
  }
}

module attributes {stable_mosaic.version = 11 : i64} {
  func.func @_final_kernel(%arg0: i32, %arg1: memref<8x8xbf16, #tpu.memory_space<vmem>>, %arg2: memref<8x2432xbf16, #tpu.memory_space<vmem>>, %arg3: memref<1x8x1xf32, #tpu.memory_space<vmem>>, %arg4: memref<8x8xf32, #tpu.memory_space<vmem>>, %arg5: memref<8x1xf32, #tpu.memory_space<vmem>>, %arg6: memref<8x2432xf32, #tpu.memory_space<vmem>>) attributes {dimension_semantics = [#tpu.dimension_semantics<parallel>], iteration_bounds = array<i64: 2>, scalar_prefetch = 0 : i64, scratch_operands = 0 : i64, tpu.core_type = #tpu.core_type<tc>, window_params = [{pipeline_mode = #tpu.pipeline_mode<synchronous>, transform_indices = @transform_0, window_bounds = array<i64: 8, 8>}, {transform_indices = @transform_1, window_bounds = array<i64: 8, 2432>}, {pipeline_mode = #tpu.pipeline_mode<synchronous>, transform_indices = @transform_2, window_bounds = array<i64: 1, 8, 1>}, {pipeline_mode = #tpu.pipeline_mode<synchronous>, transform_indices = @transform_3, window_bounds = array<i64: 8, 8>}, {pipeline_mode = #tpu.pipeline_mode<synchronous>, transform_indices = @transform_4, window_bounds = array<i64: 8, 1>}, {transform_indices = @transform_5, window_bounds = array<i64: 8, 2432>}]} {
    %c0 = arith.constant 0 : index
    %c0_0 = arith.constant 0 : index
    %0 = vector.load %arg1[%c0, %c0_0] : memref<8x8xbf16, #tpu.memory_space<vmem>>, vector<8x8xbf16>
    %c0_1 = arith.constant 0 : index
    %c0_2 = arith.constant 0 : index
    %1 = vector.load %arg2[%c0_1, %c0_2] : memref<8x2432xbf16, #tpu.memory_space<vmem>>, vector<8x2432xbf16>
    %cst = arith.constant dense<0.000000e+00> : vector<8x2432xf32>
    %2 = tpu.matmul %0, %1, %cst {dimension_numbers = #tpu.dot_dimension_numbers<[1], [0], [0], [1], [0, 0, 1, 1], [], []>} : vector<8x8xbf16>, vector<8x2432xbf16>, vector<8x2432xf32> -> vector<8x2432xf32>
    %c0_3 = arith.constant 0 : index
    %c0_4 = arith.constant 0 : index
    %c0_5 = arith.constant 0 : index
    %3 = vector.load %arg3[%c0_3, %c0_4, %c0_5] : memref<1x8x1xf32, #tpu.memory_space<vmem>>, vector<1x8x1xf32>
    %4 = vector.shape_cast %3 : vector<1x8x1xf32> to vector<8x1xf32>
    %5 = vector.broadcast %4 : vector<8x1xf32> to vector<8x2432xf32>
    %6 = arith.addf %2, %5 : vector<8x2432xf32>
    %cst_6 = arith.constant 0.000000e+00 : f32
    %7 = vector.broadcast %cst_6 : f32 to vector<8x2432xf32>
    %8 = arith.maximumf %6, %7 : vector<8x2432xf32>
    %c0_7 = arith.constant 0 : index
    %c0_8 = arith.constant 0 : index
    %9 = vector.load %arg4[%c0_7, %c0_8] : memref<8x8xf32, #tpu.memory_space<vmem>>, vector<8x8xf32>
    %cst_9 = arith.constant dense<0.000000e+00> : vector<8x2432xf32>
    %10 = tpu.matmul %9, %8, %cst_9 {dimension_numbers = #tpu.dot_dimension_numbers<[1], [0], [0], [1], [0, 0, 1, 1], [], []>} : vector<8x8xf32>, vector<8x2432xf32>, vector<8x2432xf32> -> vector<8x2432xf32>
    %c0_10 = arith.constant 0 : index
    %c0_11 = arith.constant 0 : index
    %11 = vector.load %arg5[%c0_10, %c0_11] : memref<8x1xf32, #tpu.memory_space<vmem>>, vector<8x1xf32>
    %12 = vector.broadcast %11 : vector<8x1xf32> to vector<8x2432xf32>
    %13 = arith.addf %10, %12 : vector<8x2432xf32>
    %14 = arith.negf %13 : vector<8x2432xf32>
    %15 = math.exp %14 : vector<8x2432xf32>
    %cst_12 = arith.constant 1.000000e+00 : f32
    %16 = vector.broadcast %cst_12 : f32 to vector<8x2432xf32>
    %17 = arith.addf %16, %15 : vector<8x2432xf32>
    %18 = arith.divf %16, %17 : vector<8x2432xf32>
    %c0_13 = arith.constant 0 : index
    %c0_14 = arith.constant 0 : index
    %19 = vector.load %arg6[%c0_13, %c0_14] : memref<8x2432xf32, #tpu.memory_space<vmem>>, vector<8x2432xf32>
    tpu.vector_store %arg6[%c0_13, %c0_14], %18 {strides = array<i32>} : memref<8x2432xf32, #tpu.memory_space<vmem>>, vector<8x2432xf32>,
    return
  }
  func.func @transform_0(%arg0: i32) -> (i32, i32) {
    %c0_i32 = arith.constant 0 : i32
    %c0_i32_0 = arith.constant 0 : i32
    %c0_i32_1 = arith.constant 0 : i32
    return %c0_i32, %c0_i32_0 : i32, i32
  }
  func.func @transform_1(%arg0: i32) -> (i32, i32) {
    %c0_i32 = arith.constant 0 : i32
    %c0_i32_0 = arith.constant 0 : i32
    return %c0_i32, %arg0 : i32, i32
  }
  func.func @transform_2(%arg0: i32) -> (i32, i32, i32) {
    %c0_i32 = arith.constant 0 : i32
    %c0_i32_0 = arith.constant 0 : i32
    %c0_i32_1 = arith.constant 0 : i32
    %c0_i32_2 = arith.constant 0 : i32
    return %c0_i32, %c0_i32_0, %c0_i32_1 : i32, i32, i32
  }
  func.func @transform_3(%arg0: i32) -> (i32, i32) {
    %c0_i32 = arith.constant 0 : i32
    %c0_i32_0 = arith.constant 0 : i32
    %c0_i32_1 = arith.constant 0 : i32
    return %c0_i32, %c0_i32_0 : i32, i32
  }
  func.func @transform_4(%arg0: i32) -> (i32, i32) {
    %c0_i32 = arith.constant 0 : i32
    %c0_i32_0 = arith.constant 0 : i32
    %c0_i32_1 = arith.constant 0 : i32
    return %c0_i32, %c0_i32_0 : i32, i32
  }
  func.func @transform_5(%arg0: i32) -> (i32, i32) {
    %c0_i32 = arith.constant 0 : i32
    %c0_i32_0 = arith.constant 0 : i32
    return %c0_i32, %arg0 : i32, i32
  }
}

</mosaic_0001>

<llo_original>
// kernel: forward.7
$region0: #{forward.7}
  #allocation0 [shape = 'u32[]', space=smem, size = 0x4, offset = 0x4, fixed_abs, tag = 'smem constant byte address 0x4 - core index']
  #allocation1 [shape = 'u32[72,128]{1,0:T(1,128)}', space=vmem, size = 0x9000, scoped, tag = 'internal scratch']
  %s0 = inlined_call_operand.vmem [shape: bf16[32,576], index: 0, kind: input, shape index: {}]
  %s1 = inlined_call_operand.vmem [shape: bf16[576,128], index: 1, kind: input, shape index: {}]
  %s2 = inlined_call_operand.vmem [shape: f32[3,32,1], index: 2, kind: input, shape index: {}]
  %s3 = inlined_call_operand.vmem [shape: bf16[32,128], index: 3, kind: output, shape index: {}]
  %s4 = sld [smem:[#allocation0]]
  $region22: #{forward.7} parent=0
    _
  %s6 = ssub.s32 1, %s4
  %s7 = scalar_select 0, %s6, %s4
  // Predicated region
  $region2: #{forward.7} parent=0 // pred_check
    _
  $region3: #{forward.7} parent=0 // pred_check_branch
    %9 = sbr.rel (0) target = $region5
  $region4: #{forward.7} parent=0 // pred_region
    _
  $region5: #{forward.7} parent=0 // pred_fallthru
    _
  // Predicated region
  $region6: #{forward.7} parent=0 // pred_check
    _
  $region7: #{forward.7} parent=0 // pred_check_branch
    %11 = sbr.rel (0) target = $region9
  $region8: #{forward.7} parent=0 // pred_region
    _
  $region9: #{forward.7} parent=0 // pred_fallthru
    _
  // Predicated region
  $region10: #{forward.7} parent=0 // pred_check
    _
  $region11: #{forward.7} parent=0 // pred_check_branch
    %13 = sbr.rel (0) target = $region13
  $region12: #{forward.7} parent=0 // pred_region
    _
  $region13: #{forward.7} parent=0 // pred_fallthru
    _
  %v15 = vld [vmem:[%s0] sm:$0xff]
  %v16 = vld [vmem:[%s0 + $0x8] sm:$0xff]
  %v17 = vld [vmem:[%s0 + $0x10] sm:$0xf]
  %v18 = vld [vmem:[%s0 + $0x14] sm:$0xff]
  %v19 = vld [vmem:[%s0 + $0x1c] sm:$0xff]
  %v20 = vld [vmem:[%s0 + $0x24] sm:$0xf]
  %v21 = vld [vmem:[%s0 + $0x28] sm:$0xff]
  %v22 = vld [vmem:[%s0 + $0x30] sm:$0xff]
  %v23 = vld [vmem:[%s0 + $0x38] sm:$0xf]
  %v24 = vld [vmem:[%s0 + $0x3c] sm:$0xff]
  %v25 = vld [vmem:[%s0 + $0x44] sm:$0xff]
  %v26 = vld [vmem:[%s0 + $0x4c] sm:$0xf]
  %v27 = vld [vmem:[%s1] sm:$0xf]
  %v28 = vld [vmem:[%s1 + $0x4] sm:$0xf]
  %v29 = vld [vmem:[%s1 + $0x8] sm:$0xf]
  %v30 = vld [vmem:[%s1 + $0xc] sm:$0xf]
  %v31 = vld [vmem:[%s1 + $0x10] sm:$0xf]
  %v32 = vld [vmem:[%s1 + $0x14] sm:$0xf]
  %v33 = vld [vmem:[%s1 + $0x18] sm:$0xf]
  %v34 = vld [vmem:[%s1 + $0x1c] sm:$0xf]
  %v35 = vld [vmem:[%s1 + $0x20] sm:$0xf]
  %v36 = vld [vmem:[%s1 + $0x24] sm:$0xf]
  %v37 = vld [vmem:[%s1 + $0x28] sm:$0xf]
  %v38 = vld [vmem:[%s1 + $0x2c] sm:$0xf]
  %v39 = vld [vmem:[%s1 + $0x30] sm:$0xf]
  %v40 = vld [vmem:[%s1 + $0x34] sm:$0xf]
  %v41 = vld [vmem:[%s1 + $0x38] sm:$0xf]
  %v42 = vld [vmem:[%s1 + $0x3c] sm:$0xf]
  %v43 = vld [vmem:[%s1 + $0x40] sm:$0xf]
  %v44 = vld [vmem:[%s1 + $0x44] sm:$0xf]
  %v45 = vld [vmem:[%s1 + $0x48] sm:$0xf]
  %v46 = vld [vmem:[%s1 + $0x4c] sm:$0xf]
  %v47 = vld [vmem:[%s1 + $0x50] sm:$0xf]
  %v48 = vld [vmem:[%s1 + $0x54] sm:$0xf]
  %v49 = vld [vmem:[%s1 + $0x58] sm:$0xf]
  %v50 = vld [vmem:[%s1 + $0x5c] sm:$0xf]
  %v51 = vld [vmem:[%s1 + $0x60] sm:$0xf]
  %v52 = vld [vmem:[%s1 + $0x64] sm:$0xf]
  %v53 = vld [vmem:[%s1 + $0x68] sm:$0xf]
  %v54 = vld [vmem:[%s1 + $0x6c] sm:$0xf]
  %v55 = vld [vmem:[%s1 + $0x70] sm:$0xf]
  %v56 = vld [vmem:[%s1 + $0x74] sm:$0xf]
  %v57 = vld [vmem:[%s1 + $0x78] sm:$0xf]
  %v58 = vld [vmem:[%s1 + $0x7c] sm:$0xf]
  %v59 = vld [vmem:[%s1 + $0x80] sm:$0xf]
  %v60 = vld [vmem:[%s1 + $0x84] sm:$0xf]
  %v61 = vld [vmem:[%s1 + $0x88] sm:$0xf]
  %v62 = vld [vmem:[%s1 + $0x8c] sm:$0xf]
  %v63 = vld [vmem:[%s1 + $0x90] sm:$0xf]
  %v64 = vld [vmem:[%s1 + $0x94] sm:$0xf]
  %v65 = vld [vmem:[%s1 + $0x98] sm:$0xf]
  %v66 = vld [vmem:[%s1 + $0x9c] sm:$0xf]
  %v67 = vld [vmem:[%s1 + $0xa0] sm:$0xf]
  %v68 = vld [vmem:[%s1 + $0xa4] sm:$0xf]
  %v69 = vld [vmem:[%s1 + $0xa8] sm:$0xf]
  %v70 = vld [vmem:[%s1 + $0xac] sm:$0xf]
  %v71 = vld [vmem:[%s1 + $0xb0] sm:$0xf]
  %v72 = vld [vmem:[%s1 + $0xb4] sm:$0xf]
  %v73 = vld [vmem:[%s1 + $0xb8] sm:$0xf]
  %v74 = vld [vmem:[%s1 + $0xbc] sm:$0xf]
  %v75 = vld [vmem:[%s1 + $0xc0] sm:$0xf]
  %v76 = vld [vmem:[%s1 + $0xc4] sm:$0xf]
  %v77 = vld [vmem:[%s1 + $0xc8] sm:$0xf]
  %v78 = vld [vmem:[%s1 + $0xcc] sm:$0xf]
  %v79 = vld [vmem:[%s1 + $0xd0] sm:$0xf]
  %v80 = vld [vmem:[%s1 + $0xd4] sm:$0xf]
  %v81 = vld [vmem:[%s1 + $0xd8] sm:$0xf]
  %v82 = vld [vmem:[%s1 + $0xdc] sm:$0xf]
  %v83 = vld [vmem:[%s1 + $0xe0] sm:$0xf]
  %v84 = vld [vmem:[%s1 + $0xe4] sm:$0xf]
  %v85 = vld [vmem:[%s1 + $0xe8] sm:$0xf]
  %v86 = vld [vmem:[%s1 + $0xec] sm:$0xf]
  %v87 = vld [vmem:[%s1 + $0xf0] sm:$0xf]
  %v88 = vld [vmem:[%s1 + $0xf4] sm:$0xf]
  %v89 = vld [vmem:[%s1 + $0xf8] sm:$0xf]
  %v90 = vld [vmem:[%s1 + $0xfc] sm:$0xf]
  %v91 = vld [vmem:[%s1 + $0x100] sm:$0xf]
  %v92 = vld [vmem:[%s1 + $0x104] sm:$0xf]
  %v93 = vld [vmem:[%s1 + $0x108] sm:$0xf]
  %v94 = vld [vmem:[%s1 + $0x10c] sm:$0xf]
  %v95 = vld [vmem:[%s1 + $0x110] sm:$0xf]
  %v96 = vld [vmem:[%s1 + $0x114] sm:$0xf]
  %v97 = vld [vmem:[%s1 + $0x118] sm:$0xf]
  %v98 = vld [vmem:[%s1 + $0x11c] sm:$0xf]
  %v99 = vld [vmem:[%s2] sm:$0xff]
  %v100 = vld [vmem:[%s2 + $0x8] sm:$0xff]
  %v101 = vld [vmem:[%s2 + $0x10] sm:$0xff]
  %v102 = vld [vmem:[%s2 + $0x18] sm:$0xff]
  %104 = vset.pattern.permute.xlu0 0
  %105 = vperm.xlu0 %104, %v99
  %v106 = vpop.permute.xlu0 %105
  %109 = vset.pattern.permute.xlu0 0
  %110 = vperm.xlu0 %109, %v100
  %v111 = vpop.permute.xlu0 %110
  %114 = vset.pattern.permute.xlu0 0
  %115 = vperm.xlu0 %114, %v101
  %v116 = vpop.permute.xlu0 %115
  %119 = vset.pattern.permute.xlu0 0
  %120 = vperm.xlu0 %119, %v102
  %v121 = vpop.permute.xlu0 %120
  %v135 = vunpack.c.l.b16 %v15
  %v136 = vunpack.c.h.b16 %v15
  %v137 = vunpack.c.l.b16 %v16
  %v138 = vunpack.c.h.b16 %v16
  %v139 = vunpack.c.l.b16 %v17
  %v140 = vunpack.c.l.b16 %v18
  %v141 = vunpack.c.h.b16 %v18
  %v142 = vunpack.c.l.b16 %v19
  %v143 = vunpack.c.h.b16 %v19
  %v144 = vunpack.c.l.b16 %v20
  %v145 = vunpack.c.l.b16 %v21
  %v146 = vunpack.c.h.b16 %v21
  %v147 = vunpack.c.l.b16 %v22
  %v148 = vunpack.c.h.b16 %v22
  %v149 = vunpack.c.l.b16 %v23
  %v150 = vunpack.c.l.b16 %v24
  %v151 = vunpack.c.h.b16 %v24
  %v152 = vunpack.c.l.b16 %v25
  %v153 = vunpack.c.h.b16 %v25
  %v154 = vunpack.c.l.b16 %v26
  %v155 = vpack.c.b16 %v140, %v135
  %v156 = vpack.c.b16 %v141, %v136
  %v157 = vpack.c.b16 %v142, %v137
  %v158 = vpack.c.b16 %v143, %v138
  %v159 = vpack.c.b16 %v144, %v139
  %v160 = vpack.c.b16 %v150, %v145
  %v161 = vpack.c.b16 %v151, %v146
  %v162 = vpack.c.b16 %v152, %v147
  %v163 = vpack.c.b16 %v153, %v148
  %v164 = vpack.c.b16 %v154, %v149
  %v245 = vunpack.c.l.b16 %v27
  %v246 = vunpack.c.l.b16 %v28
  %v247 = vunpack.c.l.b16 %v29
  %v248 = vunpack.c.l.b16 %v30
  %v249 = vunpack.c.l.b16 %v31
  %v250 = vunpack.c.l.b16 %v32
  %v251 = vunpack.c.l.b16 %v33
  %v252 = vunpack.c.l.b16 %v34
  %v253 = vunpack.c.l.b16 %v35
  %v254 = vunpack.c.l.b16 %v36
  %v255 = vunpack.c.l.b16 %v37
  %v256 = vunpack.c.l.b16 %v38
  %v257 = vunpack.c.l.b16 %v39
  %v258 = vunpack.c.l.b16 %v40
  %v259 = vunpack.c.l.b16 %v41
  %v260 = vunpack.c.l.b16 %v42
  %v261 = vunpack.c.l.b16 %v43
  %v262 = vunpack.c.l.b16 %v44
  %v263 = vunpack.c.l.b16 %v45
  %v264 = vunpack.c.l.b16 %v46
  %v265 = vunpack.c.l.b16 %v47
  %v266 = vunpack.c.l.b16 %v48
  %v267 = vunpack.c.l.b16 %v49
  %v268 = vunpack.c.l.b16 %v50
  %v269 = vunpack.c.l.b16 %v51
  %v270 = vunpack.c.l.b16 %v52
  %v271 = vunpack.c.l.b16 %v53
  %v272 = vunpack.c.l.b16 %v54
  %v273 = vunpack.c.l.b16 %v55
  %v274 = vunpack.c.l.b16 %v56
  %v275 = vunpack.c.l.b16 %v57
  %v276 = vunpack.c.l.b16 %v58
  %v277 = vunpack.c.l.b16 %v59
  %v278 = vunpack.c.l.b16 %v60
  %v279 = vunpack.c.l.b16 %v61
  %v280 = vunpack.c.l.b16 %v62
  %v281 = vunpack.c.l.b16 %v63
  %v282 = vunpack.c.l.b16 %v64
  %v283 = vunpack.c.l.b16 %v65
  %v284 = vunpack.c.l.b16 %v66
  %v285 = vunpack.c.l.b16 %v67
  %v286 = vunpack.c.l.b16 %v68
  %v287 = vunpack.c.l.b16 %v69
  %v288 = vunpack.c.l.b16 %v70
  %v289 = vunpack.c.l.b16 %v71
  %v290 = vunpack.c.l.b16 %v72
  %v291 = vunpack.c.l.b16 %v73
  %v292 = vunpack.c.l.b16 %v74
  %v293 = vunpack.c.l.b16 %v75
  %v294 = vunpack.c.l.b16 %v76
  %v295 = vunpack.c.l.b16 %v77
  %v296 = vunpack.c.l.b16 %v78
  %v297 = vunpack.c.l.b16 %v79
  %v298 = vunpack.c.l.b16 %v80
  %v299 = vunpack.c.l.b16 %v81
  %v300 = vunpack.c.l.b16 %v82
  %v301 = vunpack.c.l.b16 %v83
  %v302 = vunpack.c.l.b16 %v84
  %v303 = vunpack.c.l.b16 %v85
  %v304 = vunpack.c.l.b16 %v86
  %v305 = vunpack.c.l.b16 %v87
  %v306 = vunpack.c.l.b16 %v88
  %v307 = vunpack.c.l.b16 %v89
  %v308 = vunpack.c.l.b16 %v90
  %v309 = vunpack.c.l.b16 %v91
  %v310 = vunpack.c.l.b16 %v92
  %v311 = vunpack.c.l.b16 %v93
  %v312 = vunpack.c.l.b16 %v94
  %v313 = vunpack.c.l.b16 %v95
  %v314 = vunpack.c.l.b16 %v96
  %v315 = vunpack.c.l.b16 %v97
  %v316 = vunpack.c.l.b16 %v98
  %v317 = vpack.c.b16 %v246, %v245
  %v318 = vpack.c.b16 %v248, %v247
  %v319 = vpack.c.b16 %v250, %v249
  %v320 = vpack.c.b16 %v252, %v251
  %v321 = vpack.c.b16 %v254, %v253
  %v322 = vpack.c.b16 %v256, %v255
  %v323 = vpack.c.b16 %v258, %v257
  %v324 = vpack.c.b16 %v260, %v259
  %v325 = vpack.c.b16 %v262, %v261
  %v326 = vpack.c.b16 %v264, %v263
  %v327 = vpack.c.b16 %v266, %v265
  %v328 = vpack.c.b16 %v268, %v267
  %v329 = vpack.c.b16 %v270, %v269
  %v330 = vpack.c.b16 %v272, %v271
  %v331 = vpack.c.b16 %v274, %v273
  %v332 = vpack.c.b16 %v276, %v275
  %v333 = vpack.c.b16 %v278, %v277
  %v334 = vpack.c.b16 %v280, %v279
  %v335 = vpack.c.b16 %v282, %v281
  %v336 = vpack.c.b16 %v284, %v283
  %v337 = vpack.c.b16 %v286, %v285
  %v338 = vpack.c.b16 %v288, %v287
  %v339 = vpack.c.b16 %v290, %v289
  %v340 = vpack.c.b16 %v292, %v291
  %v341 = vpack.c.b16 %v294, %v293
  %v342 = vpack.c.b16 %v296, %v295
  %v343 = vpack.c.b16 %v298, %v297
  %v344 = vpack.c.b16 %v300, %v299
  %v345 = vpack.c.b16 %v302, %v301
  %v346 = vpack.c.b16 %v304, %v303
  %v347 = vpack.c.b16 %v306, %v305
  %v348 = vpack.c.b16 %v308, %v307
  %v349 = vpack.c.b16 %v310, %v309
  %v350 = vpack.c.b16 %v312, %v311
  %v351 = vpack.c.b16 %v314, %v313
  %v352 = vpack.c.b16 %v316, %v315
  %vm389 = vcmask 523264
  %v391 = vsel %vm389, %v159, 0
  %v394 = vsel %vm389, %v164, 0
  %396 = vmatpush.bf16.msra.mxu0 %v324
  %397 = vmatpush.bf16.msra.mxu0 %v323
  %398 = vmatpush.bf16.msra.mxu0 %v322
  %399 = vmatpush.bf16.msra.mxu0 %v321
  %400 = vmatpush.bf16.msra.mxu0 %v320
  %401 = vmatpush.bf16.msra.mxu0 %v319
  %402 = vmatpush.bf16.msra.mxu0 %v318
  %403 = vmatpush.bf16.msra.mxu0 %v317
  %404 = vmatmul.bf16.gmra.mxu0 %v155
  %v405 = vpop.f32.mrf.mxu0
  %v406 = vadd.f32 %v106, %v405
  %v407 = vpop.f32.mrf.mxu0
  %v408 = vadd.f32 %v111, %v407
  %409 = vmatmul.bf16.gmra.mxu0 %v160
  %v410 = vpop.f32.mrf.mxu0
  %v411 = vadd.f32 %v116, %v410
  %v412 = vpop.f32.mrf.mxu0
  %v413 = vadd.f32 %v121, %v412
  %414 = vdwg.mxu0
  %415 = vmatpush.bf16.msra.mxu0 %v332
  %416 = vmatpush.bf16.msra.mxu0 %v331
  %417 = vmatpush.bf16.msra.mxu0 %v330
  %418 = vmatpush.bf16.msra.mxu0 %v329
  %419 = vmatpush.bf16.msra.mxu0 %v328
  %420 = vmatpush.bf16.msra.mxu0 %v327
  %421 = vmatpush.bf16.msra.mxu0 %v326
  %422 = vmatpush.bf16.msra.mxu0 %v325
  %423 = vmatmul.bf16.gmra.mxu0 %v156
  %v424 = vpop.f32.mrf.mxu0
  %v425 = vadd.f32 %v406, %v424
  %v426 = vpop.f32.mrf.mxu0
  %v427 = vadd.f32 %v408, %v426
  %428 = vmatmul.bf16.gmra.mxu0 %v161
  %v429 = vpop.f32.mrf.mxu0
  %v430 = vadd.f32 %v411, %v429
  %v431 = vpop.f32.mrf.mxu0
  %v432 = vadd.f32 %v413, %v431
  %433 = vdwg.mxu0
  %434 = vmatpush.bf16.msra.mxu0 %v340
  %435 = vmatpush.bf16.msra.mxu0 %v339
  %436 = vmatpush.bf16.msra.mxu0 %v338
  %437 = vmatpush.bf16.msra.mxu0 %v337
  %438 = vmatpush.bf16.msra.mxu0 %v336
  %439 = vmatpush.bf16.msra.mxu0 %v335
  %440 = vmatpush.bf16.msra.mxu0 %v334
  %441 = vmatpush.bf16.msra.mxu0 %v333
  %442 = vmatmul.bf16.gmra.mxu0 %v157
  %v443 = vpop.f32.mrf.mxu0
  %v444 = vadd.f32 %v425, %v443
  %v445 = vpop.f32.mrf.mxu0
  %v446 = vadd.f32 %v427, %v445
  %447 = vmatmul.bf16.gmra.mxu0 %v162
  %v448 = vpop.f32.mrf.mxu0
  %v449 = vadd.f32 %v430, %v448
  %v450 = vpop.f32.mrf.mxu0
  %v451 = vadd.f32 %v432, %v450
  %452 = vdwg.mxu0
  %453 = vmatpush.bf16.msra.mxu0 %v348
  %454 = vmatpush.bf16.msra.mxu0 %v347
  %455 = vmatpush.bf16.msra.mxu0 %v346
  %456 = vmatpush.bf16.msra.mxu0 %v345
  %457 = vmatpush.bf16.msra.mxu0 %v344
  %458 = vmatpush.bf16.msra.mxu0 %v343
  %459 = vmatpush.bf16.msra.mxu0 %v342
  %460 = vmatpush.bf16.msra.mxu0 %v341
  %461 = vmatmul.bf16.gmra.mxu0 %v158
  %v462 = vpop.f32.mrf.mxu0
  %v463 = vadd.f32 %v444, %v462
  %v464 = vpop.f32.mrf.mxu0
  %v465 = vadd.f32 %v446, %v464
  %466 = vmatmul.bf16.gmra.mxu0 %v163
  %v467 = vpop.f32.mrf.mxu0
  %v468 = vadd.f32 %v449, %v467
  %v469 = vpop.f32.mrf.mxu0
  %v470 = vadd.f32 %v451, %v469
  %471 = vdwg.mxu0
  %472 = vmatpush.bf16.msra.mxu0 0
  %473 = vmatpush.bf16.msra.mxu0 0
  %474 = vmatpush.bf16.msra.mxu0 0
  %475 = vmatpush.bf16.msra.mxu0 0
  %476 = vmatpush.bf16.msra.mxu0 %v352
  %477 = vmatpush.bf16.msra.mxu0 %v351
  %478 = vmatpush.bf16.msra.mxu0 %v350
  %479 = vmatpush.bf16.msra.mxu0 %v349
  %480 = vmatmul.bf16.gmra.mxu0 %v391
  %v481 = vpop.f32.mrf.mxu0
  %v482 = vadd.f32 %v463, %v481
  %v483 = vpop.f32.mrf.mxu0
  %v484 = vadd.f32 %v465, %v483
  %485 = vmatmul.bf16.gmra.mxu0 %v394
  %v486 = vpop.f32.mrf.mxu0
  %v487 = vadd.f32 %v468, %v486
  %v488 = vpop.f32.mrf.mxu0
  %v489 = vadd.f32 %v470, %v488
  %490 = vdwg.mxu0
  %v491 = vmax.f32 %v482, 0.0
  %v492 = vmax.f32 %v484, 0.0
  %v493 = vmax.f32 %v487, 0.0
  %v494 = vmax.f32 %v489, 0.0
  %s495 = scalar_lea.vmem %s2, 32
  %v496 = vld [vmem:[%s495] sm:$0xff]
  %v497 = vld [vmem:[%s495 + $0x8] sm:$0xff]
  %v498 = vld [vmem:[%s495 + $0x10] sm:$0xff]
  %v499 = vld [vmem:[%s495 + $0x18] sm:$0xff]
  %501 = vset.pattern.permute.xlu0 0
  %502 = vperm.xlu0 %501, %v496
  %v503 = vpop.permute.xlu0 %502
  %506 = vset.pattern.permute.xlu0 0
  %507 = vperm.xlu0 %506, %v497
  %v508 = vpop.permute.xlu0 %507
  %511 = vset.pattern.permute.xlu0 0
  %512 = vperm.xlu0 %511, %v498
  %v513 = vpop.permute.xlu0 %512
  %516 = vset.pattern.permute.xlu0 0
  %517 = vperm.xlu0 %516, %v499
  %v518 = vpop.permute.xlu0 %517
  %v520 = vmul.f32 %v491, %v503
  %v521 = vmul.f32 %v492, %v508
  %v522 = vmul.f32 %v493, %v513
  %v523 = vmul.f32 %v494, %v518
  %s524 = scalar_lea.vmem %s2, 64
  %v525 = vld [vmem:[%s524] sm:$0xff]
  %v526 = vld [vmem:[%s524 + $0x8] sm:$0xff]
  %v527 = vld [vmem:[%s524 + $0x10] sm:$0xff]
  %v528 = vld [vmem:[%s524 + $0x18] sm:$0xff]
  %530 = vset.pattern.permute.xlu0 0
  %531 = vperm.xlu0 %530, %v525
  %v532 = vpop.permute.xlu0 %531
  %535 = vset.pattern.permute.xlu0 0
  %536 = vperm.xlu0 %535, %v526
  %v537 = vpop.permute.xlu0 %536
  %540 = vset.pattern.permute.xlu0 0
  %541 = vperm.xlu0 %540, %v527
  %v542 = vpop.permute.xlu0 %541
  %545 = vset.pattern.permute.xlu0 0
  %546 = vperm.xlu0 %545, %v528
  %v547 = vpop.permute.xlu0 %546
  %v549 = vadd.f32 %v520, %v532
  %v550 = vadd.f32 %v521, %v537
  %v551 = vadd.f32 %v522, %v542
  %v552 = vadd.f32 %v523, %v547
  %v553 = vpack.c.bf16 %v549, %v549
  %v554 = vpack.c.bf16 %v550, %v550
  %v555 = vpack.c.bf16 %v551, %v551
  %v556 = vpack.c.bf16 %v552, %v552
  %557 = vst [vmem:[%s3] sm:$0xf] %v553
  %558 = vst [vmem:[%s3 + $0x4] sm:$0xf] %v554
  %559 = vst [vmem:[%s3 + $0x8] sm:$0xf] %v555
  %560 = vst [vmem:[%s3 + $0xc] sm:$0xf] %v556
  // Predicated region
  $region14: #{forward.7} parent=0 // pred_check
    _
  $region15: #{forward.7} parent=0 // pred_check_branch
    %562 = sbr.rel (0) target = $region17
  $region16: #{forward.7} parent=0 // pred_region
    _
  $region17: #{forward.7} parent=0 // pred_fallthru
    _
  // Predicated region
  $region18: #{forward.7} parent=0 // pred_check
    _
  $region19: #{forward.7} parent=0 // pred_check_branch
    %564 = sbr.rel (0) target = $region21
  $region20: #{forward.7} parent=0 // pred_region
    _
  $region21: #{forward.7} parent=0 // pred_fallthru
    _

// kernel: forward.8
$region0: #{forward.8}
  #allocation0 [shape = 'u32[]', space=smem, size = 0x4, offset = 0x4, fixed_abs, tag = 'smem constant byte address 0x4 - core index']
  #allocation1 [shape = 'u32[72,128]{1,0:T(1,128)}', space=vmem, size = 0x9000, scoped, tag = 'internal scratch']
  %s0 = inlined_call_operand.vmem [shape: bf16[16,288], index: 0, kind: input, shape index: {}]
  %s1 = inlined_call_operand.vmem [shape: bf16[288,128], index: 1, kind: input, shape index: {}]
  %s2 = inlined_call_operand.vmem [shape: f32[3,16,1], index: 2, kind: input, shape index: {}]
  %s3 = inlined_call_operand.vmem [shape: bf16[16,128], index: 3, kind: output, shape index: {}]
  %s4 = sld [smem:[#allocation0]]
  $region22: #{forward.8} parent=0
    _
  %s6 = ssub.s32 1, %s4
  %s7 = scalar_select 0, %s6, %s4
  // Predicated region
  $region2: #{forward.8} parent=0 // pred_check
    _
  $region3: #{forward.8} parent=0 // pred_check_branch
    %9 = sbr.rel (0) target = $region5
  $region4: #{forward.8} parent=0 // pred_region
    _
  $region5: #{forward.8} parent=0 // pred_fallthru
    _
  // Predicated region
  $region6: #{forward.8} parent=0 // pred_check
    _
  $region7: #{forward.8} parent=0 // pred_check_branch
    %11 = sbr.rel (0) target = $region9
  $region8: #{forward.8} parent=0 // pred_region
    _
  $region9: #{forward.8} parent=0 // pred_fallthru
    _
  // Predicated region
  $region10: #{forward.8} parent=0 // pred_check
    _
  $region11: #{forward.8} parent=0 // pred_check_branch
    %13 = sbr.rel (0) target = $region13
  $region12: #{forward.8} parent=0 // pred_region
    _
  $region13: #{forward.8} parent=0 // pred_fallthru
    _
  %v15 = vld [vmem:[%s0] sm:$0xff]
  %v16 = vld [vmem:[%s0 + $0x8] sm:$0xf]
  %v17 = vld [vmem:[%s0 + $0xc] sm:$0xff]
  %v18 = vld [vmem:[%s0 + $0x14] sm:$0xf]
  %v19 = vld [vmem:[%s1] sm:$0xf]
  %v20 = vld [vmem:[%s1 + $0x4] sm:$0xf]
  %v21 = vld [vmem:[%s1 + $0x8] sm:$0xf]
  %v22 = vld [vmem:[%s1 + $0xc] sm:$0xf]
  %v23 = vld [vmem:[%s1 + $0x10] sm:$0xf]
  %v24 = vld [vmem:[%s1 + $0x14] sm:$0xf]
  %v25 = vld [vmem:[%s1 + $0x18] sm:$0xf]
  %v26 = vld [vmem:[%s1 + $0x1c] sm:$0xf]
  %v27 = vld [vmem:[%s1 + $0x20] sm:$0xf]
  %v28 = vld [vmem:[%s1 + $0x24] sm:$0xf]
  %v29 = vld [vmem:[%s1 + $0x28] sm:$0xf]
  %v30 = vld [vmem:[%s1 + $0x2c] sm:$0xf]
  %v31 = vld [vmem:[%s1 + $0x30] sm:$0xf]
  %v32 = vld [vmem:[%s1 + $0x34] sm:$0xf]
  %v33 = vld [vmem:[%s1 + $0x38] sm:$0xf]
  %v34 = vld [vmem:[%s1 + $0x3c] sm:$0xf]
  %v35 = vld [vmem:[%s1 + $0x40] sm:$0xf]
  %v36 = vld [vmem:[%s1 + $0x44] sm:$0xf]
  %v37 = vld [vmem:[%s1 + $0x48] sm:$0xf]
  %v38 = vld [vmem:[%s1 + $0x4c] sm:$0xf]
  %v39 = vld [vmem:[%s1 + $0x50] sm:$0xf]
  %v40 = vld [vmem:[%s1 + $0x54] sm:$0xf]
  %v41 = vld [vmem:[%s1 + $0x58] sm:$0xf]
  %v42 = vld [vmem:[%s1 + $0x5c] sm:$0xf]
  %v43 = vld [vmem:[%s1 + $0x60] sm:$0xf]
  %v44 = vld [vmem:[%s1 + $0x64] sm:$0xf]
  %v45 = vld [vmem:[%s1 + $0x68] sm:$0xf]
  %v46 = vld [vmem:[%s1 + $0x6c] sm:$0xf]
  %v47 = vld [vmem:[%s1 + $0x70] sm:$0xf]
  %v48 = vld [vmem:[%s1 + $0x74] sm:$0xf]
  %v49 = vld [vmem:[%s1 + $0x78] sm:$0xf]
  %v50 = vld [vmem:[%s1 + $0x7c] sm:$0xf]
  %v51 = vld [vmem:[%s1 + $0x80] sm:$0xf]
  %v52 = vld [vmem:[%s1 + $0x84] sm:$0xf]
  %v53 = vld [vmem:[%s1 + $0x88] sm:$0xf]
  %v54 = vld [vmem:[%s1 + $0x8c] sm:$0xf]
  %v55 = vld [vmem:[%s2] sm:$0xff]
  %v56 = vld [vmem:[%s2 + $0x8] sm:$0xff]
  %58 = vset.pattern.permute.xlu0 0
  %59 = vperm.xlu0 %58, %v55
  %v60 = vpop.permute.xlu0 %59
  %63 = vset.pattern.permute.xlu0 0
  %64 = vperm.xlu0 %63, %v56
  %v65 = vpop.permute.xlu0 %64
  %v71 = vunpack.c.l.b16 %v15
  %v72 = vunpack.c.h.b16 %v15
  %v73 = vunpack.c.l.b16 %v16
  %v74 = vunpack.c.l.b16 %v17
  %v75 = vunpack.c.h.b16 %v17
  %v76 = vunpack.c.l.b16 %v18
  %v77 = vpack.c.b16 %v74, %v71
  %v78 = vpack.c.b16 %v75, %v72
  %v79 = vpack.c.b16 %v76, %v73
  %v118 = vunpack.c.l.b16 %v19
  %v119 = vunpack.c.l.b16 %v20
  %v120 = vunpack.c.l.b16 %v21
  %v121 = vunpack.c.l.b16 %v22
  %v122 = vunpack.c.l.b16 %v23
  %v123 = vunpack.c.l.b16 %v24
  %v124 = vunpack.c.l.b16 %v25
  %v125 = vunpack.c.l.b16 %v26
  %v126 = vunpack.c.l.b16 %v27
  %v127 = vunpack.c.l.b16 %v28
  %v128 = vunpack.c.l.b16 %v29
  %v129 = vunpack.c.l.b16 %v30
  %v130 = vunpack.c.l.b16 %v31
  %v131 = vunpack.c.l.b16 %v32
  %v132 = vunpack.c.l.b16 %v33
  %v133 = vunpack.c.l.b16 %v34
  %v134 = vunpack.c.l.b16 %v35
  %v135 = vunpack.c.l.b16 %v36
  %v136 = vunpack.c.l.b16 %v37
  %v137 = vunpack.c.l.b16 %v38
  %v138 = vunpack.c.l.b16 %v39
  %v139 = vunpack.c.l.b16 %v40
  %v140 = vunpack.c.l.b16 %v41
  %v141 = vunpack.c.l.b16 %v42
  %v142 = vunpack.c.l.b16 %v43
  %v143 = vunpack.c.l.b16 %v44
  %v144 = vunpack.c.l.b16 %v45
  %v145 = vunpack.c.l.b16 %v46
  %v146 = vunpack.c.l.b16 %v47
  %v147 = vunpack.c.l.b16 %v48
  %v148 = vunpack.c.l.b16 %v49
  %v149 = vunpack.c.l.b16 %v50
  %v150 = vunpack.c.l.b16 %v51
  %v151 = vunpack.c.l.b16 %v52
  %v152 = vunpack.c.l.b16 %v53
  %v153 = vunpack.c.l.b16 %v54
  %v154 = vpack.c.b16 %v119, %v118
  %v155 = vpack.c.b16 %v121, %v120
  %v156 = vpack.c.b16 %v123, %v122
  %v157 = vpack.c.b16 %v125, %v124
  %v158 = vpack.c.b16 %v127, %v126
  %v159 = vpack.c.b16 %v129, %v128
  %v160 = vpack.c.b16 %v131, %v130
  %v161 = vpack.c.b16 %v133, %v132
  %v162 = vpack.c.b16 %v135, %v134
  %v163 = vpack.c.b16 %v137, %v136
  %v164 = vpack.c.b16 %v139, %v138
  %v165 = vpack.c.b16 %v141, %v140
  %v166 = vpack.c.b16 %v143, %v142
  %v167 = vpack.c.b16 %v145, %v144
  %v168 = vpack.c.b16 %v147, %v146
  %v169 = vpack.c.b16 %v149, %v148
  %v170 = vpack.c.b16 %v151, %v150
  %v171 = vpack.c.b16 %v153, %v152
  %vm190 = vcmask 261120
  %v192 = vsel %vm190, %v79, 0
  %194 = vmatpush.bf16.msra.mxu0 %v161
  %195 = vmatpush.bf16.msra.mxu0 %v160
  %196 = vmatpush.bf16.msra.mxu0 %v159
  %197 = vmatpush.bf16.msra.mxu0 %v158
  %198 = vmatpush.bf16.msra.mxu0 %v157
  %199 = vmatpush.bf16.msra.mxu0 %v156
  %200 = vmatpush.bf16.msra.mxu0 %v155
  %201 = vmatpush.bf16.msra.mxu0 %v154
  %202 = vmatmul.bf16.gmra.mxu0 %v77
  %v203 = vpop.f32.mrf.mxu0
  %v204 = vadd.f32 %v60, %v203
  %v205 = vpop.f32.mrf.mxu0
  %v206 = vadd.f32 %v65, %v205
  %207 = vdwg.mxu0
  %208 = vmatpush.bf16.msra.mxu0 %v169
  %209 = vmatpush.bf16.msra.mxu0 %v168
  %210 = vmatpush.bf16.msra.mxu0 %v167
  %211 = vmatpush.bf16.msra.mxu0 %v166
  %212 = vmatpush.bf16.msra.mxu0 %v165
  %213 = vmatpush.bf16.msra.mxu0 %v164
  %214 = vmatpush.bf16.msra.mxu0 %v163
  %215 = vmatpush.bf16.msra.mxu0 %v162
  %216 = vmatmul.bf16.gmra.mxu0 %v78
  %v217 = vpop.f32.mrf.mxu0
  %v218 = vadd.f32 %v204, %v217
  %v219 = vpop.f32.mrf.mxu0
  %v220 = vadd.f32 %v206, %v219
  %221 = vdwg.mxu0
  %222 = vmatpush.bf16.msra.mxu0 0
  %223 = vmatpush.bf16.msra.mxu0 0
  %224 = vmatpush.bf16.msra.mxu0 0
  %225 = vmatpush.bf16.msra.mxu0 0
  %226 = vmatpush.bf16.msra.mxu0 0
  %227 = vmatpush.bf16.msra.mxu0 0
  %228 = vmatpush.bf16.msra.mxu0 %v171
  %229 = vmatpush.bf16.msra.mxu0 %v170
  %230 = vmatmul.bf16.gmra.mxu0 %v192
  %v231 = vpop.f32.mrf.mxu0
  %v232 = vadd.f32 %v218, %v231
  %v233 = vpop.f32.mrf.mxu0
  %v234 = vadd.f32 %v220, %v233
  %235 = vdwg.mxu0
  %v236 = vmax.f32 %v232, 0.0
  %v237 = vmax.f32 %v234, 0.0
  %s238 = scalar_lea.vmem %s2, 16
  %v239 = vld [vmem:[%s238] sm:$0xff]
  %v240 = vld [vmem:[%s238 + $0x8] sm:$0xff]
  %242 = vset.pattern.permute.xlu0 0
  %243 = vperm.xlu0 %242, %v239
  %v244 = vpop.permute.xlu0 %243
  %247 = vset.pattern.permute.xlu0 0
  %248 = vperm.xlu0 %247, %v240
  %v249 = vpop.permute.xlu0 %248
  %v251 = vmul.f32 %v236, %v244
  %v252 = vmul.f32 %v237, %v249
  %s253 = scalar_lea.vmem %s2, 32
  %v254 = vld [vmem:[%s253] sm:$0xff]
  %v255 = vld [vmem:[%s253 + $0x8] sm:$0xff]
  %257 = vset.pattern.permute.xlu0 0
  %258 = vperm.xlu0 %257, %v254
  %v259 = vpop.permute.xlu0 %258
  %262 = vset.pattern.permute.xlu0 0
  %263 = vperm.xlu0 %262, %v255
  %v264 = vpop.permute.xlu0 %263
  %v266 = vadd.f32 %v251, %v259
  %v267 = vadd.f32 %v252, %v264
  %v268 = vpack.c.bf16 %v266, %v266
  %v269 = vpack.c.bf16 %v267, %v267
  %270 = vst [vmem:[%s3] sm:$0xf] %v268
  %271 = vst [vmem:[%s3 + $0x4] sm:$0xf] %v269
  // Predicated region
  $region14: #{forward.8} parent=0 // pred_check
    _
  $region15: #{forward.8} parent=0 // pred_check_branch
    %273 = sbr.rel (0) target = $region17
  $region16: #{forward.8} parent=0 // pred_region
    _
  $region17: #{forward.8} parent=0 // pred_fallthru
    _
  // Predicated region
  $region18: #{forward.8} parent=0 // pred_check
    _
  $region19: #{forward.8} parent=0 // pred_check_branch
    %275 = sbr.rel (0) target = $region21
  $region20: #{forward.8} parent=0 // pred_region
    _
  $region21: #{forward.8} parent=0 // pred_fallthru
    _

// kernel: forward.9
$region0: #{forward.9}
  #allocation0 [shape = 'u32[]', space=smem, size = 0x4, offset = 0x4, fixed_abs, tag = 'smem constant byte address 0x4 - core index']
  #allocation1 [shape = 'u32[72,128]{1,0:T(1,128)}', space=vmem, size = 0x9000, scoped, tag = 'internal scratch']
  %s0 = inlined_call_operand.vmem [shape: bf16[32,64], index: 0, kind: input, shape index: {}]
  %s1 = inlined_call_operand.vmem [shape: bf16[64,128], index: 1, kind: input, shape index: {}]
  %s2 = inlined_call_operand.vmem [shape: f32[3,32,1], index: 2, kind: input, shape index: {}]
  %s3 = inlined_call_operand.vmem [shape: bf16[32,128], index: 3, kind: output, shape index: {}]
  %s4 = sld [smem:[#allocation0]]
  $region22: #{forward.9} parent=0
    _
  %s6 = ssub.s32 1, %s4
  %s7 = scalar_select 0, %s6, %s4
  // Predicated region
  $region2: #{forward.9} parent=0 // pred_check
    _
  $region3: #{forward.9} parent=0 // pred_check_branch
    %9 = sbr.rel (0) target = $region5
  $region4: #{forward.9} parent=0 // pred_region
    _
  $region5: #{forward.9} parent=0 // pred_fallthru
    _
  // Predicated region
  $region6: #{forward.9} parent=0 // pred_check
    _
  $region7: #{forward.9} parent=0 // pred_check_branch
    %11 = sbr.rel (0) target = $region9
  $region8: #{forward.9} parent=0 // pred_region
    _
  $region9: #{forward.9} parent=0 // pred_fallthru
    _
  // Predicated region
  $region10: #{forward.9} parent=0 // pred_check
    _
  $region11: #{forward.9} parent=0 // pred_check_branch
    %13 = sbr.rel (0) target = $region13
  $region12: #{forward.9} parent=0 // pred_region
    _
  $region13: #{forward.9} parent=0 // pred_fallthru
    _
  %v15 = vld [vmem:[%s0] sm:$0xf]
  %v16 = vld [vmem:[%s0 + $0x4] sm:$0xf]
  %v17 = vld [vmem:[%s0 + $0x8] sm:$0xf]
  %v18 = vld [vmem:[%s0 + $0xc] sm:$0xf]
  %v19 = vld [vmem:[%s1] sm:$0xf]
  %v20 = vld [vmem:[%s1 + $0x4] sm:$0xf]
  %v21 = vld [vmem:[%s1 + $0x8] sm:$0xf]
  %v22 = vld [vmem:[%s1 + $0xc] sm:$0xf]
  %v23 = vld [vmem:[%s1 + $0x10] sm:$0xf]
  %v24 = vld [vmem:[%s1 + $0x14] sm:$0xf]
  %v25 = vld [vmem:[%s1 + $0x18] sm:$0xf]
  %v26 = vld [vmem:[%s1 + $0x1c] sm:$0xf]
  %v27 = vld [vmem:[%s2] sm:$0xff]
  %v28 = vld [vmem:[%s2 + $0x8] sm:$0xff]
  %v29 = vld [vmem:[%s2 + $0x10] sm:$0xff]
  %v30 = vld [vmem:[%s2 + $0x18] sm:$0xff]
  %32 = vset.pattern.permute.xlu0 0
  %33 = vperm.xlu0 %32, %v27
  %v34 = vpop.permute.xlu0 %33
  %37 = vset.pattern.permute.xlu0 0
  %38 = vperm.xlu0 %37, %v28
  %v39 = vpop.permute.xlu0 %38
  %42 = vset.pattern.permute.xlu0 0
  %43 = vperm.xlu0 %42, %v29
  %v44 = vpop.permute.xlu0 %43
  %47 = vset.pattern.permute.xlu0 0
  %48 = vperm.xlu0 %47, %v30
  %v49 = vpop.permute.xlu0 %48
  %v55 = vunpack.c.l.b16 %v15
  %v56 = vunpack.c.l.b16 %v16
  %v57 = vunpack.c.l.b16 %v17
  %v58 = vunpack.c.l.b16 %v18
  %v59 = vpack.c.b16 %v56, %v55
  %v60 = vpack.c.b16 %v58, %v57
  %v69 = vunpack.c.l.b16 %v19
  %v70 = vunpack.c.l.b16 %v20
  %v71 = vunpack.c.l.b16 %v21
  %v72 = vunpack.c.l.b16 %v22
  %v73 = vunpack.c.l.b16 %v23
  %v74 = vunpack.c.l.b16 %v24
  %v75 = vunpack.c.l.b16 %v25
  %v76 = vunpack.c.l.b16 %v26
  %v77 = vpack.c.b16 %v70, %v69
  %v78 = vpack.c.b16 %v72, %v71
  %v79 = vpack.c.b16 %v74, %v73
  %v80 = vpack.c.b16 %v76, %v75
  %vm85 = vcmask 523264
  %v87 = vsel %vm85, %v59, 0
  %v90 = vsel %vm85, %v60, 0
  %92 = vmatpush.bf16.msra.mxu0 0
  %93 = vmatpush.bf16.msra.mxu0 0
  %94 = vmatpush.bf16.msra.mxu0 0
  %95 = vmatpush.bf16.msra.mxu0 0
  %96 = vmatpush.bf16.msra.mxu0 %v80
  %97 = vmatpush.bf16.msra.mxu0 %v79
  %98 = vmatpush.bf16.msra.mxu0 %v78
  %99 = vmatpush.bf16.msra.mxu0 %v77
  %100 = vmatmul.bf16.gmra.mxu0 %v87
  %v101 = vpop.f32.mrf.mxu0
  %v102 = vadd.f32 %v34, %v101
  %v103 = vpop.f32.mrf.mxu0
  %v104 = vadd.f32 %v39, %v103
  %105 = vmatmul.bf16.gmra.mxu0 %v90
  %v106 = vpop.f32.mrf.mxu0
  %v107 = vadd.f32 %v44, %v106
  %v108 = vpop.f32.mrf.mxu0
  %v109 = vadd.f32 %v49, %v108
  %110 = vdwg.mxu0
  %v111 = vmax.f32 %v102, 0.0
  %v112 = vmax.f32 %v104, 0.0
  %v113 = vmax.f32 %v107, 0.0
  %v114 = vmax.f32 %v109, 0.0
  %s115 = scalar_lea.vmem %s2, 32
  %v116 = vld [vmem:[%s115] sm:$0xff]
  %v117 = vld [vmem:[%s115 + $0x8] sm:$0xff]
  %v118 = vld [vmem:[%s115 + $0x10] sm:$0xff]
  %v119 = vld [vmem:[%s115 + $0x18] sm:$0xff]
  %121 = vset.pattern.permute.xlu0 0
  %122 = vperm.xlu0 %121, %v116
  %v123 = vpop.permute.xlu0 %122
  %126 = vset.pattern.permute.xlu0 0
  %127 = vperm.xlu0 %126, %v117
  %v128 = vpop.permute.xlu0 %127
  %131 = vset.pattern.permute.xlu0 0
  %132 = vperm.xlu0 %131, %v118
  %v133 = vpop.permute.xlu0 %132
  %136 = vset.pattern.permute.xlu0 0
  %137 = vperm.xlu0 %136, %v119
  %v138 = vpop.permute.xlu0 %137
  %v140 = vmul.f32 %v111, %v123
  %v141 = vmul.f32 %v112, %v128
  %v142 = vmul.f32 %v113, %v133
  %v143 = vmul.f32 %v114, %v138
  %s144 = scalar_lea.vmem %s2, 64
  %v145 = vld [vmem:[%s144] sm:$0xff]
  %v146 = vld [vmem:[%s144 + $0x8] sm:$0xff]
  %v147 = vld [vmem:[%s144 + $0x10] sm:$0xff]
  %v148 = vld [vmem:[%s144 + $0x18] sm:$0xff]
  %150 = vset.pattern.permute.xlu0 0
  %151 = vperm.xlu0 %150, %v145
  %v152 = vpop.permute.xlu0 %151
  %155 = vset.pattern.permute.xlu0 0
  %156 = vperm.xlu0 %155, %v146
  %v157 = vpop.permute.xlu0 %156
  %160 = vset.pattern.permute.xlu0 0
  %161 = vperm.xlu0 %160, %v147
  %v162 = vpop.permute.xlu0 %161
  %165 = vset.pattern.permute.xlu0 0
  %166 = vperm.xlu0 %165, %v148
  %v167 = vpop.permute.xlu0 %166
  %v169 = vadd.f32 %v140, %v152
  %v170 = vadd.f32 %v141, %v157
  %v171 = vadd.f32 %v142, %v162
  %v172 = vadd.f32 %v143, %v167
  %v173 = vpack.c.bf16 %v169, %v169
  %v174 = vpack.c.bf16 %v170, %v170
  %v175 = vpack.c.bf16 %v171, %v171
  %v176 = vpack.c.bf16 %v172, %v172
  %177 = vst [vmem:[%s3] sm:$0xf] %v173
  %178 = vst [vmem:[%s3 + $0x4] sm:$0xf] %v174
  %179 = vst [vmem:[%s3 + $0x8] sm:$0xf] %v175
  %180 = vst [vmem:[%s3 + $0xc] sm:$0xf] %v176
  // Predicated region
  $region14: #{forward.9} parent=0 // pred_check
    _
  $region15: #{forward.9} parent=0 // pred_check_branch
    %182 = sbr.rel (0) target = $region17
  $region16: #{forward.9} parent=0 // pred_region
    _
  $region17: #{forward.9} parent=0 // pred_fallthru
    _
  // Predicated region
  $region18: #{forward.9} parent=0 // pred_check
    _
  $region19: #{forward.9} parent=0 // pred_check_branch
    %184 = sbr.rel (0) target = $region21
  $region20: #{forward.9} parent=0 // pred_region
    _
  $region21: #{forward.9} parent=0 // pred_fallthru
    _

// kernel: forward.10
$region0: #{forward.10}
  #allocation0 [shape = 'u32[]', space=smem, size = 0x4, offset = 0x4, fixed_abs, tag = 'smem constant byte address 0x4 - core index']
  #allocation1 [shape = 'u32[72,128]{1,0:T(1,128)}', space=vmem, size = 0x9000, scoped, tag = 'internal scratch']
  %s0 = inlined_call_operand.vmem [shape: bf16[16,32], index: 0, kind: input, shape index: {}]
  %s1 = inlined_call_operand.vmem [shape: bf16[32,128], index: 1, kind: input, shape index: {}]
  %s2 = inlined_call_operand.vmem [shape: f32[3,16,1], index: 2, kind: input, shape index: {}]
  %s3 = inlined_call_operand.vmem [shape: bf16[16,128], index: 3, kind: output, shape index: {}]
  %s4 = sld [smem:[#allocation0]]
  $region22: #{forward.10} parent=0
    _
  %s6 = ssub.s32 1, %s4
  %s7 = scalar_select 0, %s6, %s4
  // Predicated region
  $region2: #{forward.10} parent=0 // pred_check
    _
  $region3: #{forward.10} parent=0 // pred_check_branch
    %9 = sbr.rel (0) target = $region5
  $region4: #{forward.10} parent=0 // pred_region
    _
  $region5: #{forward.10} parent=0 // pred_fallthru
    _
  // Predicated region
  $region6: #{forward.10} parent=0 // pred_check
    _
  $region7: #{forward.10} parent=0 // pred_check_branch
    %11 = sbr.rel (0) target = $region9
  $region8: #{forward.10} parent=0 // pred_region
    _
  $region9: #{forward.10} parent=0 // pred_fallthru
    _
  // Predicated region
  $region10: #{forward.10} parent=0 // pred_check
    _
  $region11: #{forward.10} parent=0 // pred_check_branch
    %13 = sbr.rel (0) target = $region13
  $region12: #{forward.10} parent=0 // pred_region
    _
  $region13: #{forward.10} parent=0 // pred_fallthru
    _
  %v15 = vld [vmem:[%s0] sm:$0xf]
  %v16 = vld [vmem:[%s0 + $0x4] sm:$0xf]
  %v17 = vld [vmem:[%s1] sm:$0xf]
  %v18 = vld [vmem:[%s1 + $0x4] sm:$0xf]
  %v19 = vld [vmem:[%s1 + $0x8] sm:$0xf]
  %v20 = vld [vmem:[%s1 + $0xc] sm:$0xf]
  %v21 = vld [vmem:[%s2] sm:$0xff]
  %v22 = vld [vmem:[%s2 + $0x8] sm:$0xff]
  %24 = vset.pattern.permute.xlu0 0
  %25 = vperm.xlu0 %24, %v21
  %v26 = vpop.permute.xlu0 %25
  %29 = vset.pattern.permute.xlu0 0
  %30 = vperm.xlu0 %29, %v22
  %v31 = vpop.permute.xlu0 %30
  %v35 = vunpack.c.l.b16 %v15
  %v36 = vunpack.c.l.b16 %v16
  %v37 = vpack.c.b16 %v36, %v35
  %v42 = vunpack.c.l.b16 %v17
  %v43 = vunpack.c.l.b16 %v18
  %v44 = vunpack.c.l.b16 %v19
  %v45 = vunpack.c.l.b16 %v20
  %v46 = vpack.c.b16 %v43, %v42
  %v47 = vpack.c.b16 %v45, %v44
  %vm50 = vcmask 261120
  %v52 = vsel %vm50, %v37, 0
  %54 = vmatpush.bf16.msra.mxu0 0
  %55 = vmatpush.bf16.msra.mxu0 0
  %56 = vmatpush.bf16.msra.mxu0 0
  %57 = vmatpush.bf16.msra.mxu0 0
  %58 = vmatpush.bf16.msra.mxu0 0
  %59 = vmatpush.bf16.msra.mxu0 0
  %60 = vmatpush.bf16.msra.mxu0 %v47
  %61 = vmatpush.bf16.msra.mxu0 %v46
  %62 = vmatmul.bf16.gmra.mxu0 %v52
  %v63 = vpop.f32.mrf.mxu0
  %v64 = vadd.f32 %v26, %v63
  %v65 = vpop.f32.mrf.mxu0
  %v66 = vadd.f32 %v31, %v65
  %67 = vdwg.mxu0
  %v68 = vmax.f32 %v64, 0.0
  %v69 = vmax.f32 %v66, 0.0
  %s70 = scalar_lea.vmem %s2, 16
  %v71 = vld [vmem:[%s70] sm:$0xff]
  %v72 = vld [vmem:[%s70 + $0x8] sm:$0xff]
  %74 = vset.pattern.permute.xlu0 0
  %75 = vperm.xlu0 %74, %v71
  %v76 = vpop.permute.xlu0 %75
  %79 = vset.pattern.permute.xlu0 0
  %80 = vperm.xlu0 %79, %v72
  %v81 = vpop.permute.xlu0 %80
  %v83 = vmul.f32 %v68, %v76
  %v84 = vmul.f32 %v69, %v81
  %s85 = scalar_lea.vmem %s2, 32
  %v86 = vld [vmem:[%s85] sm:$0xff]
  %v87 = vld [vmem:[%s85 + $0x8] sm:$0xff]
  %89 = vset.pattern.permute.xlu0 0
  %90 = vperm.xlu0 %89, %v86
  %v91 = vpop.permute.xlu0 %90
  %94 = vset.pattern.permute.xlu0 0
  %95 = vperm.xlu0 %94, %v87
  %v96 = vpop.permute.xlu0 %95
  %v98 = vadd.f32 %v83, %v91
  %v99 = vadd.f32 %v84, %v96
  %v100 = vpack.c.bf16 %v98, %v98
  %v101 = vpack.c.bf16 %v99, %v99
  %102 = vst [vmem:[%s3] sm:$0xf] %v100
  %103 = vst [vmem:[%s3 + $0x4] sm:$0xf] %v101
  // Predicated region
  $region14: #{forward.10} parent=0 // pred_check
    _
  $region15: #{forward.10} parent=0 // pred_check_branch
    %105 = sbr.rel (0) target = $region17
  $region16: #{forward.10} parent=0 // pred_region
    _
  $region17: #{forward.10} parent=0 // pred_fallthru
    _
  // Predicated region
  $region18: #{forward.10} parent=0 // pred_check
    _
  $region19: #{forward.10} parent=0 // pred_check_branch
    %107 = sbr.rel (0) target = $region21
  $region20: #{forward.10} parent=0 // pred_region
    _
  $region21: #{forward.10} parent=0 // pred_fallthru
    _

// kernel: forward.11
$region0: #{forward.11}
  #allocation0 [shape = 'u32[]', space=smem, size = 0x4, offset = 0x4, fixed_abs, tag = 'smem constant byte address 0x4 - core index']
  #allocation1 [shape = 'u32[72,128]{1,0:T(1,128)}', space=vmem, size = 0x9000, scoped, tag = 'internal scratch']
  %s0 = inlined_call_operand.vmem [shape: bf16[16,16], index: 0, kind: input, shape index: {}]
  %s1 = inlined_call_operand.vmem [shape: bf16[16,384], index: 1, kind: input, shape index: {}]
  %s2 = inlined_call_operand.vmem [shape: f32[3,16,1], index: 2, kind: input, shape index: {}]
  %s3 = inlined_call_operand.vmem [shape: bf16[16,384], index: 3, kind: output, shape index: {}]
  %s4 = sld [smem:[#allocation0]]
  $region22: #{forward.11} parent=0
    _
  %s6 = ssub.s32 1, %s4
  %s7 = scalar_select 0, %s6, %s4
  // Predicated region
  $region2: #{forward.11} parent=0 // pred_check
    _
  $region3: #{forward.11} parent=0 // pred_check_branch
    %9 = sbr.rel (0) target = $region5
  $region4: #{forward.11} parent=0 // pred_region
    _
  $region5: #{forward.11} parent=0 // pred_fallthru
    _
  // Predicated region
  $region6: #{forward.11} parent=0 // pred_check
    _
  $region7: #{forward.11} parent=0 // pred_check_branch
    %11 = sbr.rel (0) target = $region9
  $region8: #{forward.11} parent=0 // pred_region
    _
  $region9: #{forward.11} parent=0 // pred_fallthru
    _
  // Predicated region
  $region10: #{forward.11} parent=0 // pred_check
    _
  $region11: #{forward.11} parent=0 // pred_check_branch
    %13 = sbr.rel (0) target = $region13
  $region12: #{forward.11} parent=0 // pred_region
    _
  $region13: #{forward.11} parent=0 // pred_fallthru
    _
  %v15 = vld [vmem:[%s0] sm:$0xf]
  %v16 = vld [vmem:[%s0 + $0x4] sm:$0xf]
  %v17 = vld [vmem:[%s1] sm:$0xff]
  %v18 = vld [vmem:[%s1 + $0x8] sm:$0xf]
  %v19 = vld [vmem:[%s1 + $0xc] sm:$0xff]
  %v20 = vld [vmem:[%s1 + $0x14] sm:$0xf]
  %v21 = vld [vmem:[%s2] sm:$0xff]
  %v22 = vld [vmem:[%s2 + $0x8] sm:$0xff]
  %24 = vset.pattern.permute.xlu0 0
  %25 = vperm.xlu0 %24, %v21
  %v26 = vpop.permute.xlu0 %25
  %29 = vset.pattern.permute.xlu0 0
  %30 = vperm.xlu0 %29, %v22
  %v31 = vpop.permute.xlu0 %30
  %v35 = vunpack.c.l.b16 %v15
  %v36 = vunpack.c.l.b16 %v16
  %v37 = vpack.c.b16 %v36, %v35
  %v42 = vunpack.c.l.b16 %v17
  %v43 = vunpack.c.h.b16 %v17
  %v44 = vunpack.c.l.b16 %v18
  %v45 = vunpack.c.l.b16 %v19
  %v46 = vunpack.c.h.b16 %v19
  %v47 = vunpack.c.l.b16 %v20
  %v48 = vpack.c.b16 %v45, %v42
  %v49 = vpack.c.b16 %v46, %v43
  %v50 = vpack.c.b16 %v47, %v44
  %vm54 = vcmask 130048
  %v56 = vsel %vm54, %v37, 0
  %58 = vmatpush.bf16.msra.mxu0 0
  %59 = vmatpush.bf16.msra.mxu0 0
  %60 = vmatpush.bf16.msra.mxu0 0
  %61 = vmatpush.bf16.msra.mxu0 0
  %62 = vmatpush.bf16.msra.mxu0 0
  %63 = vmatpush.bf16.msra.mxu0 0
  %64 = vmatpush.bf16.msra.mxu0 0
  %65 = vmatpush.bf16.msra.mxu0 %v48
  %66 = vmatmul.bf16.gmra.mxu0 %v56
  %v67 = vpop.f32.mrf.mxu0
  %v68 = vadd.f32 %v26, %v67
  %v69 = vpop.f32.mrf.mxu0
  %v70 = vadd.f32 %v31, %v69
  %71 = vdwg.mxu0
  %72 = vmatpush.bf16.msra.mxu0 0
  %73 = vmatpush.bf16.msra.mxu0 0
  %74 = vmatpush.bf16.msra.mxu0 0
  %75 = vmatpush.bf16.msra.mxu0 0
  %76 = vmatpush.bf16.msra.mxu0 0
  %77 = vmatpush.bf16.msra.mxu0 0
  %78 = vmatpush.bf16.msra.mxu0 0
  %79 = vmatpush.bf16.msra.mxu0 %v49
  %80 = vmatmul.bf16.gmra.mxu0 %v56
  %v81 = vpop.f32.mrf.mxu0
  %v82 = vadd.f32 %v26, %v81
  %v83 = vpop.f32.mrf.mxu0
  %v84 = vadd.f32 %v31, %v83
  %85 = vdwg.mxu0
  %86 = vmatpush.bf16.msra.mxu0 0
  %87 = vmatpush.bf16.msra.mxu0 0
  %88 = vmatpush.bf16.msra.mxu0 0
  %89 = vmatpush.bf16.msra.mxu0 0
  %90 = vmatpush.bf16.msra.mxu0 0
  %91 = vmatpush.bf16.msra.mxu0 0
  %92 = vmatpush.bf16.msra.mxu0 0
  %93 = vmatpush.bf16.msra.mxu0 %v50
  %94 = vmatmul.bf16.gmra.mxu0 %v56
  %v95 = vpop.f32.mrf.mxu0
  %v96 = vadd.f32 %v26, %v95
  %v97 = vpop.f32.mrf.mxu0
  %v98 = vadd.f32 %v31, %v97
  %99 = vdwg.mxu0
  %v100 = vmax.f32 %v68, 0.0
  %v101 = vmax.f32 %v82, 0.0
  %v102 = vmax.f32 %v96, 0.0
  %v103 = vmax.f32 %v70, 0.0
  %v104 = vmax.f32 %v84, 0.0
  %v105 = vmax.f32 %v98, 0.0
  %s106 = scalar_lea.vmem %s2, 16
  %v107 = vld [vmem:[%s106] sm:$0xff]
  %v108 = vld [vmem:[%s106 + $0x8] sm:$0xff]
  %110 = vset.pattern.permute.xlu0 0
  %111 = vperm.xlu0 %110, %v107
  %v112 = vpop.permute.xlu0 %111
  %115 = vset.pattern.permute.xlu0 0
  %116 = vperm.xlu0 %115, %v108
  %v117 = vpop.permute.xlu0 %116
  %v119 = vmul.f32 %v100, %v112
  %v120 = vmul.f32 %v101, %v112
  %v121 = vmul.f32 %v102, %v112
  %v122 = vmul.f32 %v103, %v117
  %v123 = vmul.f32 %v104, %v117
  %v124 = vmul.f32 %v105, %v117
  %s125 = scalar_lea.vmem %s2, 32
  %v126 = vld [vmem:[%s125] sm:$0xff]
  %v127 = vld [vmem:[%s125 + $0x8] sm:$0xff]
  %129 = vset.pattern.permute.xlu0 0
  %130 = vperm.xlu0 %129, %v126
  %v131 = vpop.permute.xlu0 %130
  %134 = vset.pattern.permute.xlu0 0
  %135 = vperm.xlu0 %134, %v127
  %v136 = vpop.permute.xlu0 %135
  %v138 = vadd.f32 %v119, %v131
  %v139 = vadd.f32 %v120, %v131
  %v140 = vadd.f32 %v121, %v131
  %v141 = vadd.f32 %v122, %v136
  %v142 = vadd.f32 %v123, %v136
  %v143 = vadd.f32 %v124, %v136
  %v144 = vpack.c.bf16 %v139, %v138
  %v145 = vpack.c.bf16 %v140, %v140
  %v146 = vpack.c.bf16 %v142, %v141
  %v147 = vpack.c.bf16 %v143, %v143
  %148 = vst [vmem:[%s3] sm:$0xff] %v144
  %149 = vst [vmem:[%s3 + $0x8] sm:$0xf] %v145
  %150 = vst [vmem:[%s3 + $0xc] sm:$0xff] %v146
  %151 = vst [vmem:[%s3 + $0x14] sm:$0xf] %v147
  // Predicated region
  $region14: #{forward.11} parent=0 // pred_check
    _
  $region15: #{forward.11} parent=0 // pred_check_branch
    %153 = sbr.rel (0) target = $region17
  $region16: #{forward.11} parent=0 // pred_region
    _
  $region17: #{forward.11} parent=0 // pred_fallthru
    _
  // Predicated region
  $region18: #{forward.11} parent=0 // pred_check
    _
  $region19: #{forward.11} parent=0 // pred_check_branch
    %155 = sbr.rel (0) target = $region21
  $region20: #{forward.11} parent=0 // pred_region
    _
  $region21: #{forward.11} parent=0 // pred_fallthru
    _

// kernel: forward.12
$region0: #{forward.12}
  #allocation0 [shape = 'u32[]', space=smem, size = 0x4, offset = 0x4, fixed_abs, tag = 'smem constant byte address 0x4 - core index']
  #allocation1 [shape = 'u32[72,128]{1,0:T(1,128)}', space=vmem, size = 0x9000, scoped, tag = 'internal scratch']
  %s0 = inlined_call_operand.vmem [shape: bf16[16,8], index: 0, kind: input, shape index: {}]
  %s1 = inlined_call_operand.vmem [shape: bf16[8,1280], index: 1, kind: input, shape index: {}]
  %s2 = inlined_call_operand.vmem [shape: f32[3,16,1], index: 2, kind: input, shape index: {}]
  %s3 = inlined_call_operand.vmem [shape: bf16[16,1280], index: 3, kind: output, shape index: {}]
  %s4 = sld [smem:[#allocation0]]
  $region67: #{forward.12} parent=0
    _
  %s6 = ssub.s32 1, %s4
  %s7 = scalar_select 0, %s6, %s4
  $region1: #{forward.12} parent=0
    #allocation2 [shape = 'u8[40960]{0}', space=vmem, size = 0xa000, scoped, tag = 'output window, operand 0']
    loop: start=0, step=1, limit=4
    $region2: #{forward.12} parent=1 // loop_pre_header
      _
    $region3: #{forward.12} parent=1 // loop_header
      %s9 = sphi 0, %s13
      %p10 = scmp.ge.s32.totalorder %s9, 4
      %s17 = sphi 0, %s17
      %s19 = sphi 0, %s17
      %s20 = sphi 0, %s19
      %s34 = sphi 0, %s20
      %s40 = sphi 0, %s42
      %s43 = sphi 0, %s40
      %s44 = sphi 0, %s43
      %s60 = sphi 0, %s44
      %s64 = sphi 0, %s64
      %s66 = sphi 0, %s64
      %s67 = sphi 0, %s66
      %s81 = sphi 0, %s67
      %s87 = sphi 0, %s89
      %s90 = sphi 0, %s87
      %s91 = sphi 0, %s90
      %s107 = sphi 0, %s91
    $region4: #{forward.12} parent=1 // loop_header_branch
      %12 = sbr.rel (%p10) target = $region8
    $region5: #{forward.12} parent=1 // loop_body
      %s14 = ssub.s32 %s9, 1
      %s15 = ssub.s32 %s9, 2
      %s16 = sadd.s32 %s9, 1
      %s18 = sadd.s32 %s17, 1
      %p21 = scmp.eq.s32.totalorder %s9, 1
      %p22 = scmp.ne.s32.totalorder %s17, %s19
      %p23 = scmp.eq.s32.totalorder %s9, 0
      %p24 = por %p22, %p23
      %p25 = scmp.ne.s32.totalorder %s17, %s19
      %p26 = scmp.eq.s32.totalorder %s14, 1
      %p27 = por %p25, %p26
      %p28 = scmp.ne.s32.totalorder %s19, %s20
      %p29 = scmp.eq.s32.totalorder %s14, 0
      %p30 = por %p28, %p29
      %p31 = scmp.ne.s32.totalorder %s19, %s20
      %p32 = scmp.eq.s32.totalorder %s15, 1
      %p33 = por %p31, %p32
      %p35 = scmp.ne.s32.totalorder %s20, %s34
      %p36 = scmp.eq.s32.totalorder %s15, 0
      %p37 = por %p35, %p36
      %s38 = ssub.s32 %s9, %s16
      %p39 = scmp.eq.s32.totalorder %s38, 0
      %s41 = sadd.s32 %s40, 1
      %s42 = scalar_select %p39, %s40, %s41
      %p45 = pneg %p39
      %p46 = scmp.eq.s32.totalorder %s9, 1
      %p47 = por %p45, %p46
      %p48 = scmp.ne.s32.totalorder %s40, %s43
      %p49 = scmp.eq.s32.totalorder %s9, 0
      %p50 = por %p48, %p49
      %p51 = scmp.ne.s32.totalorder %s40, %s43
      %p52 = scmp.eq.s32.totalorder %s14, 1
      %p53 = por %p51, %p52
      %p54 = scmp.ne.s32.totalorder %s43, %s44
      %p55 = scmp.eq.s32.totalorder %s14, 0
      %p56 = por %p54, %p55
      %p57 = scmp.ne.s32.totalorder %s43, %s44
      %p58 = scmp.eq.s32.totalorder %s15, 1
      %p59 = por %p57, %p58
      %p61 = scmp.ne.s32.totalorder %s44, %s60
      %p62 = scmp.eq.s32.totalorder %s15, 0
      %p63 = por %p61, %p62
      %s65 = sadd.s32 %s64, 1
      %p68 = scmp.eq.s32.totalorder %s9, 1
      %p69 = scmp.ne.s32.totalorder %s64, %s66
      %p70 = scmp.eq.s32.totalorder %s9, 0
      %p71 = por %p69, %p70
      %p72 = scmp.ne.s32.totalorder %s64, %s66
      %p73 = scmp.eq.s32.totalorder %s14, 1
      %p74 = por %p72, %p73
      %p75 = scmp.ne.s32.totalorder %s66, %s67
      %p76 = scmp.eq.s32.totalorder %s14, 0
      %p77 = por %p75, %p76
      %p78 = scmp.ne.s32.totalorder %s66, %s67
      %p79 = scmp.eq.s32.totalorder %s15, 1
      %p80 = por %p78, %p79
      %p82 = scmp.ne.s32.totalorder %s67, %s81
      %p83 = scmp.eq.s32.totalorder %s15, 0
      %p84 = por %p82, %p83
      %s85 = ssub.s32 %s9, %s16
      %p86 = scmp.eq.s32.totalorder %s85, 0
      %s88 = sadd.s32 %s87, 1
      %s89 = scalar_select %p86, %s87, %s88
      %p92 = pneg %p86
      %p93 = scmp.eq.s32.totalorder %s9, 1
      %p94 = por %p92, %p93
      %p95 = scmp.ne.s32.totalorder %s87, %s90
      %p96 = scmp.eq.s32.totalorder %s9, 0
      %p97 = por %p95, %p96
      %p98 = scmp.ne.s32.totalorder %s87, %s90
      %p99 = scmp.eq.s32.totalorder %s14, 1
      %p100 = por %p98, %p99
      %p101 = scmp.ne.s32.totalorder %s90, %s91
      %p102 = scmp.eq.s32.totalorder %s14, 0
      %p103 = por %p101, %p102
      %p104 = scmp.ne.s32.totalorder %s90, %s91
      %p105 = scmp.eq.s32.totalorder %s15, 1
      %p106 = por %p104, %p105
      %p108 = scmp.ne.s32.totalorder %s91, %s107
      %p109 = scmp.eq.s32.totalorder %s15, 0
      %p110 = por %p108, %p109
      %p111 = scmp.le.s32.totalorder 1, %s9
      %p112 = scmp.lt.s32.totalorder %s9, 3
      %p113 = pnand %p111, %p112
      %p114 = pneg %p113
      // Predicated region
      $region9: #{forward.12} parent=5 // pred_check
        _
      $region10: #{forward.12} parent=5 // pred_check_branch
        %116 = sbr.rel (%p113) target = $region12
      $region11: #{forward.12} parent=5 // pred_region
        %s117 = ssub.s32 %s9, 1
        // Predicated region
        $region13: #{forward.12} parent=11 // pred_check
          %p118 = pneg %p30
        $region14: #{forward.12} parent=11 // pred_check_branch
          %120 = sbr.rel (%p118) target = $region16
        $region15: #{forward.12} parent=11 // pred_region
          _
        $region16: #{forward.12} parent=11 // pred_fallthru
          _
        // Predicated region
        $region17: #{forward.12} parent=11 // pred_check
          %p121 = pneg %p77
        $region18: #{forward.12} parent=11 // pred_check_branch
          %123 = sbr.rel (%p121) target = $region20
        $region19: #{forward.12} parent=11 // pred_region
          _
        $region20: #{forward.12} parent=11 // pred_fallthru
          _
      $region12: #{forward.12} parent=5 // pred_fallthru
        _
      %p124 = scmp.lt.s32.totalorder %s9, 2
      // Predicated region
      $region21: #{forward.12} parent=5 // pred_check
        %p125 = pneg %p124
      $region22: #{forward.12} parent=5 // pred_check_branch
        %127 = sbr.rel (%p125) target = $region24
      $region23: #{forward.12} parent=5 // pred_region
        // Predicated region
        $region25: #{forward.12} parent=23 // pred_check
          %p128 = pneg %p50
        $region26: #{forward.12} parent=23 // pred_check_branch
          %130 = sbr.rel (%p128) target = $region28
        $region27: #{forward.12} parent=23 // pred_region
          %s131 = smul.u32 5, %s9
          %p132 = scmp.lt.s32.totalorder %s131, 9
          %s133 = scalar_select %p132, %s131, 9
          %s134 = smul.addr %s133, 4
          %s135 = scalar_lea.vmem %s1, %s134
          %s136 = smul.u32 5, %s9
        $region28: #{forward.12} parent=23 // pred_fallthru
          _
      $region24: #{forward.12} parent=5 // pred_fallthru
        _
      %p137 = scmp.le.s32.totalorder 1, %s9
      %p138 = scmp.lt.s32.totalorder %s9, 3
      %p139 = pnand %p137, %p138
      %p140 = pneg %p139
      // Predicated region
      $region29: #{forward.12} parent=5 // pred_check
        _
      $region30: #{forward.12} parent=5 // pred_check_branch
        %142 = sbr.rel (%p139) target = $region32
      $region31: #{forward.12} parent=5 // pred_region
        %s143 = ssub.s32 %s9, 1
        %p144 = pneg %p30
        %p145 = pneg %p27
        %s146 = smul.u32 5, %s14
        %p147 = scmp.lt.s32.totalorder %s146, 9
        %s148 = scalar_select %p147, %s146, 9
        %s149 = smul.addr %s148, 4
        %s150 = scalar_lea.vmem %s1, %s149
        %p151 = pneg %p56
        %p152 = pneg %p53
        %p153 = pneg %p77
        %p154 = pneg %p74
        %p155 = pneg %p103
        %p156 = pneg %p100
        %s157 = sand.u32 %s90, 1
        %s158 = sand.u32 %s90, 1
        %s159 = smul.addr %s158, 40
        %s160 = scalar_lea.vmem [#allocation2], %s159
        %s161 = smul.u32 5, %s14
        %p162 = scmp.lt.s32.totalorder %s161, 9
        %s163 = scalar_select %p162, %s161, 9
        %s164 = smul.addr %s163, 4
        %s165 = scalar_lea.vmem %s1, %s164
        %s166 = smul.u32 5, %s14
        %s167 = smul.u32 5, %s14
        %v169 = vld [vmem:[%s0] sm:$0xf]
        %v170 = vld [vmem:[%s0 + $0x4] sm:$0xf]
        %v171 = vld [vmem:[%s165] sm:$0xff]
        %v172 = vld [vmem:[%s165 + $0x8] sm:$0xff]
        %v173 = vld [vmem:[%s165 + $0x10] sm:$0xf]
        %v174 = vld [vmem:[%s2] sm:$0xff]
        %v175 = vld [vmem:[%s2 + $0x8] sm:$0xff]
        %177 = vset.pattern.permute.xlu0 0
        %178 = vperm.xlu0 %177, %v174
        %v179 = vpop.permute.xlu0 %178
        %182 = vset.pattern.permute.xlu0 0
        %183 = vperm.xlu0 %182, %v175
        %v184 = vpop.permute.xlu0 %183
        %v188 = vunpack.c.l.b16 %v169
        %v189 = vunpack.c.l.b16 %v170
        %v190 = vpack.c.b16 %v189, %v188
        %v194 = vunpack.c.l.b16 %v171
        %v195 = vunpack.c.h.b16 %v171
        %v196 = vunpack.c.l.b16 %v172
        %v197 = vunpack.c.h.b16 %v172
        %v198 = vunpack.c.l.b16 %v173
        %v199 = vpack.c.b16 %v194, %v194
        %v200 = vpack.c.b16 %v195, %v195
        %v201 = vpack.c.b16 %v196, %v196
        %v202 = vpack.c.b16 %v197, %v197
        %v203 = vpack.c.b16 %v198, %v198
        %vm204 = vcmask 64512
        %v206 = vsel %vm204, %v190, 0
        %vm208 = vcmask 1043456
        %v210 = vsel %vm208, %v199, 0
        %v213 = vsel %vm208, %v200, 0
        %v216 = vsel %vm208, %v201, 0
        %v219 = vsel %vm208, %v202, 0
        %v222 = vsel %vm208, %v203, 0
        %224 = vmatpush.bf16.msra.mxu0 0
        %225 = vmatpush.bf16.msra.mxu0 0
        %226 = vmatpush.bf16.msra.mxu0 0
        %227 = vmatpush.bf16.msra.mxu0 0
        %228 = vmatpush.bf16.msra.mxu0 0
        %229 = vmatpush.bf16.msra.mxu0 0
        %230 = vmatpush.bf16.msra.mxu0 0
        %231 = vmatpush.bf16.msra.mxu0 %v210
        %232 = vmatmul.bf16.gmra.mxu0 %v206
        %v233 = vpop.f32.mrf.mxu0
        %v234 = vadd.f32 %v179, %v233
        %v235 = vpop.f32.mrf.mxu0
        %v236 = vadd.f32 %v184, %v235
        %237 = vdwg.mxu0
        %238 = vmatpush.bf16.msra.mxu0 0
        %239 = vmatpush.bf16.msra.mxu0 0
        %240 = vmatpush.bf16.msra.mxu0 0
        %241 = vmatpush.bf16.msra.mxu0 0
        %242 = vmatpush.bf16.msra.mxu0 0
        %243 = vmatpush.bf16.msra.mxu0 0
        %244 = vmatpush.bf16.msra.mxu0 0
        %245 = vmatpush.bf16.msra.mxu0 %v213
        %246 = vmatmul.bf16.gmra.mxu0 %v206
        %v247 = vpop.f32.mrf.mxu0
        %v248 = vadd.f32 %v179, %v247
        %v249 = vpop.f32.mrf.mxu0
        %v250 = vadd.f32 %v184, %v249
        %251 = vdwg.mxu0
        %252 = vmatpush.bf16.msra.mxu0 0
        %253 = vmatpush.bf16.msra.mxu0 0
        %254 = vmatpush.bf16.msra.mxu0 0
        %255 = vmatpush.bf16.msra.mxu0 0
        %256 = vmatpush.bf16.msra.mxu0 0
        %257 = vmatpush.bf16.msra.mxu0 0
        %258 = vmatpush.bf16.msra.mxu0 0
        %259 = vmatpush.bf16.msra.mxu0 %v216
        %260 = vmatmul.bf16.gmra.mxu0 %v206
        %v261 = vpop.f32.mrf.mxu0
        %v262 = vadd.f32 %v179, %v261
        %v263 = vpop.f32.mrf.mxu0
        %v264 = vadd.f32 %v184, %v263
        %265 = vdwg.mxu0
        %266 = vmatpush.bf16.msra.mxu0 0
        %267 = vmatpush.bf16.msra.mxu0 0
        %268 = vmatpush.bf16.msra.mxu0 0
        %269 = vmatpush.bf16.msra.mxu0 0
        %270 = vmatpush.bf16.msra.mxu0 0
        %271 = vmatpush.bf16.msra.mxu0 0
        %272 = vmatpush.bf16.msra.mxu0 0
        %273 = vmatpush.bf16.msra.mxu0 %v219
        %274 = vmatmul.bf16.gmra.mxu0 %v206
        %v275 = vpop.f32.mrf.mxu0
        %v276 = vadd.f32 %v179, %v275
        %v277 = vpop.f32.mrf.mxu0
        %v278 = vadd.f32 %v184, %v277
        %279 = vdwg.mxu0
        %280 = vmatpush.bf16.msra.mxu0 0
        %281 = vmatpush.bf16.msra.mxu0 0
        %282 = vmatpush.bf16.msra.mxu0 0
        %283 = vmatpush.bf16.msra.mxu0 0
        %284 = vmatpush.bf16.msra.mxu0 0
        %285 = vmatpush.bf16.msra.mxu0 0
        %286 = vmatpush.bf16.msra.mxu0 0
        %287 = vmatpush.bf16.msra.mxu0 %v222
        %288 = vmatmul.bf16.gmra.mxu0 %v206
        %v289 = vpop.f32.mrf.mxu0
        %v290 = vadd.f32 %v179, %v289
        %v291 = vpop.f32.mrf.mxu0
        %v292 = vadd.f32 %v184, %v291
        %293 = vdwg.mxu0
        %v294 = vmax.f32 %v234, 0.0
        %v295 = vmax.f32 %v248, 0.0
        %v296 = vmax.f32 %v262, 0.0
        %v297 = vmax.f32 %v276, 0.0
        %v298 = vmax.f32 %v290, 0.0
        %v299 = vmax.f32 %v236, 0.0
        %v300 = vmax.f32 %v250, 0.0
        %v301 = vmax.f32 %v264, 0.0
        %v302 = vmax.f32 %v278, 0.0
        %v303 = vmax.f32 %v292, 0.0
        %s304 = scalar_lea.vmem %s2, 16
        %v305 = vld [vmem:[%s304] sm:$0xff]
        %v306 = vld [vmem:[%s304 + $0x8] sm:$0xff]
        %308 = vset.pattern.permute.xlu0 0
        %309 = vperm.xlu0 %308, %v305
        %v310 = vpop.permute.xlu0 %309
        %313 = vset.pattern.permute.xlu0 0
        %314 = vperm.xlu0 %313, %v306
        %v315 = vpop.permute.xlu0 %314
        %v317 = vmul.f32 %v294, %v310
        %v318 = vmul.f32 %v295, %v310
        %v319 = vmul.f32 %v296, %v310
        %v320 = vmul.f32 %v297, %v310
        %v321 = vmul.f32 %v298, %v310
        %v322 = vmul.f32 %v299, %v315
        %v323 = vmul.f32 %v300, %v315
        %v324 = vmul.f32 %v301, %v315
        %v325 = vmul.f32 %v302, %v315
        %v326 = vmul.f32 %v303, %v315
        %s327 = scalar_lea.vmem %s2, 32
        %v328 = vld [vmem:[%s327] sm:$0xff]
        %v329 = vld [vmem:[%s327 + $0x8] sm:$0xff]
        %331 = vset.pattern.permute.xlu0 0
        %332 = vperm.xlu0 %331, %v328
        %v333 = vpop.permute.xlu0 %332
        %336 = vset.pattern.permute.xlu0 0
        %337 = vperm.xlu0 %336, %v329
        %v338 = vpop.permute.xlu0 %337
        %v340 = vadd.f32 %v317, %v333
        %v341 = vadd.f32 %v318, %v333
        %v342 = vadd.f32 %v319, %v333
        %v343 = vadd.f32 %v320, %v333
        %v344 = vadd.f32 %v321, %v333
        %v345 = vadd.f32 %v322, %v338
        %v346 = vadd.f32 %v323, %v338
        %v347 = vadd.f32 %v324, %v338
        %v348 = vadd.f32 %v325, %v338
        %v349 = vadd.f32 %v326, %v338
        %v350 = vpack.c.bf16 %v341, %v340
        %v351 = vpack.c.bf16 %v343, %v342
        %v352 = vpack.c.bf16 %v344, %v344
        %v353 = vpack.c.bf16 %v346, %v345
        %v354 = vpack.c.bf16 %v348, %v347
        %v355 = vpack.c.bf16 %v349, %v349
        %356 = vst [vmem:[%s160] sm:$0xff] %v350
        %357 = vst [vmem:[%s160 + $0x8] sm:$0xff] %v351
        %358 = vst [vmem:[%s160 + $0x10] sm:$0xf] %v352
        %359 = vst [vmem:[%s160 + $0x14] sm:$0xff] %v353
        %360 = vst [vmem:[%s160 + $0x1c] sm:$0xff] %v354
        %361 = vst [vmem:[%s160 + $0x24] sm:$0xf] %v355
        %s362 = sand.u32 %s90, 1
        %s363 = sand.u32 %s90, 1
        %s364 = smul.addr %s363, 40
        %s365 = scalar_lea.vmem [#allocation2], %s364
        // Predicated region
        $region33: #{forward.12} parent=31 // pred_check
          %p366 = pneg %p100
        $region34: #{forward.12} parent=31 // pred_check_branch
          %368 = sbr.rel (%p366) target = $region36
        $region35: #{forward.12} parent=31 // pred_region
          %s369 = smul.u32 5, %s14
          %s370 = smul.addr %s369, 4
          %s371 = scalar_lea.vmem %s3, %s370
          // Predicated region
          $region37: #{forward.12} parent=35 // pred_check
            _
          $region38: #{forward.12} parent=35 // pred_check_branch
            %373 = sbr.rel (0) target = $region40
          $region39: #{forward.12} parent=35 // pred_region
            // Predicated region
            $region41: #{forward.12} parent=39 // pred_check
              _
            $region42: #{forward.12} parent=39 // pred_check_branch
              %375 = sbr.rel (0) target = $region44
            $region43: #{forward.12} parent=39 // pred_region
              %s376 = scalar_lea.vmem %s365, 16 [#allocation2]
              %s377 = scalar_lea.vmem %s371, 16
              loop: start=0, step=1, limit=1
              $region45: #{forward.12} parent=43 // loop_pre_header
                _
              $region46: #{forward.12} parent=43 // loop_header
                %s379 = sphi 0, %s383
                %p380 = scmp.ge.s32.totalorder %s379, 1
                %s384 = sphi %s365, %s365
                %s385 = sphi %s371, %s371
              $region47: #{forward.12} parent=43 // loop_header_branch
                %382 = sbr.rel (%p380) target = $region51
              $region48: #{forward.12} parent=43 // loop_body
                %v386 = vld [vmem:[%s384] sm:$0xff]
                %387 = vst [vmem:[%s385] sm:$0xff] %v386
                %v388 = vld [vmem:[%s384 + $0x8] sm:$0xff]
                %389 = vst [vmem:[%s385 + $0x8] sm:$0xff] %v388
                %v390 = vld [vmem:[%s384 + $0x14] sm:$0xff]
                %391 = vst [vmem:[%s385 + $0x28] sm:$0xff] %v390
                %v392 = vld [vmem:[%s384 + $0x1c] sm:$0xff]
                %393 = vst [vmem:[%s385 + $0x30] sm:$0xff] %v392
              $region49: #{forward.12} parent=43 // loop_footer
                %s383 = sadd.s32 1, %s379
              $region50: #{forward.12} parent=43 // loop_footer_branch
                %378 = sbr.rel target = $region46
              $region51: #{forward.12} parent=43 // loop_exit
                _
              %s395 = ssub.s32 16, 1
              loop: start=0, step=1, limit=1
              $region52: #{forward.12} parent=43 // loop_pre_header
                _
              $region53: #{forward.12} parent=43 // loop_header
                %s397 = sphi 0, %s401
                %p398 = scmp.ge.s32.totalorder %s397, 1
                %s402 = sphi %s376, %s376
                %s403 = sphi %s377, %s377
              $region54: #{forward.12} parent=43 // loop_header_branch
                %400 = sbr.rel (%p398) target = $region58
              $region55: #{forward.12} parent=43 // loop_body
                %v404 = vld [vmem:[%s402] sm:%s395]
                %405 = vst [vmem:[%s403] sm:%s395] %v404
                %v406 = vld [vmem:[%s402 + $0x14] sm:%s395]
                %407 = vst [vmem:[%s403 + $0x28] sm:%s395] %v406
              $region56: #{forward.12} parent=43 // loop_footer
                %s401 = sadd.s32 1, %s397
              $region57: #{forward.12} parent=43 // loop_footer_branch
                %396 = sbr.rel target = $region53
              $region58: #{forward.12} parent=43 // loop_exit
                _
            $region44: #{forward.12} parent=39 // pred_fallthru
              _
          $region40: #{forward.12} parent=35 // pred_fallthru
            _
          %408 = vnop
        $region36: #{forward.12} parent=31 // pred_fallthru
          _
      $region32: #{forward.12} parent=5 // pred_fallthru
        _
      %p409 = scmp.le.s32.totalorder 2, %s9
      // Predicated region
      $region59: #{forward.12} parent=5 // pred_check
        %p410 = pneg %p409
      $region60: #{forward.12} parent=5 // pred_check_branch
        %412 = sbr.rel (%p410) target = $region62
      $region61: #{forward.12} parent=5 // pred_region
        %s413 = ssub.s32 %s9, 2
        // Predicated region
        $region63: #{forward.12} parent=61 // pred_check
          %p414 = pneg %p106
        $region64: #{forward.12} parent=61 // pred_check_branch
          %416 = sbr.rel (%p414) target = $region66
        $region65: #{forward.12} parent=61 // pred_region
          %s417 = sand.u32 %s91, 1
          %s418 = sand.u32 %s91, 1
          %s419 = smul.addr %s418, 40
          %s420 = scalar_lea.vmem [#allocation2], %s419
        $region66: #{forward.12} parent=61 // pred_fallthru
          _
      $region62: #{forward.12} parent=5 // pred_fallthru
        _
    $region6: #{forward.12} parent=1 // loop_footer
      %s13 = sadd.s32 1, %s9
    $region7: #{forward.12} parent=1 // loop_footer_branch
      %8 = sbr.rel target = $region3
    $region8: #{forward.12} parent=1 // loop_exit
      _

// kernel: forward.13
$region0: #{forward.13}
  #allocation0 [shape = 'u32[]', space=smem, size = 0x4, offset = 0x4, fixed_abs, tag = 'smem constant byte address 0x4 - core index']
  #allocation1 [shape = 'u32[72,128]{1,0:T(1,128)}', space=vmem, size = 0x9000, scoped, tag = 'internal scratch']
  %s0 = inlined_call_operand.vmem [shape: bf16[8,8], index: 0, kind: input, shape index: {}]
  %s1 = inlined_call_operand.vmem [shape: bf16[8,4864], index: 1, kind: input, shape index: {}]
  %s2 = inlined_call_operand.vmem [shape: f32[1,8,1], index: 2, kind: input, shape index: {}]
  %s3 = inlined_call_operand.vmem [shape: f32[8,8], index: 3, kind: input, shape index: {}]
  %s4 = inlined_call_operand.vmem [shape: f32[8,1], index: 4, kind: input, shape index: {}]
  %s5 = inlined_call_operand.vmem [shape: f32[8,4864], index: 5, kind: output, shape index: {}]
  %s6 = sld [smem:[#allocation0]]
  $region53: #{forward.13} parent=0
    _
  %s8 = ssub.s32 1, %s6
  %s9 = scalar_select 0, %s8, %s6
  loop: start=0, step=1, limit=4
  $region2: #{forward.13} parent=0 // loop_pre_header
    _
  $region3: #{forward.13} parent=0 // loop_header
    %s11 = sphi 0, %s15
    %p12 = scmp.ge.s32.totalorder %s11, 4
    %s19 = sphi 0, %s19
    %s21 = sphi 0, %s19
    %s22 = sphi 0, %s21
    %s36 = sphi 0, %s22
    %s42 = sphi 0, %s44
    %s45 = sphi 0, %s42
    %s46 = sphi 0, %s45
    %s62 = sphi 0, %s46
    %s66 = sphi 0, %s66
    %s68 = sphi 0, %s66
    %s69 = sphi 0, %s68
    %s83 = sphi 0, %s69
    %s87 = sphi 0, %s87
    %s89 = sphi 0, %s87
    %s90 = sphi 0, %s89
    %s104 = sphi 0, %s90
    %s108 = sphi 0, %s108
    %s110 = sphi 0, %s108
    %s111 = sphi 0, %s110
    %s125 = sphi 0, %s111
    %s131 = sphi 0, %s133
    %s134 = sphi 0, %s131
    %s135 = sphi 0, %s134
    %s151 = sphi 0, %s135
  $region4: #{forward.13} parent=0 // loop_header_branch
    %14 = sbr.rel (%p12) target = $region8
  $region5: #{forward.13} parent=0 // loop_body
    %s16 = ssub.s32 %s11, 1
    %s17 = ssub.s32 %s11, 2
    %s18 = sadd.s32 %s11, 1
    %s20 = sadd.s32 %s19, 1
    %p23 = scmp.eq.s32.totalorder %s11, 1
    %p24 = scmp.ne.s32.totalorder %s19, %s21
    %p25 = scmp.eq.s32.totalorder %s11, 0
    %p26 = por %p24, %p25
    %p27 = scmp.ne.s32.totalorder %s19, %s21
    %p28 = scmp.eq.s32.totalorder %s16, 1
    %p29 = por %p27, %p28
    %p30 = scmp.ne.s32.totalorder %s21, %s22
    %p31 = scmp.eq.s32.totalorder %s16, 0
    %p32 = por %p30, %p31
    %p33 = scmp.ne.s32.totalorder %s21, %s22
    %p34 = scmp.eq.s32.totalorder %s17, 1
    %p35 = por %p33, %p34
    %p37 = scmp.ne.s32.totalorder %s22, %s36
    %p38 = scmp.eq.s32.totalorder %s17, 0
    %p39 = por %p37, %p38
    %s40 = ssub.s32 %s11, %s18
    %p41 = scmp.eq.s32.totalorder %s40, 0
    %s43 = sadd.s32 %s42, 1
    %s44 = scalar_select %p41, %s42, %s43
    %p47 = pneg %p41
    %p48 = scmp.eq.s32.totalorder %s11, 1
    %p49 = por %p47, %p48
    %p50 = scmp.ne.s32.totalorder %s42, %s45
    %p51 = scmp.eq.s32.totalorder %s11, 0
    %p52 = por %p50, %p51
    %p53 = scmp.ne.s32.totalorder %s42, %s45
    %p54 = scmp.eq.s32.totalorder %s16, 1
    %p55 = por %p53, %p54
    %p56 = scmp.ne.s32.totalorder %s45, %s46
    %p57 = scmp.eq.s32.totalorder %s16, 0
    %p58 = por %p56, %p57
    %p59 = scmp.ne.s32.totalorder %s45, %s46
    %p60 = scmp.eq.s32.totalorder %s17, 1
    %p61 = por %p59, %p60
    %p63 = scmp.ne.s32.totalorder %s46, %s62
    %p64 = scmp.eq.s32.totalorder %s17, 0
    %p65 = por %p63, %p64
    %s67 = sadd.s32 %s66, 1
    %p70 = scmp.eq.s32.totalorder %s11, 1
    %p71 = scmp.ne.s32.totalorder %s66, %s68
    %p72 = scmp.eq.s32.totalorder %s11, 0
    %p73 = por %p71, %p72
    %p74 = scmp.ne.s32.totalorder %s66, %s68
    %p75 = scmp.eq.s32.totalorder %s16, 1
    %p76 = por %p74, %p75
    %p77 = scmp.ne.s32.totalorder %s68, %s69
    %p78 = scmp.eq.s32.totalorder %s16, 0
    %p79 = por %p77, %p78
    %p80 = scmp.ne.s32.totalorder %s68, %s69
    %p81 = scmp.eq.s32.totalorder %s17, 1
    %p82 = por %p80, %p81
    %p84 = scmp.ne.s32.totalorder %s69, %s83
    %p85 = scmp.eq.s32.totalorder %s17, 0
    %p86 = por %p84, %p85
    %s88 = sadd.s32 %s87, 1
    %p91 = scmp.eq.s32.totalorder %s11, 1
    %p92 = scmp.ne.s32.totalorder %s87, %s89
    %p93 = scmp.eq.s32.totalorder %s11, 0
    %p94 = por %p92, %p93
    %p95 = scmp.ne.s32.totalorder %s87, %s89
    %p96 = scmp.eq.s32.totalorder %s16, 1
    %p97 = por %p95, %p96
    %p98 = scmp.ne.s32.totalorder %s89, %s90
    %p99 = scmp.eq.s32.totalorder %s16, 0
    %p100 = por %p98, %p99
    %p101 = scmp.ne.s32.totalorder %s89, %s90
    %p102 = scmp.eq.s32.totalorder %s17, 1
    %p103 = por %p101, %p102
    %p105 = scmp.ne.s32.totalorder %s90, %s104
    %p106 = scmp.eq.s32.totalorder %s17, 0
    %p107 = por %p105, %p106
    %s109 = sadd.s32 %s108, 1
    %p112 = scmp.eq.s32.totalorder %s11, 1
    %p113 = scmp.ne.s32.totalorder %s108, %s110
    %p114 = scmp.eq.s32.totalorder %s11, 0
    %p115 = por %p113, %p114
    %p116 = scmp.ne.s32.totalorder %s108, %s110
    %p117 = scmp.eq.s32.totalorder %s16, 1
    %p118 = por %p116, %p117
    %p119 = scmp.ne.s32.totalorder %s110, %s111
    %p120 = scmp.eq.s32.totalorder %s16, 0
    %p121 = por %p119, %p120
    %p122 = scmp.ne.s32.totalorder %s110, %s111
    %p123 = scmp.eq.s32.totalorder %s17, 1
    %p124 = por %p122, %p123
    %p126 = scmp.ne.s32.totalorder %s111, %s125
    %p127 = scmp.eq.s32.totalorder %s17, 0
    %p128 = por %p126, %p127
    %s129 = ssub.s32 %s11, %s18
    %p130 = scmp.eq.s32.totalorder %s129, 0
    %s132 = sadd.s32 %s131, 1
    %s133 = scalar_select %p130, %s131, %s132
    %p136 = pneg %p130
    %p137 = scmp.eq.s32.totalorder %s11, 1
    %p138 = por %p136, %p137
    %p139 = scmp.ne.s32.totalorder %s131, %s134
    %p140 = scmp.eq.s32.totalorder %s11, 0
    %p141 = por %p139, %p140
    %p142 = scmp.ne.s32.totalorder %s131, %s134
    %p143 = scmp.eq.s32.totalorder %s16, 1
    %p144 = por %p142, %p143
    %p145 = scmp.ne.s32.totalorder %s134, %s135
    %p146 = scmp.eq.s32.totalorder %s16, 0
    %p147 = por %p145, %p146
    %p148 = scmp.ne.s32.totalorder %s134, %s135
    %p149 = scmp.eq.s32.totalorder %s17, 1
    %p150 = por %p148, %p149
    %p152 = scmp.ne.s32.totalorder %s135, %s151
    %p153 = scmp.eq.s32.totalorder %s17, 0
    %p154 = por %p152, %p153
    %p155 = scmp.le.s32.totalorder 1, %s11
    %p156 = scmp.lt.s32.totalorder %s11, 3
    %p157 = pnand %p155, %p156
    %p158 = pneg %p157
    // Predicated region
    $region9: #{forward.13} parent=5 // pred_check
      _
    $region10: #{forward.13} parent=5 // pred_check_branch
      %160 = sbr.rel (%p157) target = $region12
    $region11: #{forward.13} parent=5 // pred_region
      %s161 = ssub.s32 %s11, 1
      // Predicated region
      $region13: #{forward.13} parent=11 // pred_check
        %p162 = pneg %p32
      $region14: #{forward.13} parent=11 // pred_check_branch
        %164 = sbr.rel (%p162) target = $region16
      $region15: #{forward.13} parent=11 // pred_region
        _
      $region16: #{forward.13} parent=11 // pred_fallthru
        _
      // Predicated region
      $region17: #{forward.13} parent=11 // pred_check
        %p165 = pneg %p79
      $region18: #{forward.13} parent=11 // pred_check_branch
        %167 = sbr.rel (%p165) target = $region20
      $region19: #{forward.13} parent=11 // pred_region
        _
      $region20: #{forward.13} parent=11 // pred_fallthru
        _
      // Predicated region
      $region21: #{forward.13} parent=11 // pred_check
        %p168 = pneg %p100
      $region22: #{forward.13} parent=11 // pred_check_branch
        %170 = sbr.rel (%p168) target = $region24
      $region23: #{forward.13} parent=11 // pred_region
        _
      $region24: #{forward.13} parent=11 // pred_fallthru
        _
      // Predicated region
      $region25: #{forward.13} parent=11 // pred_check
        %p171 = pneg %p121
      $region26: #{forward.13} parent=11 // pred_check_branch
        %173 = sbr.rel (%p171) target = $region28
      $region27: #{forward.13} parent=11 // pred_region
        _
      $region28: #{forward.13} parent=11 // pred_fallthru
        _
    $region12: #{forward.13} parent=5 // pred_fallthru
      _
    %p174 = scmp.lt.s32.totalorder %s11, 2
    // Predicated region
    $region29: #{forward.13} parent=5 // pred_check
      %p175 = pneg %p174
    $region30: #{forward.13} parent=5 // pred_check_branch
      %177 = sbr.rel (%p175) target = $region32
    $region31: #{forward.13} parent=5 // pred_region
      // Predicated region
      $region33: #{forward.13} parent=31 // pred_check
        %p178 = pneg %p52
      $region34: #{forward.13} parent=31 // pred_check_branch
        %180 = sbr.rel (%p178) target = $region36
      $region35: #{forward.13} parent=31 // pred_region
        %s181 = smul.u32 19, %s11
        %p182 = scmp.lt.s32.totalorder %s181, 37
        %s183 = scalar_select %p182, %s181, 37
        %s184 = smul.addr %s183, 4
        %s185 = scalar_lea.vmem %s1, %s184
        %s186 = smul.u32 19, %s11
      $region36: #{forward.13} parent=31 // pred_fallthru
        _
    $region32: #{forward.13} parent=5 // pred_fallthru
      _
    %p187 = scmp.le.s32.totalorder 1, %s11
    %p188 = scmp.lt.s32.totalorder %s11, 3
    %p189 = pnand %p187, %p188
    %p190 = pneg %p189
    // Predicated region
    $region37: #{forward.13} parent=5 // pred_check
      _
    $region38: #{forward.13} parent=5 // pred_check_branch
      %192 = sbr.rel (%p189) target = $region40
    $region39: #{forward.13} parent=5 // pred_region
      %s193 = ssub.s32 %s11, 1
      %p194 = pneg %p32
      %p195 = pneg %p29
      %s196 = smul.u32 19, %s16
      %p197 = scmp.lt.s32.totalorder %s196, 37
      %s198 = scalar_select %p197, %s196, 37
      %s199 = smul.addr %s198, 4
      %s200 = scalar_lea.vmem %s1, %s199
      %p201 = pneg %p58
      %p202 = pneg %p55
      %p203 = pneg %p79
      %p204 = pneg %p76
      %p205 = pneg %p100
      %p206 = pneg %p97
      %p207 = pneg %p121
      %p208 = pneg %p118
      %p209 = pneg %p147
      %p210 = pneg %p144
      %s211 = smul.u32 19, %s16
      %p212 = scmp.lt.s32.totalorder %s211, 37
      %s213 = scalar_select %p212, %s211, 37
      %s214 = smul.addr %s213, 8
      %s215 = scalar_lea.vmem %s5, %s214
      %s216 = smul.u32 19, %s16
      %p217 = scmp.lt.s32.totalorder %s216, 37
      %s218 = scalar_select %p217, %s216, 37
      %s219 = smul.addr %s218, 4
      %s220 = scalar_lea.vmem %s1, %s219
      %s221 = smul.u32 19, %s16
      %s222 = smul.u32 19, %s16
      %p223 = scmp.lt.s32.totalorder %s222, 37
      %s224 = scalar_select %p223, %s222, 37
      %s225 = smul.addr %s224, 8
      %s226 = scalar_lea.vmem %s5, %s225
      %s227 = smul.u32 19, %s16
      %v229 = vld [vmem:[%s0] sm:$0xf]
      %v230 = vld [vmem:[%s220] sm:$0xff]
      %v231 = vld [vmem:[%s220 + $0x8] sm:$0xff]
      %v232 = vld [vmem:[%s220 + $0x10] sm:$0xff]
      %v233 = vld [vmem:[%s220 + $0x18] sm:$0xff]
      %v234 = vld [vmem:[%s220 + $0x20] sm:$0xff]
      %v235 = vld [vmem:[%s220 + $0x28] sm:$0xff]
      %v236 = vld [vmem:[%s220 + $0x30] sm:$0xff]
      %v237 = vld [vmem:[%s220 + $0x38] sm:$0xff]
      %v238 = vld [vmem:[%s220 + $0x40] sm:$0xff]
      %v239 = vld [vmem:[%s220 + $0x48] sm:$0xf]
      %v240 = vld [vmem:[%s2] sm:$0xff]
      %242 = vset.pattern.permute.xlu0 0
      %243 = vperm.xlu0 %242, %v240
      %v244 = vpop.permute.xlu0 %243
      %v256 = vunpack.c.l.b16 %v230
      %v257 = vunpack.c.h.b16 %v230
      %v258 = vunpack.c.l.b16 %v231
      %v259 = vunpack.c.h.b16 %v231
      %v260 = vunpack.c.l.b16 %v232
      %v261 = vunpack.c.h.b16 %v232
      %v262 = vunpack.c.l.b16 %v233
      %v263 = vunpack.c.h.b16 %v233
      %v264 = vunpack.c.l.b16 %v234
      %v265 = vunpack.c.h.b16 %v234
      %v266 = vunpack.c.l.b16 %v235
      %v267 = vunpack.c.h.b16 %v235
      %v268 = vunpack.c.l.b16 %v236
      %v269 = vunpack.c.h.b16 %v236
      %v270 = vunpack.c.l.b16 %v237
      %v271 = vunpack.c.h.b16 %v237
      %v272 = vunpack.c.l.b16 %v238
      %v273 = vunpack.c.h.b16 %v238
      %v274 = vunpack.c.l.b16 %v239
      %v275 = vpack.c.b16 %v256, %v256
      %v276 = vpack.c.b16 %v257, %v257
      %v277 = vpack.c.b16 %v258, %v258
      %v278 = vpack.c.b16 %v259, %v259
      %v279 = vpack.c.b16 %v260, %v260
      %v280 = vpack.c.b16 %v261, %v261
      %v281 = vpack.c.b16 %v262, %v262
      %v282 = vpack.c.b16 %v263, %v263
      %v283 = vpack.c.b16 %v264, %v264
      %v284 = vpack.c.b16 %v265, %v265
      %v285 = vpack.c.b16 %v266, %v266
      %v286 = vpack.c.b16 %v267, %v267
      %v287 = vpack.c.b16 %v268, %v268
      %v288 = vpack.c.b16 %v269, %v269
      %v289 = vpack.c.b16 %v270, %v270
      %v290 = vpack.c.b16 %v271, %v271
      %v291 = vpack.c.b16 %v272, %v272
      %v292 = vpack.c.b16 %v273, %v273
      %v293 = vpack.c.b16 %v274, %v274
      %vm294 = vcmask 64512
      %v296 = vsel %vm294, %v229, 0
      %vm298 = vcmask 1043456
      %v300 = vsel %vm298, %v275, 0
      %v303 = vsel %vm298, %v276, 0
      %v306 = vsel %vm298, %v277, 0
      %v309 = vsel %vm298, %v278, 0
      %v312 = vsel %vm298, %v279, 0
      %v315 = vsel %vm298, %v280, 0
      %v318 = vsel %vm298, %v281, 0
      %v321 = vsel %vm298, %v282, 0
      %v324 = vsel %vm298, %v283, 0
      %v327 = vsel %vm298, %v284, 0
      %v330 = vsel %vm298, %v285, 0
      %v333 = vsel %vm298, %v286, 0
      %v336 = vsel %vm298, %v287, 0
      %v339 = vsel %vm298, %v288, 0
      %v342 = vsel %vm298, %v289, 0
      %v345 = vsel %vm298, %v290, 0
      %v348 = vsel %vm298, %v291, 0
      %v351 = vsel %vm298, %v292, 0
      %v354 = vsel %vm298, %v293, 0
      %356 = vmatpush.bf16.msra.mxu0 0
      %357 = vmatpush.bf16.msra.mxu0 0
      %358 = vmatpush.bf16.msra.mxu0 0
      %359 = vmatpush.bf16.msra.mxu0 0
      %360 = vmatpush.bf16.msra.mxu0 0
      %361 = vmatpush.bf16.msra.mxu0 0
      %362 = vmatpush.bf16.msra.mxu0 0
      %363 = vmatpush.bf16.msra.mxu0 %v300
      %364 = vmatmul.bf16.gmra.mxu0 %v296
      %v365 = vpop.f32.mrf.mxu0
      %v366 = vadd.f32 %v244, %v365
      %v367 = vpop.f32.mrf.mxu0
      %368 = vdwg.mxu0
      %369 = vmatpush.bf16.msra.mxu0 0
      %370 = vmatpush.bf16.msra.mxu0 0
      %371 = vmatpush.bf16.msra.mxu0 0
      %372 = vmatpush.bf16.msra.mxu0 0
      %373 = vmatpush.bf16.msra.mxu0 0
      %374 = vmatpush.bf16.msra.mxu0 0
      %375 = vmatpush.bf16.msra.mxu0 0
      %376 = vmatpush.bf16.msra.mxu0 %v303
      %377 = vmatmul.bf16.gmra.mxu0 %v296
      %v378 = vpop.f32.mrf.mxu0
      %v379 = vadd.f32 %v244, %v378
      %v380 = vpop.f32.mrf.mxu0
      %381 = vdwg.mxu0
      %382 = vmatpush.bf16.msra.mxu0 0
      %383 = vmatpush.bf16.msra.mxu0 0
      %384 = vmatpush.bf16.msra.mxu0 0
      %385 = vmatpush.bf16.msra.mxu0 0
      %386 = vmatpush.bf16.msra.mxu0 0
      %387 = vmatpush.bf16.msra.mxu0 0
      %388 = vmatpush.bf16.msra.mxu0 0
      %389 = vmatpush.bf16.msra.mxu0 %v306
      %390 = vmatmul.bf16.gmra.mxu0 %v296
      %v391 = vpop.f32.mrf.mxu0
      %v392 = vadd.f32 %v244, %v391
      %v393 = vpop.f32.mrf.mxu0
      %394 = vdwg.mxu0
      %395 = vmatpush.bf16.msra.mxu0 0
      %396 = vmatpush.bf16.msra.mxu0 0
      %397 = vmatpush.bf16.msra.mxu0 0
      %398 = vmatpush.bf16.msra.mxu0 0
      %399 = vmatpush.bf16.msra.mxu0 0
      %400 = vmatpush.bf16.msra.mxu0 0
      %401 = vmatpush.bf16.msra.mxu0 0
      %402 = vmatpush.bf16.msra.mxu0 %v309
      %403 = vmatmul.bf16.gmra.mxu0 %v296
      %v404 = vpop.f32.mrf.mxu0
      %v405 = vadd.f32 %v244, %v404
      %v406 = vpop.f32.mrf.mxu0
      %407 = vdwg.mxu0
      %408 = vmatpush.bf16.msra.mxu0 0
      %409 = vmatpush.bf16.msra.mxu0 0
      %410 = vmatpush.bf16.msra.mxu0 0
      %411 = vmatpush.bf16.msra.mxu0 0
      %412 = vmatpush.bf16.msra.mxu0 0
      %413 = vmatpush.bf16.msra.mxu0 0
      %414 = vmatpush.bf16.msra.mxu0 0
      %415 = vmatpush.bf16.msra.mxu0 %v312
      %416 = vmatmul.bf16.gmra.mxu0 %v296
      %v417 = vpop.f32.mrf.mxu0
      %v418 = vadd.f32 %v244, %v417
      %v419 = vpop.f32.mrf.mxu0
      %420 = vdwg.mxu0
      %421 = vmatpush.bf16.msra.mxu0 0
      %422 = vmatpush.bf16.msra.mxu0 0
      %423 = vmatpush.bf16.msra.mxu0 0
      %424 = vmatpush.bf16.msra.mxu0 0
      %425 = vmatpush.bf16.msra.mxu0 0
      %426 = vmatpush.bf16.msra.mxu0 0
      %427 = vmatpush.bf16.msra.mxu0 0
      %428 = vmatpush.bf16.msra.mxu0 %v315
      %429 = vmatmul.bf16.gmra.mxu0 %v296
      %v430 = vpop.f32.mrf.mxu0
      %v431 = vadd.f32 %v244, %v430
      %v432 = vpop.f32.mrf.mxu0
      %433 = vdwg.mxu0
      %434 = vmatpush.bf16.msra.mxu0 0
      %435 = vmatpush.bf16.msra.mxu0 0
      %436 = vmatpush.bf16.msra.mxu0 0
      %437 = vmatpush.bf16.msra.mxu0 0
      %438 = vmatpush.bf16.msra.mxu0 0
      %439 = vmatpush.bf16.msra.mxu0 0
      %440 = vmatpush.bf16.msra.mxu0 0
      %441 = vmatpush.bf16.msra.mxu0 %v318
      %442 = vmatmul.bf16.gmra.mxu0 %v296
      %v443 = vpop.f32.mrf.mxu0
      %v444 = vadd.f32 %v244, %v443
      %v445 = vpop.f32.mrf.mxu0
      %446 = vdwg.mxu0
      %447 = vmatpush.bf16.msra.mxu0 0
      %448 = vmatpush.bf16.msra.mxu0 0
      %449 = vmatpush.bf16.msra.mxu0 0
      %450 = vmatpush.bf16.msra.mxu0 0
      %451 = vmatpush.bf16.msra.mxu0 0
      %452 = vmatpush.bf16.msra.mxu0 0
      %453 = vmatpush.bf16.msra.mxu0 0
      %454 = vmatpush.bf16.msra.mxu0 %v321
      %455 = vmatmul.bf16.gmra.mxu0 %v296
      %v456 = vpop.f32.mrf.mxu0
      %v457 = vadd.f32 %v244, %v456
      %v458 = vpop.f32.mrf.mxu0
      %459 = vdwg.mxu0
      %460 = vmatpush.bf16.msra.mxu0 0
      %461 = vmatpush.bf16.msra.mxu0 0
      %462 = vmatpush.bf16.msra.mxu0 0
      %463 = vmatpush.bf16.msra.mxu0 0
      %464 = vmatpush.bf16.msra.mxu0 0
      %465 = vmatpush.bf16.msra.mxu0 0
      %466 = vmatpush.bf16.msra.mxu0 0
      %467 = vmatpush.bf16.msra.mxu0 %v324
      %468 = vmatmul.bf16.gmra.mxu0 %v296
      %v469 = vpop.f32.mrf.mxu0
      %v470 = vadd.f32 %v244, %v469
      %v471 = vpop.f32.mrf.mxu0
      %472 = vdwg.mxu0
      %473 = vmatpush.bf16.msra.mxu0 0
      %474 = vmatpush.bf16.msra.mxu0 0
      %475 = vmatpush.bf16.msra.mxu0 0
      %476 = vmatpush.bf16.msra.mxu0 0
      %477 = vmatpush.bf16.msra.mxu0 0
      %478 = vmatpush.bf16.msra.mxu0 0
      %479 = vmatpush.bf16.msra.mxu0 0
      %480 = vmatpush.bf16.msra.mxu0 %v327
      %481 = vmatmul.bf16.gmra.mxu0 %v296
      %v482 = vpop.f32.mrf.mxu0
      %v483 = vadd.f32 %v244, %v482
      %v484 = vpop.f32.mrf.mxu0
      %485 = vdwg.mxu0
      %486 = vmatpush.bf16.msra.mxu0 0
      %487 = vmatpush.bf16.msra.mxu0 0
      %488 = vmatpush.bf16.msra.mxu0 0
      %489 = vmatpush.bf16.msra.mxu0 0
      %490 = vmatpush.bf16.msra.mxu0 0
      %491 = vmatpush.bf16.msra.mxu0 0
      %492 = vmatpush.bf16.msra.mxu0 0
      %493 = vmatpush.bf16.msra.mxu0 %v330
      %494 = vmatmul.bf16.gmra.mxu0 %v296
      %v495 = vpop.f32.mrf.mxu0
      %v496 = vadd.f32 %v244, %v495
      %v497 = vpop.f32.mrf.mxu0
      %498 = vdwg.mxu0
      %499 = vmatpush.bf16.msra.mxu0 0
      %500 = vmatpush.bf16.msra.mxu0 0
      %501 = vmatpush.bf16.msra.mxu0 0
      %502 = vmatpush.bf16.msra.mxu0 0
      %503 = vmatpush.bf16.msra.mxu0 0
      %504 = vmatpush.bf16.msra.mxu0 0
      %505 = vmatpush.bf16.msra.mxu0 0
      %506 = vmatpush.bf16.msra.mxu0 %v333
      %507 = vmatmul.bf16.gmra.mxu0 %v296
      %v508 = vpop.f32.mrf.mxu0
      %v509 = vadd.f32 %v244, %v508
      %v510 = vpop.f32.mrf.mxu0
      %511 = vdwg.mxu0
      %512 = vmatpush.bf16.msra.mxu0 0
      %513 = vmatpush.bf16.msra.mxu0 0
      %514 = vmatpush.bf16.msra.mxu0 0
      %515 = vmatpush.bf16.msra.mxu0 0
      %516 = vmatpush.bf16.msra.mxu0 0
      %517 = vmatpush.bf16.msra.mxu0 0
      %518 = vmatpush.bf16.msra.mxu0 0
      %519 = vmatpush.bf16.msra.mxu0 %v336
      %520 = vmatmul.bf16.gmra.mxu0 %v296
      %v521 = vpop.f32.mrf.mxu0
      %v522 = vadd.f32 %v244, %v521
      %v523 = vpop.f32.mrf.mxu0
      %524 = vdwg.mxu0
      %525 = vmatpush.bf16.msra.mxu0 0
      %526 = vmatpush.bf16.msra.mxu0 0
      %527 = vmatpush.bf16.msra.mxu0 0
      %528 = vmatpush.bf16.msra.mxu0 0
      %529 = vmatpush.bf16.msra.mxu0 0
      %530 = vmatpush.bf16.msra.mxu0 0
      %531 = vmatpush.bf16.msra.mxu0 0
      %532 = vmatpush.bf16.msra.mxu0 %v339
      %533 = vmatmul.bf16.gmra.mxu0 %v296
      %v534 = vpop.f32.mrf.mxu0
      %v535 = vadd.f32 %v244, %v534
      %v536 = vpop.f32.mrf.mxu0
      %537 = vdwg.mxu0
      %538 = vmatpush.bf16.msra.mxu0 0
      %539 = vmatpush.bf16.msra.mxu0 0
      %540 = vmatpush.bf16.msra.mxu0 0
      %541 = vmatpush.bf16.msra.mxu0 0
      %542 = vmatpush.bf16.msra.mxu0 0
      %543 = vmatpush.bf16.msra.mxu0 0
      %544 = vmatpush.bf16.msra.mxu0 0
      %545 = vmatpush.bf16.msra.mxu0 %v342
      %546 = vmatmul.bf16.gmra.mxu0 %v296
      %v547 = vpop.f32.mrf.mxu0
      %v548 = vadd.f32 %v244, %v547
      %v549 = vpop.f32.mrf.mxu0
      %550 = vdwg.mxu0
      %551 = vmatpush.bf16.msra.mxu0 0
      %552 = vmatpush.bf16.msra.mxu0 0
      %553 = vmatpush.bf16.msra.mxu0 0
      %554 = vmatpush.bf16.msra.mxu0 0
      %555 = vmatpush.bf16.msra.mxu0 0
      %556 = vmatpush.bf16.msra.mxu0 0
      %557 = vmatpush.bf16.msra.mxu0 0
      %558 = vmatpush.bf16.msra.mxu0 %v345
      %559 = vmatmul.bf16.gmra.mxu0 %v296
      %v560 = vpop.f32.mrf.mxu0
      %v561 = vadd.f32 %v244, %v560
      %v562 = vpop.f32.mrf.mxu0
      %563 = vdwg.mxu0
      %564 = vmatpush.bf16.msra.mxu0 0
      %565 = vmatpush.bf16.msra.mxu0 0
      %566 = vmatpush.bf16.msra.mxu0 0
      %567 = vmatpush.bf16.msra.mxu0 0
      %568 = vmatpush.bf16.msra.mxu0 0
      %569 = vmatpush.bf16.msra.mxu0 0
      %570 = vmatpush.bf16.msra.mxu0 0
      %571 = vmatpush.bf16.msra.mxu0 %v348
      %572 = vmatmul.bf16.gmra.mxu0 %v296
      %v573 = vpop.f32.mrf.mxu0
      %v574 = vadd.f32 %v244, %v573
      %v575 = vpop.f32.mrf.mxu0
      %576 = vdwg.mxu0
      %577 = vmatpush.bf16.msra.mxu0 0
      %578 = vmatpush.bf16.msra.mxu0 0
      %579 = vmatpush.bf16.msra.mxu0 0
      %580 = vmatpush.bf16.msra.mxu0 0
      %581 = vmatpush.bf16.msra.mxu0 0
      %582 = vmatpush.bf16.msra.mxu0 0
      %583 = vmatpush.bf16.msra.mxu0 0
      %584 = vmatpush.bf16.msra.mxu0 %v351
      %585 = vmatmul.bf16.gmra.mxu0 %v296
      %v586 = vpop.f32.mrf.mxu0
      %v587 = vadd.f32 %v244, %v586
      %v588 = vpop.f32.mrf.mxu0
      %589 = vdwg.mxu0
      %590 = vmatpush.bf16.msra.mxu0 0
      %591 = vmatpush.bf16.msra.mxu0 0
      %592 = vmatpush.bf16.msra.mxu0 0
      %593 = vmatpush.bf16.msra.mxu0 0
      %594 = vmatpush.bf16.msra.mxu0 0
      %595 = vmatpush.bf16.msra.mxu0 0
      %596 = vmatpush.bf16.msra.mxu0 0
      %597 = vmatpush.bf16.msra.mxu0 %v354
      %598 = vmatmul.bf16.gmra.mxu0 %v296
      %v599 = vpop.f32.mrf.mxu0
      %v600 = vadd.f32 %v244, %v599
      %v601 = vpop.f32.mrf.mxu0
      %602 = vdwg.mxu0
      %v603 = vmax.f32 %v366, 0.0
      %v604 = vmax.f32 %v379, 0.0
      %v605 = vmax.f32 %v392, 0.0
      %v606 = vmax.f32 %v405, 0.0
      %v607 = vmax.f32 %v418, 0.0
      %v608 = vmax.f32 %v431, 0.0
      %v609 = vmax.f32 %v444, 0.0
      %v610 = vmax.f32 %v457, 0.0
      %v611 = vmax.f32 %v470, 0.0
      %v612 = vmax.f32 %v483, 0.0
      %v613 = vmax.f32 %v496, 0.0
      %v614 = vmax.f32 %v509, 0.0
      %v615 = vmax.f32 %v522, 0.0
      %v616 = vmax.f32 %v535, 0.0
      %v617 = vmax.f32 %v548, 0.0
      %v618 = vmax.f32 %v561, 0.0
      %v619 = vmax.f32 %v574, 0.0
      %v620 = vmax.f32 %v587, 0.0
      %v621 = vmax.f32 %v600, 0.0
      %v622 = vld [vmem:[%s3] sm:$0xff]
      %v623 = vld [vmem:[%s4] sm:$0xff]
      %625 = vset.pattern.permute.xlu0 0
      %626 = vperm.xlu0 %625, %v623
      %v627 = vpop.permute.xlu0 %626
      %v630 = vsel %vm294, %v622, 0
      %632 = vmatpush.msra.mxu0 0.0
      %633 = vmatpush.msra.mxu0 0.0
      %634 = vmatpush.msra.mxu0 0.0
      %635 = vmatpush.msra.mxu0 0.0
      %636 = vmatpush.msra.mxu0 0.0
      %637 = vmatpush.msra.mxu0 0.0
      %638 = vmatpush.msra.mxu0 0.0
      %639 = vmatpush.msra.mxu0 0.0
      %640 = vmatpush.msra.mxu0 0.0
      %641 = vmatpush.msra.mxu0 0.0
      %642 = vmatpush.msra.mxu0 0.0
      %643 = vmatpush.msra.mxu0 0.0
      %644 = vmatpush.msra.mxu0 0.0
      %645 = vmatpush.msra.mxu0 0.0
      %646 = vmatpush.msra.mxu0 0.0
      %647 = vmatpush.msra.mxu0 %v603
      %648 = vmatmul.f32.gmra.mxu0 %v630
      %v649 = vpop.f32.mrf.mxu0
      %v650 = vadd.f32 %v627, %v649
      %651 = vdwg.mxu0
      %652 = vmatpush.msra.mxu0 0.0
      %653 = vmatpush.msra.mxu0 0.0
      %654 = vmatpush.msra.mxu0 0.0
      %655 = vmatpush.msra.mxu0 0.0
      %656 = vmatpush.msra.mxu0 0.0
      %657 = vmatpush.msra.mxu0 0.0
      %658 = vmatpush.msra.mxu0 0.0
      %659 = vmatpush.msra.mxu0 0.0
      %660 = vmatpush.msra.mxu0 0.0
      %661 = vmatpush.msra.mxu0 0.0
      %662 = vmatpush.msra.mxu0 0.0
      %663 = vmatpush.msra.mxu0 0.0
      %664 = vmatpush.msra.mxu0 0.0
      %665 = vmatpush.msra.mxu0 0.0
      %666 = vmatpush.msra.mxu0 0.0
      %667 = vmatpush.msra.mxu0 %v604
      %668 = vmatmul.f32.gmra.mxu0 %v630
      %v669 = vpop.f32.mrf.mxu0
      %v670 = vadd.f32 %v627, %v669
      %671 = vdwg.mxu0
      %672 = vmatpush.msra.mxu0 0.0
      %673 = vmatpush.msra.mxu0 0.0
      %674 = vmatpush.msra.mxu0 0.0
      %675 = vmatpush.msra.mxu0 0.0
      %676 = vmatpush.msra.mxu0 0.0
      %677 = vmatpush.msra.mxu0 0.0
      %678 = vmatpush.msra.mxu0 0.0
      %679 = vmatpush.msra.mxu0 0.0
      %680 = vmatpush.msra.mxu0 0.0
      %681 = vmatpush.msra.mxu0 0.0
      %682 = vmatpush.msra.mxu0 0.0
      %683 = vmatpush.msra.mxu0 0.0
      %684 = vmatpush.msra.mxu0 0.0
      %685 = vmatpush.msra.mxu0 0.0
      %686 = vmatpush.msra.mxu0 0.0
      %687 = vmatpush.msra.mxu0 %v605
      %688 = vmatmul.f32.gmra.mxu0 %v630
      %v689 = vpop.f32.mrf.mxu0
      %v690 = vadd.f32 %v627, %v689
      %691 = vdwg.mxu0
      %692 = vmatpush.msra.mxu0 0.0
      %693 = vmatpush.msra.mxu0 0.0
      %694 = vmatpush.msra.mxu0 0.0
      %695 = vmatpush.msra.mxu0 0.0
      %696 = vmatpush.msra.mxu0 0.0
      %697 = vmatpush.msra.mxu0 0.0
      %698 = vmatpush.msra.mxu0 0.0
      %699 = vmatpush.msra.mxu0 0.0
      %700 = vmatpush.msra.mxu0 0.0
      %701 = vmatpush.msra.mxu0 0.0
      %702 = vmatpush.msra.mxu0 0.0
      %703 = vmatpush.msra.mxu0 0.0
      %704 = vmatpush.msra.mxu0 0.0
      %705 = vmatpush.msra.mxu0 0.0
      %706 = vmatpush.msra.mxu0 0.0
      %707 = vmatpush.msra.mxu0 %v606
      %708 = vmatmul.f32.gmra.mxu0 %v630
      %v709 = vpop.f32.mrf.mxu0
      %v710 = vadd.f32 %v627, %v709
      %711 = vdwg.mxu0
      %712 = vmatpush.msra.mxu0 0.0
      %713 = vmatpush.msra.mxu0 0.0
      %714 = vmatpush.msra.mxu0 0.0
      %715 = vmatpush.msra.mxu0 0.0
      %716 = vmatpush.msra.mxu0 0.0
      %717 = vmatpush.msra.mxu0 0.0
      %718 = vmatpush.msra.mxu0 0.0
      %719 = vmatpush.msra.mxu0 0.0
      %720 = vmatpush.msra.mxu0 0.0
      %721 = vmatpush.msra.mxu0 0.0
      %722 = vmatpush.msra.mxu0 0.0
      %723 = vmatpush.msra.mxu0 0.0
      %724 = vmatpush.msra.mxu0 0.0
      %725 = vmatpush.msra.mxu0 0.0
      %726 = vmatpush.msra.mxu0 0.0
      %727 = vmatpush.msra.mxu0 %v607
      %728 = vmatmul.f32.gmra.mxu0 %v630
      %v729 = vpop.f32.mrf.mxu0
      %v730 = vadd.f32 %v627, %v729
      %731 = vdwg.mxu0
      %732 = vmatpush.msra.mxu0 0.0
      %733 = vmatpush.msra.mxu0 0.0
      %734 = vmatpush.msra.mxu0 0.0
      %735 = vmatpush.msra.mxu0 0.0
      %736 = vmatpush.msra.mxu0 0.0
      %737 = vmatpush.msra.mxu0 0.0
      %738 = vmatpush.msra.mxu0 0.0
      %739 = vmatpush.msra.mxu0 0.0
      %740 = vmatpush.msra.mxu0 0.0
      %741 = vmatpush.msra.mxu0 0.0
      %742 = vmatpush.msra.mxu0 0.0
      %743 = vmatpush.msra.mxu0 0.0
      %744 = vmatpush.msra.mxu0 0.0
      %745 = vmatpush.msra.mxu0 0.0
      %746 = vmatpush.msra.mxu0 0.0
      %747 = vmatpush.msra.mxu0 %v608
      %748 = vmatmul.f32.gmra.mxu0 %v630
      %v749 = vpop.f32.mrf.mxu0
      %v750 = vadd.f32 %v627, %v749
      %751 = vdwg.mxu0
      %752 = vmatpush.msra.mxu0 0.0
      %753 = vmatpush.msra.mxu0 0.0
      %754 = vmatpush.msra.mxu0 0.0
      %755 = vmatpush.msra.mxu0 0.0
      %756 = vmatpush.msra.mxu0 0.0
      %757 = vmatpush.msra.mxu0 0.0
      %758 = vmatpush.msra.mxu0 0.0
      %759 = vmatpush.msra.mxu0 0.0
      %760 = vmatpush.msra.mxu0 0.0
      %761 = vmatpush.msra.mxu0 0.0
      %762 = vmatpush.msra.mxu0 0.0
      %763 = vmatpush.msra.mxu0 0.0
      %764 = vmatpush.msra.mxu0 0.0
      %765 = vmatpush.msra.mxu0 0.0
      %766 = vmatpush.msra.mxu0 0.0
      %767 = vmatpush.msra.mxu0 %v609
      %768 = vmatmul.f32.gmra.mxu0 %v630
      %v769 = vpop.f32.mrf.mxu0
      %v770 = vadd.f32 %v627, %v769
      %771 = vdwg.mxu0
      %772 = vmatpush.msra.mxu0 0.0
      %773 = vmatpush.msra.mxu0 0.0
      %774 = vmatpush.msra.mxu0 0.0
      %775 = vmatpush.msra.mxu0 0.0
      %776 = vmatpush.msra.mxu0 0.0
      %777 = vmatpush.msra.mxu0 0.0
      %778 = vmatpush.msra.mxu0 0.0
      %779 = vmatpush.msra.mxu0 0.0
      %780 = vmatpush.msra.mxu0 0.0
      %781 = vmatpush.msra.mxu0 0.0
      %782 = vmatpush.msra.mxu0 0.0
      %783 = vmatpush.msra.mxu0 0.0
      %784 = vmatpush.msra.mxu0 0.0
      %785 = vmatpush.msra.mxu0 0.0
      %786 = vmatpush.msra.mxu0 0.0
      %787 = vmatpush.msra.mxu0 %v610
      %788 = vmatmul.f32.gmra.mxu0 %v630
      %v789 = vpop.f32.mrf.mxu0
      %v790 = vadd.f32 %v627, %v789
      %791 = vdwg.mxu0
      %792 = vmatpush.msra.mxu0 0.0
      %793 = vmatpush.msra.mxu0 0.0
      %794 = vmatpush.msra.mxu0 0.0
      %795 = vmatpush.msra.mxu0 0.0
      %796 = vmatpush.msra.mxu0 0.0
      %797 = vmatpush.msra.mxu0 0.0
      %798 = vmatpush.msra.mxu0 0.0
      %799 = vmatpush.msra.mxu0 0.0
      %800 = vmatpush.msra.mxu0 0.0
      %801 = vmatpush.msra.mxu0 0.0
      %802 = vmatpush.msra.mxu0 0.0
      %803 = vmatpush.msra.mxu0 0.0
      %804 = vmatpush.msra.mxu0 0.0
      %805 = vmatpush.msra.mxu0 0.0
      %806 = vmatpush.msra.mxu0 0.0
      %807 = vmatpush.msra.mxu0 %v611
      %808 = vmatmul.f32.gmra.mxu0 %v630
      %v809 = vpop.f32.mrf.mxu0
      %v810 = vadd.f32 %v627, %v809
      %811 = vdwg.mxu0
      %812 = vmatpush.msra.mxu0 0.0
      %813 = vmatpush.msra.mxu0 0.0
      %814 = vmatpush.msra.mxu0 0.0
      %815 = vmatpush.msra.mxu0 0.0
      %816 = vmatpush.msra.mxu0 0.0
      %817 = vmatpush.msra.mxu0 0.0
      %818 = vmatpush.msra.mxu0 0.0
      %819 = vmatpush.msra.mxu0 0.0
      %820 = vmatpush.msra.mxu0 0.0
      %821 = vmatpush.msra.mxu0 0.0
      %822 = vmatpush.msra.mxu0 0.0
      %823 = vmatpush.msra.mxu0 0.0
      %824 = vmatpush.msra.mxu0 0.0
      %825 = vmatpush.msra.mxu0 0.0
      %826 = vmatpush.msra.mxu0 0.0
      %827 = vmatpush.msra.mxu0 %v612
      %828 = vmatmul.f32.gmra.mxu0 %v630
      %v829 = vpop.f32.mrf.mxu0
      %v830 = vadd.f32 %v627, %v829
      %831 = vdwg.mxu0
      %832 = vmatpush.msra.mxu0 0.0
      %833 = vmatpush.msra.mxu0 0.0
      %834 = vmatpush.msra.mxu0 0.0
      %835 = vmatpush.msra.mxu0 0.0
      %836 = vmatpush.msra.mxu0 0.0
      %837 = vmatpush.msra.mxu0 0.0
      %838 = vmatpush.msra.mxu0 0.0
      %839 = vmatpush.msra.mxu0 0.0
      %840 = vmatpush.msra.mxu0 0.0
      %841 = vmatpush.msra.mxu0 0.0
      %842 = vmatpush.msra.mxu0 0.0
      %843 = vmatpush.msra.mxu0 0.0
      %844 = vmatpush.msra.mxu0 0.0
      %845 = vmatpush.msra.mxu0 0.0
      %846 = vmatpush.msra.mxu0 0.0
      %847 = vmatpush.msra.mxu0 %v613
      %848 = vmatmul.f32.gmra.mxu0 %v630
      %v849 = vpop.f32.mrf.mxu0
      %v850 = vadd.f32 %v627, %v849
      %851 = vdwg.mxu0
      %852 = vmatpush.msra.mxu0 0.0
      %853 = vmatpush.msra.mxu0 0.0
      %854 = vmatpush.msra.mxu0 0.0
      %855 = vmatpush.msra.mxu0 0.0
      %856 = vmatpush.msra.mxu0 0.0
      %857 = vmatpush.msra.mxu0 0.0
      %858 = vmatpush.msra.mxu0 0.0
      %859 = vmatpush.msra.mxu0 0.0
      %860 = vmatpush.msra.mxu0 0.0
      %861 = vmatpush.msra.mxu0 0.0
      %862 = vmatpush.msra.mxu0 0.0
      %863 = vmatpush.msra.mxu0 0.0
      %864 = vmatpush.msra.mxu0 0.0
      %865 = vmatpush.msra.mxu0 0.0
      %866 = vmatpush.msra.mxu0 0.0
      %867 = vmatpush.msra.mxu0 %v614
      %868 = vmatmul.f32.gmra.mxu0 %v630
      %v869 = vpop.f32.mrf.mxu0
      %v870 = vadd.f32 %v627, %v869
      %871 = vdwg.mxu0
      %872 = vmatpush.msra.mxu0 0.0
      %873 = vmatpush.msra.mxu0 0.0
      %874 = vmatpush.msra.mxu0 0.0
      %875 = vmatpush.msra.mxu0 0.0
      %876 = vmatpush.msra.mxu0 0.0
      %877 = vmatpush.msra.mxu0 0.0
      %878 = vmatpush.msra.mxu0 0.0
      %879 = vmatpush.msra.mxu0 0.0
      %880 = vmatpush.msra.mxu0 0.0
      %881 = vmatpush.msra.mxu0 0.0
      %882 = vmatpush.msra.mxu0 0.0
      %883 = vmatpush.msra.mxu0 0.0
      %884 = vmatpush.msra.mxu0 0.0
      %885 = vmatpush.msra.mxu0 0.0
      %886 = vmatpush.msra.mxu0 0.0
      %887 = vmatpush.msra.mxu0 %v615
      %888 = vmatmul.f32.gmra.mxu0 %v630
      %v889 = vpop.f32.mrf.mxu0
      %v890 = vadd.f32 %v627, %v889
      %891 = vdwg.mxu0
      %892 = vmatpush.msra.mxu0 0.0
      %893 = vmatpush.msra.mxu0 0.0
      %894 = vmatpush.msra.mxu0 0.0
      %895 = vmatpush.msra.mxu0 0.0
      %896 = vmatpush.msra.mxu0 0.0
      %897 = vmatpush.msra.mxu0 0.0
      %898 = vmatpush.msra.mxu0 0.0
      %899 = vmatpush.msra.mxu0 0.0
      %900 = vmatpush.msra.mxu0 0.0
      %901 = vmatpush.msra.mxu0 0.0
      %902 = vmatpush.msra.mxu0 0.0
      %903 = vmatpush.msra.mxu0 0.0
      %904 = vmatpush.msra.mxu0 0.0
      %905 = vmatpush.msra.mxu0 0.0
      %906 = vmatpush.msra.mxu0 0.0
      %907 = vmatpush.msra.mxu0 %v616
      %908 = vmatmul.f32.gmra.mxu0 %v630
      %v909 = vpop.f32.mrf.mxu0
      %v910 = vadd.f32 %v627, %v909
      %911 = vdwg.mxu0
      %912 = vmatpush.msra.mxu0 0.0
      %913 = vmatpush.msra.mxu0 0.0
      %914 = vmatpush.msra.mxu0 0.0
      %915 = vmatpush.msra.mxu0 0.0
      %916 = vmatpush.msra.mxu0 0.0
      %917 = vmatpush.msra.mxu0 0.0
      %918 = vmatpush.msra.mxu0 0.0
      %919 = vmatpush.msra.mxu0 0.0
      %920 = vmatpush.msra.mxu0 0.0
      %921 = vmatpush.msra.mxu0 0.0
      %922 = vmatpush.msra.mxu0 0.0
      %923 = vmatpush.msra.mxu0 0.0
      %924 = vmatpush.msra.mxu0 0.0
      %925 = vmatpush.msra.mxu0 0.0
      %926 = vmatpush.msra.mxu0 0.0
      %927 = vmatpush.msra.mxu0 %v617
      %928 = vmatmul.f32.gmra.mxu0 %v630
      %v929 = vpop.f32.mrf.mxu0
      %v930 = vadd.f32 %v627, %v929
      %931 = vdwg.mxu0
      %932 = vmatpush.msra.mxu0 0.0
      %933 = vmatpush.msra.mxu0 0.0
      %934 = vmatpush.msra.mxu0 0.0
      %935 = vmatpush.msra.mxu0 0.0
      %936 = vmatpush.msra.mxu0 0.0
      %937 = vmatpush.msra.mxu0 0.0
      %938 = vmatpush.msra.mxu0 0.0
      %939 = vmatpush.msra.mxu0 0.0
      %940 = vmatpush.msra.mxu0 0.0
      %941 = vmatpush.msra.mxu0 0.0
      %942 = vmatpush.msra.mxu0 0.0
      %943 = vmatpush.msra.mxu0 0.0
      %944 = vmatpush.msra.mxu0 0.0
      %945 = vmatpush.msra.mxu0 0.0
      %946 = vmatpush.msra.mxu0 0.0
      %947 = vmatpush.msra.mxu0 %v618
      %948 = vmatmul.f32.gmra.mxu0 %v630
      %v949 = vpop.f32.mrf.mxu0
      %v950 = vadd.f32 %v627, %v949
      %951 = vdwg.mxu0
      %952 = vmatpush.msra.mxu0 0.0
      %953 = vmatpush.msra.mxu0 0.0
      %954 = vmatpush.msra.mxu0 0.0
      %955 = vmatpush.msra.mxu0 0.0
      %956 = vmatpush.msra.mxu0 0.0
      %957 = vmatpush.msra.mxu0 0.0
      %958 = vmatpush.msra.mxu0 0.0
      %959 = vmatpush.msra.mxu0 0.0
      %960 = vmatpush.msra.mxu0 0.0
      %961 = vmatpush.msra.mxu0 0.0
      %962 = vmatpush.msra.mxu0 0.0
      %963 = vmatpush.msra.mxu0 0.0
      %964 = vmatpush.msra.mxu0 0.0
      %965 = vmatpush.msra.mxu0 0.0
      %966 = vmatpush.msra.mxu0 0.0
      %967 = vmatpush.msra.mxu0 %v619
      %968 = vmatmul.f32.gmra.mxu0 %v630
      %v969 = vpop.f32.mrf.mxu0
      %v970 = vadd.f32 %v627, %v969
      %971 = vdwg.mxu0
      %972 = vmatpush.msra.mxu0 0.0
      %973 = vmatpush.msra.mxu0 0.0
      %974 = vmatpush.msra.mxu0 0.0
      %975 = vmatpush.msra.mxu0 0.0
      %976 = vmatpush.msra.mxu0 0.0
      %977 = vmatpush.msra.mxu0 0.0
      %978 = vmatpush.msra.mxu0 0.0
      %979 = vmatpush.msra.mxu0 0.0
      %980 = vmatpush.msra.mxu0 0.0
      %981 = vmatpush.msra.mxu0 0.0
      %982 = vmatpush.msra.mxu0 0.0
      %983 = vmatpush.msra.mxu0 0.0
      %984 = vmatpush.msra.mxu0 0.0
      %985 = vmatpush.msra.mxu0 0.0
      %986 = vmatpush.msra.mxu0 0.0
      %987 = vmatpush.msra.mxu0 %v620
      %988 = vmatmul.f32.gmra.mxu0 %v630
      %v989 = vpop.f32.mrf.mxu0
      %v990 = vadd.f32 %v627, %v989
      %991 = vdwg.mxu0
      %992 = vmatpush.msra.mxu0 0.0
      %993 = vmatpush.msra.mxu0 0.0
      %994 = vmatpush.msra.mxu0 0.0
      %995 = vmatpush.msra.mxu0 0.0
      %996 = vmatpush.msra.mxu0 0.0
      %997 = vmatpush.msra.mxu0 0.0
      %998 = vmatpush.msra.mxu0 0.0
      %999 = vmatpush.msra.mxu0 0.0
      %1000 = vmatpush.msra.mxu0 0.0
      %1001 = vmatpush.msra.mxu0 0.0
      %1002 = vmatpush.msra.mxu0 0.0
      %1003 = vmatpush.msra.mxu0 0.0
      %1004 = vmatpush.msra.mxu0 0.0
      %1005 = vmatpush.msra.mxu0 0.0
      %1006 = vmatpush.msra.mxu0 0.0
      %1007 = vmatpush.msra.mxu0 %v621
      %1008 = vmatmul.f32.gmra.mxu0 %v630
      %v1009 = vpop.f32.mrf.mxu0
      %v1010 = vadd.f32 %v627, %v1009
      %1011 = vdwg.mxu0
      %v1012 = vxor.u32 %v650, 2147483648
      %v1013 = vxor.u32 %v670, 2147483648
      %v1014 = vxor.u32 %v690, 2147483648
      %v1015 = vxor.u32 %v710, 2147483648
      %v1016 = vxor.u32 %v730, 2147483648
      %v1017 = vxor.u32 %v750, 2147483648
      %v1018 = vxor.u32 %v770, 2147483648
      %v1019 = vxor.u32 %v790, 2147483648
      %v1020 = vxor.u32 %v810, 2147483648
      %v1021 = vxor.u32 %v830, 2147483648
      %v1022 = vxor.u32 %v850, 2147483648
      %v1023 = vxor.u32 %v870, 2147483648
      %v1024 = vxor.u32 %v890, 2147483648
      %v1025 = vxor.u32 %v910, 2147483648
      %v1026 = vxor.u32 %v930, 2147483648
      %v1027 = vxor.u32 %v950, 2147483648
      %v1028 = vxor.u32 %v970, 2147483648
      %v1029 = vxor.u32 %v990, 2147483648
      %v1030 = vxor.u32 %v1010, 2147483648
      %v1031 = vmul.f32 %v1012, 1.442695
      %v1032 = vpow.pop %v1031
      %v1033 = vmul.f32 %v1013, 1.442695
      %v1034 = vpow.pop %v1033
      %v1035 = vmul.f32 %v1014, 1.442695
      %v1036 = vpow.pop %v1035
      %v1037 = vmul.f32 %v1015, 1.442695
      %v1038 = vpow.pop %v1037
      %v1039 = vmul.f32 %v1016, 1.442695
      %v1040 = vpow.pop %v1039
      %v1041 = vmul.f32 %v1017, 1.442695
      %v1042 = vpow.pop %v1041
      %v1043 = vmul.f32 %v1018, 1.442695
      %v1044 = vpow.pop %v1043
      %v1045 = vmul.f32 %v1019, 1.442695
      %v1046 = vpow.pop %v1045
      %v1047 = vmul.f32 %v1020, 1.442695
      %v1048 = vpow.pop %v1047
      %v1049 = vmul.f32 %v1021, 1.442695
      %v1050 = vpow.pop %v1049
      %v1051 = vmul.f32 %v1022, 1.442695
      %v1052 = vpow.pop %v1051
      %v1053 = vmul.f32 %v1023, 1.442695
      %v1054 = vpow.pop %v1053
      %v1055 = vmul.f32 %v1024, 1.442695
      %v1056 = vpow.pop %v1055
      %v1057 = vmul.f32 %v1025, 1.442695
      %v1058 = vpow.pop %v1057
      %v1059 = vmul.f32 %v1026, 1.442695
      %v1060 = vpow.pop %v1059
      %v1061 = vmul.f32 %v1027, 1.442695
      %v1062 = vpow.pop %v1061
      %v1063 = vmul.f32 %v1028, 1.442695
      %v1064 = vpow.pop %v1063
      %v1065 = vmul.f32 %v1029, 1.442695
      %v1066 = vpow.pop %v1065
      %v1067 = vmul.f32 %v1030, 1.442695
      %v1068 = vpow.pop %v1067
      %v1069 = vadd.f32 %v1032, 1.0
      %v1070 = vadd.f32 %v1034, 1.0
      %v1071 = vadd.f32 %v1036, 1.0
      %v1072 = vadd.f32 %v1038, 1.0
      %v1073 = vadd.f32 %v1040, 1.0
      %v1074 = vadd.f32 %v1042, 1.0
      %v1075 = vadd.f32 %v1044, 1.0
      %v1076 = vadd.f32 %v1046, 1.0
      %v1077 = vadd.f32 %v1048, 1.0
      %v1078 = vadd.f32 %v1050, 1.0
      %v1079 = vadd.f32 %v1052, 1.0
      %v1080 = vadd.f32 %v1054, 1.0
      %v1081 = vadd.f32 %v1056, 1.0
      %v1082 = vadd.f32 %v1058, 1.0
      %v1083 = vadd.f32 %v1060, 1.0
      %v1084 = vadd.f32 %v1062, 1.0
      %v1085 = vadd.f32 %v1064, 1.0
      %v1086 = vadd.f32 %v1066, 1.0
      %v1087 = vadd.f32 %v1068, 1.0
      %v1088 = vrcp.pop %v1069
      %v1089 = vmul.f32 %v1069, %v1088
      %v1090 = vsub.f32 1.0, %v1089
      %v1091 = vmul.f32 %v1088, %v1090
      %v1092 = vadd.f32 %v1088, %v1091
      %vm1093 = vweird.f32 %v1069
      %vm1094 = vweird.f32 %v1088
      %vm1095 = vmor %vm1093, %vm1094
      %v1096 = vsel %vm1095, %v1088, %v1092
      %v1097 = vand.u32 2147483647, %v1069
      %vm1098 = vcmp.eq.f32.partialorder %v1097, 8.507059e+37
      %v1099 = vand.u32 %v1069, 2147483648
      %v1100 = vor.u32 1.1754944e-38, %v1099
      %v1101 = vsel %vm1098, %v1100, %v1096
      %v1102 = vmul.f32 1.0, %v1101
      %v1103 = vrcp.pop %v1070
      %v1104 = vmul.f32 %v1070, %v1103
      %v1105 = vsub.f32 1.0, %v1104
      %v1106 = vmul.f32 %v1103, %v1105
      %v1107 = vadd.f32 %v1103, %v1106
      %vm1108 = vweird.f32 %v1070
      %vm1109 = vweird.f32 %v1103
      %vm1110 = vmor %vm1108, %vm1109
      %v1111 = vsel %vm1110, %v1103, %v1107
      %v1112 = vand.u32 2147483647, %v1070
      %vm1113 = vcmp.eq.f32.partialorder %v1112, 8.507059e+37
      %v1114 = vand.u32 %v1070, 2147483648
      %v1115 = vor.u32 1.1754944e-38, %v1114
      %v1116 = vsel %vm1113, %v1115, %v1111
      %v1117 = vmul.f32 1.0, %v1116
      %v1118 = vrcp.pop %v1071
      %v1119 = vmul.f32 %v1071, %v1118
      %v1120 = vsub.f32 1.0, %v1119
      %v1121 = vmul.f32 %v1118, %v1120
      %v1122 = vadd.f32 %v1118, %v1121
      %vm1123 = vweird.f32 %v1071
      %vm1124 = vweird.f32 %v1118
      %vm1125 = vmor %vm1123, %vm1124
      %v1126 = vsel %vm1125, %v1118, %v1122
      %v1127 = vand.u32 2147483647, %v1071
      %vm1128 = vcmp.eq.f32.partialorder %v1127, 8.507059e+37
      %v1129 = vand.u32 %v1071, 2147483648
      %v1130 = vor.u32 1.1754944e-38, %v1129
      %v1131 = vsel %vm1128, %v1130, %v1126
      %v1132 = vmul.f32 1.0, %v1131
      %v1133 = vrcp.pop %v1072
      %v1134 = vmul.f32 %v1072, %v1133
      %v1135 = vsub.f32 1.0, %v1134
      %v1136 = vmul.f32 %v1133, %v1135
      %v1137 = vadd.f32 %v1133, %v1136
      %vm1138 = vweird.f32 %v1072
      %vm1139 = vweird.f32 %v1133
      %vm1140 = vmor %vm1138, %vm1139
      %v1141 = vsel %vm1140, %v1133, %v1137
      %v1142 = vand.u32 2147483647, %v1072
      %vm1143 = vcmp.eq.f32.partialorder %v1142, 8.507059e+37
      %v1144 = vand.u32 %v1072, 2147483648
      %v1145 = vor.u32 1.1754944e-38, %v1144
      %v1146 = vsel %vm1143, %v1145, %v1141
      %v1147 = vmul.f32 1.0, %v1146
      %v1148 = vrcp.pop %v1073
      %v1149 = vmul.f32 %v1073, %v1148
      %v1150 = vsub.f32 1.0, %v1149
      %v1151 = vmul.f32 %v1148, %v1150
      %v1152 = vadd.f32 %v1148, %v1151
      %vm1153 = vweird.f32 %v1073
      %vm1154 = vweird.f32 %v1148
      %vm1155 = vmor %vm1153, %vm1154
      %v1156 = vsel %vm1155, %v1148, %v1152
      %v1157 = vand.u32 2147483647, %v1073
      %vm1158 = vcmp.eq.f32.partialorder %v1157, 8.507059e+37
      %v1159 = vand.u32 %v1073, 2147483648
      %v1160 = vor.u32 1.1754944e-38, %v1159
      %v1161 = vsel %vm1158, %v1160, %v1156
      %v1162 = vmul.f32 1.0, %v1161
      %v1163 = vrcp.pop %v1074
      %v1164 = vmul.f32 %v1074, %v1163
      %v1165 = vsub.f32 1.0, %v1164
      %v1166 = vmul.f32 %v1163, %v1165
      %v1167 = vadd.f32 %v1163, %v1166
      %vm1168 = vweird.f32 %v1074
      %vm1169 = vweird.f32 %v1163
      %vm1170 = vmor %vm1168, %vm1169
      %v1171 = vsel %vm1170, %v1163, %v1167
      %v1172 = vand.u32 2147483647, %v1074
      %vm1173 = vcmp.eq.f32.partialorder %v1172, 8.507059e+37
      %v1174 = vand.u32 %v1074, 2147483648
      %v1175 = vor.u32 1.1754944e-38, %v1174
      %v1176 = vsel %vm1173, %v1175, %v1171
      %v1177 = vmul.f32 1.0, %v1176
      %v1178 = vrcp.pop %v1075
      %v1179 = vmul.f32 %v1075, %v1178
      %v1180 = vsub.f32 1.0, %v1179
      %v1181 = vmul.f32 %v1178, %v1180
      %v1182 = vadd.f32 %v1178, %v1181
      %vm1183 = vweird.f32 %v1075
      %vm1184 = vweird.f32 %v1178
      %vm1185 = vmor %vm1183, %vm1184
      %v1186 = vsel %vm1185, %v1178, %v1182
      %v1187 = vand.u32 2147483647, %v1075
      %vm1188 = vcmp.eq.f32.partialorder %v1187, 8.507059e+37
      %v1189 = vand.u32 %v1075, 2147483648
      %v1190 = vor.u32 1.1754944e-38, %v1189
      %v1191 = vsel %vm1188, %v1190, %v1186
      %v1192 = vmul.f32 1.0, %v1191
      %v1193 = vrcp.pop %v1076
      %v1194 = vmul.f32 %v1076, %v1193
      %v1195 = vsub.f32 1.0, %v1194
      %v1196 = vmul.f32 %v1193, %v1195
      %v1197 = vadd.f32 %v1193, %v1196
      %vm1198 = vweird.f32 %v1076
      %vm1199 = vweird.f32 %v1193
      %vm1200 = vmor %vm1198, %vm1199
      %v1201 = vsel %vm1200, %v1193, %v1197
      %v1202 = vand.u32 2147483647, %v1076
      %vm1203 = vcmp.eq.f32.partialorder %v1202, 8.507059e+37
      %v1204 = vand.u32 %v1076, 2147483648
      %v1205 = vor.u32 1.1754944e-38, %v1204
      %v1206 = vsel %vm1203, %v1205, %v1201
      %v1207 = vmul.f32 1.0, %v1206
      %v1208 = vrcp.pop %v1077
      %v1209 = vmul.f32 %v1077, %v1208
      %v1210 = vsub.f32 1.0, %v1209
      %v1211 = vmul.f32 %v1208, %v1210
      %v1212 = vadd.f32 %v1208, %v1211
      %vm1213 = vweird.f32 %v1077
      %vm1214 = vweird.f32 %v1208
      %vm1215 = vmor %vm1213, %vm1214
      %v1216 = vsel %vm1215, %v1208, %v1212
      %v1217 = vand.u32 2147483647, %v1077
      %vm1218 = vcmp.eq.f32.partialorder %v1217, 8.507059e+37
      %v1219 = vand.u32 %v1077, 2147483648
      %v1220 = vor.u32 1.1754944e-38, %v1219
      %v1221 = vsel %vm1218, %v1220, %v1216
      %v1222 = vmul.f32 1.0, %v1221
      %v1223 = vrcp.pop %v1078
      %v1224 = vmul.f32 %v1078, %v1223
      %v1225 = vsub.f32 1.0, %v1224
      %v1226 = vmul.f32 %v1223, %v1225
      %v1227 = vadd.f32 %v1223, %v1226
      %vm1228 = vweird.f32 %v1078
      %vm1229 = vweird.f32 %v1223
      %vm1230 = vmor %vm1228, %vm1229
      %v1231 = vsel %vm1230, %v1223, %v1227
      %v1232 = vand.u32 2147483647, %v1078
      %vm1233 = vcmp.eq.f32.partialorder %v1232, 8.507059e+37
      %v1234 = vand.u32 %v1078, 2147483648
      %v1235 = vor.u32 1.1754944e-38, %v1234
      %v1236 = vsel %vm1233, %v1235, %v1231
      %v1237 = vmul.f32 1.0, %v1236
      %v1238 = vrcp.pop %v1079
      %v1239 = vmul.f32 %v1079, %v1238
      %v1240 = vsub.f32 1.0, %v1239
      %v1241 = vmul.f32 %v1238, %v1240
      %v1242 = vadd.f32 %v1238, %v1241
      %vm1243 = vweird.f32 %v1079
      %vm1244 = vweird.f32 %v1238
      %vm1245 = vmor %vm1243, %vm1244
      %v1246 = vsel %vm1245, %v1238, %v1242
      %v1247 = vand.u32 2147483647, %v1079
      %vm1248 = vcmp.eq.f32.partialorder %v1247, 8.507059e+37
      %v1249 = vand.u32 %v1079, 2147483648
      %v1250 = vor.u32 1.1754944e-38, %v1249
      %v1251 = vsel %vm1248, %v1250, %v1246
      %v1252 = vmul.f32 1.0, %v1251
      %v1253 = vrcp.pop %v1080
      %v1254 = vmul.f32 %v1080, %v1253
      %v1255 = vsub.f32 1.0, %v1254
      %v1256 = vmul.f32 %v1253, %v1255
      %v1257 = vadd.f32 %v1253, %v1256
      %vm1258 = vweird.f32 %v1080
      %vm1259 = vweird.f32 %v1253
      %vm1260 = vmor %vm1258, %vm1259
      %v1261 = vsel %vm1260, %v1253, %v1257
      %v1262 = vand.u32 2147483647, %v1080
      %vm1263 = vcmp.eq.f32.partialorder %v1262, 8.507059e+37
      %v1264 = vand.u32 %v1080, 2147483648
      %v1265 = vor.u32 1.1754944e-38, %v1264
      %v1266 = vsel %vm1263, %v1265, %v1261
      %v1267 = vmul.f32 1.0, %v1266
      %v1268 = vrcp.pop %v1081
      %v1269 = vmul.f32 %v1081, %v1268
      %v1270 = vsub.f32 1.0, %v1269
      %v1271 = vmul.f32 %v1268, %v1270
      %v1272 = vadd.f32 %v1268, %v1271
      %vm1273 = vweird.f32 %v1081
      %vm1274 = vweird.f32 %v1268
      %vm1275 = vmor %vm1273, %vm1274
      %v1276 = vsel %vm1275, %v1268, %v1272
      %v1277 = vand.u32 2147483647, %v1081
      %vm1278 = vcmp.eq.f32.partialorder %v1277, 8.507059e+37
      %v1279 = vand.u32 %v1081, 2147483648
      %v1280 = vor.u32 1.1754944e-38, %v1279
      %v1281 = vsel %vm1278, %v1280, %v1276
      %v1282 = vmul.f32 1.0, %v1281
      %v1283 = vrcp.pop %v1082
      %v1284 = vmul.f32 %v1082, %v1283
      %v1285 = vsub.f32 1.0, %v1284
      %v1286 = vmul.f32 %v1283, %v1285
      %v1287 = vadd.f32 %v1283, %v1286
      %vm1288 = vweird.f32 %v1082
      %vm1289 = vweird.f32 %v1283
      %vm1290 = vmor %vm1288, %vm1289
      %v1291 = vsel %vm1290, %v1283, %v1287
      %v1292 = vand.u32 2147483647, %v1082
      %vm1293 = vcmp.eq.f32.partialorder %v1292, 8.507059e+37
      %v1294 = vand.u32 %v1082, 2147483648
      %v1295 = vor.u32 1.1754944e-38, %v1294
      %v1296 = vsel %vm1293, %v1295, %v1291
      %v1297 = vmul.f32 1.0, %v1296
      %v1298 = vrcp.pop %v1083
      %v1299 = vmul.f32 %v1083, %v1298
      %v1300 = vsub.f32 1.0, %v1299
      %v1301 = vmul.f32 %v1298, %v1300
      %v1302 = vadd.f32 %v1298, %v1301
      %vm1303 = vweird.f32 %v1083
      %vm1304 = vweird.f32 %v1298
      %vm1305 = vmor %vm1303, %vm1304
      %v1306 = vsel %vm1305, %v1298, %v1302
      %v1307 = vand.u32 2147483647, %v1083
      %vm1308 = vcmp.eq.f32.partialorder %v1307, 8.507059e+37
      %v1309 = vand.u32 %v1083, 2147483648
      %v1310 = vor.u32 1.1754944e-38, %v1309
      %v1311 = vsel %vm1308, %v1310, %v1306
      %v1312 = vmul.f32 1.0, %v1311
      %v1313 = vrcp.pop %v1084
      %v1314 = vmul.f32 %v1084, %v1313
      %v1315 = vsub.f32 1.0, %v1314
      %v1316 = vmul.f32 %v1313, %v1315
      %v1317 = vadd.f32 %v1313, %v1316
      %vm1318 = vweird.f32 %v1084
      %vm1319 = vweird.f32 %v1313
      %vm1320 = vmor %vm1318, %vm1319
      %v1321 = vsel %vm1320, %v1313, %v1317
      %v1322 = vand.u32 2147483647, %v1084
      %vm1323 = vcmp.eq.f32.partialorder %v1322, 8.507059e+37
      %v1324 = vand.u32 %v1084, 2147483648
      %v1325 = vor.u32 1.1754944e-38, %v1324
      %v1326 = vsel %vm1323, %v1325, %v1321
      %v1327 = vmul.f32 1.0, %v1326
      %v1328 = vrcp.pop %v1085
      %v1329 = vmul.f32 %v1085, %v1328
      %v1330 = vsub.f32 1.0, %v1329
      %v1331 = vmul.f32 %v1328, %v1330
      %v1332 = vadd.f32 %v1328, %v1331
      %vm1333 = vweird.f32 %v1085
      %vm1334 = vweird.f32 %v1328
      %vm1335 = vmor %vm1333, %vm1334
      %v1336 = vsel %vm1335, %v1328, %v1332
      %v1337 = vand.u32 2147483647, %v1085
      %vm1338 = vcmp.eq.f32.partialorder %v1337, 8.507059e+37
      %v1339 = vand.u32 %v1085, 2147483648
      %v1340 = vor.u32 1.1754944e-38, %v1339
      %v1341 = vsel %vm1338, %v1340, %v1336
      %v1342 = vmul.f32 1.0, %v1341
      %v1343 = vrcp.pop %v1086
      %v1344 = vmul.f32 %v1086, %v1343
      %v1345 = vsub.f32 1.0, %v1344
      %v1346 = vmul.f32 %v1343, %v1345
      %v1347 = vadd.f32 %v1343, %v1346
      %vm1348 = vweird.f32 %v1086
      %vm1349 = vweird.f32 %v1343
      %vm1350 = vmor %vm1348, %vm1349
      %v1351 = vsel %vm1350, %v1343, %v1347
      %v1352 = vand.u32 2147483647, %v1086
      %vm1353 = vcmp.eq.f32.partialorder %v1352, 8.507059e+37
      %v1354 = vand.u32 %v1086, 2147483648
      %v1355 = vor.u32 1.1754944e-38, %v1354
      %v1356 = vsel %vm1353, %v1355, %v1351
      %v1357 = vmul.f32 1.0, %v1356
      %v1358 = vrcp.pop %v1087
      %v1359 = vmul.f32 %v1087, %v1358
      %v1360 = vsub.f32 1.0, %v1359
      %v1361 = vmul.f32 %v1358, %v1360
      %v1362 = vadd.f32 %v1358, %v1361
      %vm1363 = vweird.f32 %v1087
      %vm1364 = vweird.f32 %v1358
      %vm1365 = vmor %vm1363, %vm1364
      %v1366 = vsel %vm1365, %v1358, %v1362
      %v1367 = vand.u32 2147483647, %v1087
      %vm1368 = vcmp.eq.f32.partialorder %v1367, 8.507059e+37
      %v1369 = vand.u32 %v1087, 2147483648
      %v1370 = vor.u32 1.1754944e-38, %v1369
      %v1371 = vsel %vm1368, %v1370, %v1366
      %v1372 = vmul.f32 1.0, %v1371
      %1373 = vst [vmem:[%s226] sm:$0xff] %v1102
      %1374 = vst [vmem:[%s226 + $0x8] sm:$0xff] %v1117
      %1375 = vst [vmem:[%s226 + $0x10] sm:$0xff] %v1132
      %1376 = vst [vmem:[%s226 + $0x18] sm:$0xff] %v1147
      %1377 = vst [vmem:[%s226 + $0x20] sm:$0xff] %v1162
      %1378 = vst [vmem:[%s226 + $0x28] sm:$0xff] %v1177
      %1379 = vst [vmem:[%s226 + $0x30] sm:$0xff] %v1192
      %1380 = vst [vmem:[%s226 + $0x38] sm:$0xff] %v1207
      %1381 = vst [vmem:[%s226 + $0x40] sm:$0xff] %v1222
      %1382 = vst [vmem:[%s226 + $0x48] sm:$0xff] %v1237
      %1383 = vst [vmem:[%s226 + $0x50] sm:$0xff] %v1252
      %1384 = vst [vmem:[%s226 + $0x58] sm:$0xff] %v1267
      %1385 = vst [vmem:[%s226 + $0x60] sm:$0xff] %v1282
      %1386 = vst [vmem:[%s226 + $0x68] sm:$0xff] %v1297
      %1387 = vst [vmem:[%s226 + $0x70] sm:$0xff] %v1312
      %1388 = vst [vmem:[%s226 + $0x78] sm:$0xff] %v1327
      %1389 = vst [vmem:[%s226 + $0x80] sm:$0xff] %v1342
      %1390 = vst [vmem:[%s226 + $0x88] sm:$0xff] %v1357
      %1391 = vst [vmem:[%s226 + $0x90] sm:$0xff] %v1372
      %s1392 = smul.u32 19, %s16
      %p1393 = scmp.lt.s32.totalorder %s1392, 37
      %s1394 = scalar_select %p1393, %s1392, 37
      %s1395 = smul.addr %s1394, 8
      %s1396 = scalar_lea.vmem %s5, %s1395
      // Predicated region
      $region41: #{forward.13} parent=39 // pred_check
        %p1397 = pneg %p144
      $region42: #{forward.13} parent=39 // pred_check_branch
        %1399 = sbr.rel (%p1397) target = $region44
      $region43: #{forward.13} parent=39 // pred_region
        %s1400 = smul.u32 19, %s16
      $region44: #{forward.13} parent=39 // pred_fallthru
        _
    $region40: #{forward.13} parent=5 // pred_fallthru
      _
    %p1401 = scmp.le.s32.totalorder 2, %s11
    // Predicated region
    $region45: #{forward.13} parent=5 // pred_check
      %p1402 = pneg %p1401
    $region46: #{forward.13} parent=5 // pred_check_branch
      %1404 = sbr.rel (%p1402) target = $region48
    $region47: #{forward.13} parent=5 // pred_region
      %s1405 = ssub.s32 %s11, 2
      // Predicated region
      $region49: #{forward.13} parent=47 // pred_check
        %p1406 = pneg %p150
      $region50: #{forward.13} parent=47 // pred_check_branch
        %1408 = sbr.rel (%p1406) target = $region52
      $region51: #{forward.13} parent=47 // pred_region
        %s1409 = smul.u32 19, %s17
        %p1410 = scmp.lt.s32.totalorder %s1409, 37
        %s1411 = scalar_select %p1410, %s1409, 37
        %s1412 = smul.addr %s1411, 8
        %s1413 = scalar_lea.vmem %s5, %s1412
      $region52: #{forward.13} parent=47 // pred_fallthru
        _
    $region48: #{forward.13} parent=5 // pred_fallthru
      _
  $region6: #{forward.13} parent=0 // loop_footer
    %s15 = sadd.s32 1, %s11
  $region7: #{forward.13} parent=0 // loop_footer_branch
    %10 = sbr.rel target = $region3
  $region8: #{forward.13} parent=0 // loop_exit
    _

</llo_original>
